<compile_context>
chip_gen: v7x
topology: tpu7x:2x2x1
jax: 0.10.0
libtpu: 0.0.40
codegen_flags: <defaults>
</compile_context>

<pallas_src>
import functools

import jax
import jax.numpy as jnp
from jax.experimental import pallas as pl
from jax.experimental.pallas import tpu as pltpu


def _log2(v: int) -> int:
    assert v > 0 and (v & (v - 1)) == 0, f"{v} must be a power of two"
    return v.bit_length() - 1


def _round_up(v: int, mult: int) -> int:
    return ((v + mult - 1) // mult) * mult


# ----------------------------- in-kernel helpers (traced jnp ops) -----------------------------

def _shift_cols(x, off):
    """y[:, i] = x[:, (i + off) % M]; wrapped columns are masked by the caller."""
    m = x.shape[-1]
    off = off % m
    if off == 0:
        return x
    if m % 128 == 0:
        # lane-aligned width: one XLU rotation in an otherwise idle slot
        return pltpu.roll(x, shift=m - off, axis=1)
    # narrow (sub-vreg) widths: two lane slices + concat (cheap at these sizes)
    return jnp.concatenate([x[:, off:], x[:, :off]], axis=-1)


def _boundary_masks(ht, wd):
    """(dh, dw) -> (1, ht*wd) bool mask of pixels whose (h+dh, w+dw) neighbour is in-bounds.

    Built once per resolution (hoisted out of the convs); None when no mask is needed.
    """
    m = ht * wd
    col = jax.lax.broadcasted_iota(jnp.int32, (1, m), 1)
    ww = jnp.bitwise_and(col, wd - 1)
    hh = jnp.right_shift(col, _log2(wd))
    masks = {}
    for dh in (-1, 0, 1):
        for dw in (-1, 0, 1):
            conds = []
            if dh == -1:
                conds.append(hh >= 1)
            if dh == 1:
                conds.append(hh <= ht - 2)
            if dw == -1:
                conds.append(ww >= 1)
            if dw == 1:
                conds.append(ww <= wd - 2)
            mask = None
            for c in conds:
                mask = c if mask is None else jnp.logical_and(mask, c)
            masks[(dh, dw)] = mask
    return masks


def _conv3x3_folded(x, w_ref, b_ref, wd, masks, relu):
    """3x3 'same' conv as a single MXU matmul.

    x: (Cin, M) f32, columns in (h, w) order; w_ref: (Cout, 9*Cin) folded tap-major weights
    (matching the stacking order below); b_ref: (Cout, 1).
    """
    parts = []
    for dh in (-1, 0, 1):
        for dw in (-1, 0, 1):
            xs = _shift_cols(x, dh * wd + dw)
            mask = masks[(dh, dw)]
            if mask is not None:
                xs = jnp.where(mask, xs, 0.0)        # (1, M) mask broadcasts over channels
            parts.append(xs)
    x9 = jnp.concatenate(parts, axis=0)              # (9*Cin, M), Cin is a multiple of 8
    acc = jnp.dot(w_ref[...], x9, preferred_element_type=jnp.float32) + b_ref[...]
    if relu:
        acc = jnp.maximum(acc, 0.0)
    return acc


def _maxpool2x2(x, sel_ref, wd):
    """2x2 stride-2 max pool: elementwise max of shifted copies + precomputed one-hot gather."""
    z = jnp.maximum(jnp.maximum(x, _shift_cols(x, 1)),
                    jnp.maximum(_shift_cols(x, wd), _shift_cols(x, wd + 1)))
    return jnp.dot(z, sel_ref[...], preferred_element_type=jnp.float32)


# -------------------------------------- the fused kernel --------------------------------------

def _unet_kernel(x_ref, tgt_ref,
                 w1_ref, b1_ref, w2_ref, b2_ref, w3_ref, b3_ref,
                 w4_ref, b4_ref, w5_ref, b5_ref, w6_ref, b6_ref,
                 pool1_ref, pool2_ref, up2_ref, up1_ref,
                 logits_ref, loss_ref,
                 *, height, width, classes, inv_total):
    ht1, wd1 = height, width
    ht2, wd2 = ht1 // 2, wd1 // 2
    ht3, wd3 = ht2 // 2, wd2 // 2
    m1 = ht1 * wd1

    # per-resolution index math / boundary masks, built once and shared by both convs per level
    masks1 = _boundary_masks(ht1, wd1)
    masks2 = _boundary_masks(ht2, wd2)
    masks3 = _boundary_masks(ht3, wd3)

    x = x_ref[0]                                                          # (Cin_pad, H*W)

    e1 = _conv3x3_folded(x, w1_ref, b1_ref, wd1, masks1, relu=True)       # (8,  256)
    p1 = _maxpool2x2(e1, pool1_ref, wd1)                                  # (8,  64)
    e2 = _conv3x3_folded(p1, w2_ref, b2_ref, wd2, masks2, relu=True)      # (16, 64)
    p2 = _maxpool2x2(e2, pool2_ref, wd2)                                  # (16, 16)
    bn = _conv3x3_folded(p2, w3_ref, b3_ref, wd3, masks3, relu=True)      # (32, 16)

    u2 = jnp.dot(bn, up2_ref[...], preferred_element_type=jnp.float32)    # (32, 64)
    d2 = _conv3x3_folded(jnp.concatenate([u2, e2], axis=0),               # concat == UNet skip
                         w4_ref, b4_ref, wd2, masks2, relu=True)          # (16, 64)
    u1 = jnp.dot(d2, up1_ref[...], preferred_element_type=jnp.float32)    # (16, 256)
    d1 = _conv3x3_folded(jnp.concatenate([u1, e1], axis=0),
                         w5_ref, b5_ref, wd1, masks1, relu=True)          # (8, 256)

    logits = jnp.dot(w6_ref[...], d1, preferred_element_type=jnp.float32) + b6_ref[...]
    logits_ref[...] = logits.reshape(1, classes, m1)                      # lane-dense store

    # per-image softmax cross-entropy partial sum (sublane reductions over the class axis)
    tgt = tgt_ref[0]                                                      # (1, M) int32
    mx = jnp.max(logits, axis=0, keepdims=True)
    lse = mx + jnp.log(jnp.sum(jnp.exp(logits - mx), axis=0, keepdims=True))
    cls_idx = jax.lax.broadcasted_iota(jnp.int32, (classes, m1), 0)
    picked = jnp.sum(jnp.where(cls_idx == tgt, logits, 0.0), axis=0, keepdims=True)
    psum = jnp.sum(lse - picked, axis=1, keepdims=True)                   # (1, 1)
    loss_ref[...] = (psum * inv_total).reshape(1, 1, 1)


# ------------------------------- host-side static helpers / params ----------------------------

def _pool_select_matrix(ht, wd):
    """One-hot (ht*wd, (ht//2)*(wd//2)) gather matrix selecting the 2x2 window anchors."""
    wd2 = wd // 2
    j = jnp.arange((ht // 2) * wd2)
    src = 2 * (j // wd2) * wd + 2 * (j % wd2)
    return (jnp.arange(ht * wd)[:, None] == src[None, :]).astype(jnp.float32)


def _upsample_matrix(ht, wd):
    """One-hot (ht*wd, (2ht)*(2wd)) matrix implementing nearest-neighbor 2x upsampling."""
    wd2 = 2 * wd
    i = jnp.arange(4 * ht * wd)
    src = ((i // wd2) // 2) * wd + (i % wd2) // 2
    return (jnp.arange(ht * wd)[:, None] == src[None, :]).astype(jnp.float32)


def init_params(key, in_ch=3, classes=3):
    ks = jax.random.split(key, 6)
    cin_pad = _round_up(in_ch, 8)

    def folded_conv_w(k, cout, cin, cin_padded=None):
        cin_padded = cin if cin_padded is None else cin_padded
        std = (2.0 / (9 * cin)) ** 0.5
        w = std * jax.random.normal(k, (9, cout, cin), jnp.float32)
        if cin_padded != cin:
            w = jnp.pad(w, ((0, 0), (0, 0), (0, cin_padded - cin)))
        # (9, Cout, Cin) -> (Cout, 9*Cin), tap-major K (matches the in-kernel tap stacking)
        return jnp.transpose(w, (1, 0, 2)).reshape(cout, 9 * cin_padded)

    p = {}
    p['w1'] = folded_conv_w(ks[0], 8, in_ch, cin_pad)          # encoder conv1
    p['b1'] = jnp.zeros((8, 1), jnp.float32)
    p['w2'] = folded_conv_w(ks[1], 16, 8)                      # encoder conv2
    p['b2'] = jnp.zeros((16, 1), jnp.float32)
    p['w3'] = folded_conv_w(ks[2], 32, 16)                     # bottleneck
    p['b3'] = jnp.zeros((32, 1), jnp.float32)
    p['w4'] = folded_conv_w(ks[3], 16, 32 + 16)                # decoder conv on concat([up, skip])
    p['b4'] = jnp.zeros((16, 1), jnp.float32)
    p['w5'] = folded_conv_w(ks[4], 8, 16 + 8)                  # decoder conv on concat([up, skip])
    p['b5'] = jnp.zeros((8, 1), jnp.float32)
    std6 = (2.0 / 8) ** 0.5
    p['w6'] = (std6 * jax.random.normal(ks[5], (classes, 8), jnp.float32))
    p['b6'] = jnp.zeros((classes, 1), jnp.float32)
    return p


# -------------------------------- forward (the module equivalent) -----------------------------

def segmentation_network_forward(params, data_nchw, targets):
    """pred = unet(data); loss = CrossEntropyLoss(mean)(pred, targets); return (pred, loss)."""
    # TODO(synk): the pretrained encoder backbone (enc_name / enc_weights via backboned-unet)
    # and the optional training-time transform `self.tf` have no in-script equivalent; a small
    # deterministic encoder-decoder UNet with skip connections is used instead.
    n, c_in, ht, wd = data_nchw.shape
    classes = params['w6'].shape[0]
    cin_pad = params['w1'].shape[1] // 9
    m = ht * wd
    for v in (ht, wd, ht // 2, wd // 2, ht // 4, wd // 4):
        _log2(v)   # power-of-two check (in-kernel shift/mask index math uses shifts/ands)

    # NCHW with H*W flattened IS the per-image (C, pixels) layout the kernel wants ->
    # no host-side transpose on input or on the logits output.
    x = data_nchw.reshape(n, c_in, m)
    if cin_pad != c_in:   # pad channels to a sublane multiple -> tile-aligned tap stacking
        x = jnp.pad(x, ((0, 0), (0, cin_pad - c_in), (0, 0)))
    tgt = targets.reshape(n, 1, m).astype(jnp.int32)

    # static one-hot gather matrices for maxpool / nearest-upsample (exact, built host-side)
    pool1 = _pool_select_matrix(ht, wd)
    pool2 = _pool_select_matrix(ht // 2, wd // 2)
    up2 = _upsample_matrix(ht // 4, wd // 4)
    up1 = _upsample_matrix(ht // 2, wd // 2)

    consts = [params['w1'], params['b1'], params['w2'], params['b2'],
              params['w3'], params['b3'], params['w4'], params['b4'],
              params['w5'], params['b5'], params['w6'], params['b6'],
              pool1, pool2, up2, up1]

    kernel = functools.partial(_unet_kernel, height=ht, width=wd, classes=classes,
                               inv_total=1.0 / (n * m))

    batch_spec = lambda c: pl.BlockSpec((1, c, m), lambda b: (b, 0, 0))
    resident = lambda a: pl.BlockSpec(a.shape, lambda b: (0, 0))   # same block every step

    logits, loss = pl.pallas_call(
        kernel,
        out_shape=(jax.ShapeDtypeStruct((n, classes, m), jnp.float32),
                   jax.ShapeDtypeStruct((n, 1, 1), jnp.float32)),
        grid_spec=pltpu.PrefetchScalarGridSpec(
            num_scalar_prefetch=0,
            grid=(n,),
            in_specs=[batch_spec(cin_pad), batch_spec(1)] + [resident(a) for a in consts],
            out_specs=(batch_spec(classes), pl.BlockSpec((1, 1, 1), lambda b: (b, 0, 0)))),
        compiler_params=pltpu.CompilerParams(dimension_semantics=("parallel",)),
    )(x, tgt, *consts)

    pred = logits.reshape(n, classes, ht, wd)          # already NCHW; no extra HBM transpose
    total_loss = jnp.sum(loss)                         # per-image partials already / (N*H*W)
    return pred, total_loss


# ------------------------------------------- main ---------------------------------------------

if __name__ == "__main__":
    key = jax.random.PRNGKey(0)
    k_data, k_tgt, k_param = jax.random.split(key, 3)

    N, C_in, H, W, classes = 2, 3, 16, 16, 3
    data = jax.random.normal(k_data, (N, C_in, H, W), jnp.float32)           # NCHW like PyTorch
    targets = jax.random.randint(k_tgt, (N, H, W), 0, classes, jnp.int32)    # class-index map
    params = init_params(k_param, in_ch=C_in, classes=classes)

    pred, loss = jax.jit(segmentation_network_forward)(params, data, targets)
    jax.block_until_ready((pred, loss))

    assert pred.shape == (N, classes, H, W)
    assert loss.shape == ()
    assert bool(jnp.isfinite(loss))
    print("KERNEL_OK")
</pallas_src>

<mosaic_0001>
module attributes {stable_mosaic.version = 11 : i64} {
  func.func @_unet_kernel(%arg0: i32, %arg1: memref<1x8x256xf32, #tpu.memory_space<vmem>>, %arg2: memref<1x1x256xi32, #tpu.memory_space<vmem>>, %arg3: memref<8x72xf32, #tpu.memory_space<vmem>>, %arg4: memref<8x1xf32, #tpu.memory_space<vmem>>, %arg5: memref<16x72xf32, #tpu.memory_space<vmem>>, %arg6: memref<16x1xf32, #tpu.memory_space<vmem>>, %arg7: memref<32x144xf32, #tpu.memory_space<vmem>>, %arg8: memref<32x1xf32, #tpu.memory_space<vmem>>, %arg9: memref<16x432xf32, #tpu.memory_space<vmem>>, %arg10: memref<16x1xf32, #tpu.memory_space<vmem>>, %arg11: memref<8x216xf32, #tpu.memory_space<vmem>>, %arg12: memref<8x1xf32, #tpu.memory_space<vmem>>, %arg13: memref<3x8xf32, #tpu.memory_space<vmem>>, %arg14: memref<3x1xf32, #tpu.memory_space<vmem>>, %arg15: memref<256x64xf32, #tpu.memory_space<vmem>>, %arg16: memref<64x16xf32, #tpu.memory_space<vmem>>, %arg17: memref<16x64xf32, #tpu.memory_space<vmem>>, %arg18: memref<64x256xf32, #tpu.memory_space<vmem>>, %arg19: memref<1x3x256xf32, #tpu.memory_space<vmem>>, %arg20: memref<1x1x1xf32, #tpu.memory_space<vmem>>) attributes {dimension_semantics = [#tpu.dimension_semantics<parallel>], iteration_bounds = array<i64: 2>, scalar_prefetch = 0 : i64, scratch_operands = 0 : i64, tpu.core_type = #tpu.core_type<tc>, window_params = [{transform_indices = @transform_0, window_bounds = array<i64: 1, 8, 256>}, {transform_indices = @transform_1, window_bounds = array<i64: 1, 1, 256>}, {pipeline_mode = #tpu.pipeline_mode<synchronous>, transform_indices = @transform_2, window_bounds = array<i64: 8, 72>}, {pipeline_mode = #tpu.pipeline_mode<synchronous>, transform_indices = @transform_3, window_bounds = array<i64: 8, 1>}, {pipeline_mode = #tpu.pipeline_mode<synchronous>, transform_indices = @transform_4, window_bounds = array<i64: 16, 72>}, {pipeline_mode = #tpu.pipeline_mode<synchronous>, transform_indices = @transform_5, window_bounds = array<i64: 16, 1>}, {pipeline_mode = #tpu.pipeline_mode<synchronous>, transform_indices = @transform_6, window_bounds = array<i64: 32, 144>}, {pipeline_mode = #tpu.pipeline_mode<synchronous>, transform_indices = @transform_7, window_bounds = array<i64: 32, 1>}, {pipeline_mode = #tpu.pipeline_mode<synchronous>, transform_indices = @transform_8, window_bounds = array<i64: 16, 432>}, {pipeline_mode = #tpu.pipeline_mode<synchronous>, transform_indices = @transform_9, window_bounds = array<i64: 16, 1>}, {pipeline_mode = #tpu.pipeline_mode<synchronous>, transform_indices = @transform_10, window_bounds = array<i64: 8, 216>}, {pipeline_mode = #tpu.pipeline_mode<synchronous>, transform_indices = @transform_11, window_bounds = array<i64: 8, 1>}, {pipeline_mode = #tpu.pipeline_mode<synchronous>, transform_indices = @transform_12, window_bounds = array<i64: 3, 8>}, {pipeline_mode = #tpu.pipeline_mode<synchronous>, transform_indices = @transform_13, window_bounds = array<i64: 3, 1>}, {pipeline_mode = #tpu.pipeline_mode<synchronous>, transform_indices = @transform_14, window_bounds = array<i64: 256, 64>}, {pipeline_mode = #tpu.pipeline_mode<synchronous>, transform_indices = @transform_15, window_bounds = array<i64: 64, 16>}, {pipeline_mode = #tpu.pipeline_mode<synchronous>, transform_indices = @transform_16, window_bounds = array<i64: 16, 64>}, {pipeline_mode = #tpu.pipeline_mode<synchronous>, transform_indices = @transform_17, window_bounds = array<i64: 64, 256>}, {transform_indices = @transform_18, window_bounds = array<i64: 1, 3, 256>}, {transform_indices = @transform_19, window_bounds = array<i64: 1, 1, 1>}]} {
    %0 = tpu.iota {dimensions = array<i32: 1>} : vector<1x256xi32>
    %c15_i32 = arith.constant 15 : i32
    %1 = vector.broadcast %c15_i32 : i32 to vector<1x256xi32>
    %2 = arith.andi %0, %1 : vector<1x256xi32>
    %c4_i32 = arith.constant 4 : i32
    %3 = vector.broadcast %c4_i32 : i32 to vector<1x256xi32>
    %4 = arith.shrsi %0, %3 : vector<1x256xi32>
    %c1_i32 = arith.constant 1 : i32
    %5 = vector.broadcast %c1_i32 : i32 to vector<1x256xi32>
    %6 = arith.cmpi sge, %4, %5 : vector<1x256xi32>
    %c1_i32_0 = arith.constant 1 : i32
    %7 = vector.broadcast %c1_i32_0 : i32 to vector<1x256xi32>
    %8 = arith.cmpi sge, %2, %7 : vector<1x256xi32>
    %9 = arith.andi %6, %8 : vector<1x256xi1>
    %c1_i32_1 = arith.constant 1 : i32
    %10 = vector.broadcast %c1_i32_1 : i32 to vector<1x256xi32>
    %11 = arith.cmpi sge, %4, %10 : vector<1x256xi32>
    %c1_i32_2 = arith.constant 1 : i32
    %12 = vector.broadcast %c1_i32_2 : i32 to vector<1x256xi32>
    %13 = arith.cmpi sge, %4, %12 : vector<1x256xi32>
    %c14_i32 = arith.constant 14 : i32
    %14 = vector.broadcast %c14_i32 : i32 to vector<1x256xi32>
    %15 = arith.cmpi sle, %2, %14 : vector<1x256xi32>
    %16 = arith.andi %13, %15 : vector<1x256xi1>
    %c1_i32_3 = arith.constant 1 : i32
    %17 = vector.broadcast %c1_i32_3 : i32 to vector<1x256xi32>
    %18 = arith.cmpi sge, %2, %17 : vector<1x256xi32>
    %c14_i32_4 = arith.constant 14 : i32
    %19 = vector.broadcast %c14_i32_4 : i32 to vector<1x256xi32>
    %20 = arith.cmpi sle, %2, %19 : vector<1x256xi32>
    %c14_i32_5 = arith.constant 14 : i32
    %21 = vector.broadcast %c14_i32_5 : i32 to vector<1x256xi32>
    %22 = arith.cmpi sle, %4, %21 : vector<1x256xi32>
    %c1_i32_6 = arith.constant 1 : i32
    %23 = vector.broadcast %c1_i32_6 : i32 to vector<1x256xi32>
    %24 = arith.cmpi sge, %2, %23 : vector<1x256xi32>
    %25 = arith.andi %22, %24 : vector<1x256xi1>
    %c14_i32_7 = arith.constant 14 : i32
    %26 = vector.broadcast %c14_i32_7 : i32 to vector<1x256xi32>
    %27 = arith.cmpi sle, %4, %26 : vector<1x256xi32>
    %c14_i32_8 = arith.constant 14 : i32
    %28 = vector.broadcast %c14_i32_8 : i32 to vector<1x256xi32>
    %29 = arith.cmpi sle, %4, %28 : vector<1x256xi32>
    %c14_i32_9 = arith.constant 14 : i32
    %30 = vector.broadcast %c14_i32_9 : i32 to vector<1x256xi32>
    %31 = arith.cmpi sle, %2, %30 : vector<1x256xi32>
    %32 = arith.andi %29, %31 : vector<1x256xi1>
    %33 = tpu.iota {dimensions = array<i32: 1>} : vector<1x64xi32>
    %c7_i32 = arith.constant 7 : i32
    %34 = vector.broadcast %c7_i32 : i32 to vector<1x64xi32>
    %35 = arith.andi %33, %34 : vector<1x64xi32>
    %c3_i32 = arith.constant 3 : i32
    %36 = vector.broadcast %c3_i32 : i32 to vector<1x64xi32>
    %37 = arith.shrsi %33, %36 : vector<1x64xi32>
    %c1_i32_10 = arith.constant 1 : i32
    %38 = vector.broadcast %c1_i32_10 : i32 to vector<1x64xi32>
    %39 = arith.cmpi sge, %37, %38 : vector<1x64xi32>
    %c1_i32_11 = arith.constant 1 : i32
    %40 = vector.broadcast %c1_i32_11 : i32 to vector<1x64xi32>
    %41 = arith.cmpi sge, %35, %40 : vector<1x64xi32>
    %42 = arith.andi %39, %41 : vector<1x64xi1>
    %c1_i32_12 = arith.constant 1 : i32
    %43 = vector.broadcast %c1_i32_12 : i32 to vector<1x64xi32>
    %44 = arith.cmpi sge, %37, %43 : vector<1x64xi32>
    %c1_i32_13 = arith.constant 1 : i32
    %45 = vector.broadcast %c1_i32_13 : i32 to vector<1x64xi32>
    %46 = arith.cmpi sge, %37, %45 : vector<1x64xi32>
    %c6_i32 = arith.constant 6 : i32
    %47 = vector.broadcast %c6_i32 : i32 to vector<1x64xi32>
    %48 = arith.cmpi sle, %35, %47 : vector<1x64xi32>
    %49 = arith.andi %46, %48 : vector<1x64xi1>
    %c1_i32_14 = arith.constant 1 : i32
    %50 = vector.broadcast %c1_i32_14 : i32 to vector<1x64xi32>
    %51 = arith.cmpi sge, %35, %50 : vector<1x64xi32>
    %c6_i32_15 = arith.constant 6 : i32
    %52 = vector.broadcast %c6_i32_15 : i32 to vector<1x64xi32>
    %53 = arith.cmpi sle, %35, %52 : vector<1x64xi32>
    %c6_i32_16 = arith.constant 6 : i32
    %54 = vector.broadcast %c6_i32_16 : i32 to vector<1x64xi32>
    %55 = arith.cmpi sle, %37, %54 : vector<1x64xi32>
    %c1_i32_17 = arith.constant 1 : i32
    %56 = vector.broadcast %c1_i32_17 : i32 to vector<1x64xi32>
    %57 = arith.cmpi sge, %35, %56 : vector<1x64xi32>
    %58 = arith.andi %55, %57 : vector<1x64xi1>
    %c6_i32_18 = arith.constant 6 : i32
    %59 = vector.broadcast %c6_i32_18 : i32 to vector<1x64xi32>
    %60 = arith.cmpi sle, %37, %59 : vector<1x64xi32>
    %c6_i32_19 = arith.constant 6 : i32
    %61 = vector.broadcast %c6_i32_19 : i32 to vector<1x64xi32>
    %62 = arith.cmpi sle, %37, %61 : vector<1x64xi32>
    %c6_i32_20 = arith.constant 6 : i32
    %63 = vector.broadcast %c6_i32_20 : i32 to vector<1x64xi32>
    %64 = arith.cmpi sle, %35, %63 : vector<1x64xi32>
    %65 = arith.andi %62, %64 : vector<1x64xi1>
    %66 = tpu.iota {dimensions = array<i32: 1>} : vector<1x16xi32>
    %c3_i32_21 = arith.constant 3 : i32
    %67 = vector.broadcast %c3_i32_21 : i32 to vector<1x16xi32>
    %68 = arith.andi %66, %67 : vector<1x16xi32>
    %c2_i32 = arith.constant 2 : i32
    %69 = vector.broadcast %c2_i32 : i32 to vector<1x16xi32>
    %70 = arith.shrsi %66, %69 : vector<1x16xi32>
    %c1_i32_22 = arith.constant 1 : i32
    %71 = vector.broadcast %c1_i32_22 : i32 to vector<1x16xi32>
    %72 = arith.cmpi sge, %70, %71 : vector<1x16xi32>
    %c1_i32_23 = arith.constant 1 : i32
    %73 = vector.broadcast %c1_i32_23 : i32 to vector<1x16xi32>
    %74 = arith.cmpi sge, %68, %73 : vector<1x16xi32>
    %75 = arith.andi %72, %74 : vector<1x16xi1>
    %c1_i32_24 = arith.constant 1 : i32
    %76 = vector.broadcast %c1_i32_24 : i32 to vector<1x16xi32>
    %77 = arith.cmpi sge, %70, %76 : vector<1x16xi32>
    %c1_i32_25 = arith.constant 1 : i32
    %78 = vector.broadcast %c1_i32_25 : i32 to vector<1x16xi32>
    %79 = arith.cmpi sge, %70, %78 : vector<1x16xi32>
    %c2_i32_26 = arith.constant 2 : i32
    %80 = vector.broadcast %c2_i32_26 : i32 to vector<1x16xi32>
    %81 = arith.cmpi sle, %68, %80 : vector<1x16xi32>
    %82 = arith.andi %79, %81 : vector<1x16xi1>
    %c1_i32_27 = arith.constant 1 : i32
    %83 = vector.broadcast %c1_i32_27 : i32 to vector<1x16xi32>
    %84 = arith.cmpi sge, %68, %83 : vector<1x16xi32>
    %c2_i32_28 = arith.constant 2 : i32
    %85 = vector.broadcast %c2_i32_28 : i32 to vector<1x16xi32>
    %86 = arith.cmpi sle, %68, %85 : vector<1x16xi32>
    %c2_i32_29 = arith.constant 2 : i32
    %87 = vector.broadcast %c2_i32_29 : i32 to vector<1x16xi32>
    %88 = arith.cmpi sle, %70, %87 : vector<1x16xi32>
    %c1_i32_30 = arith.constant 1 : i32
    %89 = vector.broadcast %c1_i32_30 : i32 to vector<1x16xi32>
    %90 = arith.cmpi sge, %68, %89 : vector<1x16xi32>
    %91 = arith.andi %88, %90 : vector<1x16xi1>
    %c2_i32_31 = arith.constant 2 : i32
    %92 = vector.broadcast %c2_i32_31 : i32 to vector<1x16xi32>
    %93 = arith.cmpi sle, %70, %92 : vector<1x16xi32>
    %c2_i32_32 = arith.constant 2 : i32
    %94 = vector.broadcast %c2_i32_32 : i32 to vector<1x16xi32>
    %95 = arith.cmpi sle, %70, %94 : vector<1x16xi32>
    %c2_i32_33 = arith.constant 2 : i32
    %96 = vector.broadcast %c2_i32_33 : i32 to vector<1x16xi32>
    %97 = arith.cmpi sle, %68, %96 : vector<1x16xi32>
    %98 = arith.andi %95, %97 : vector<1x16xi1>
    %c0 = arith.constant 0 : index
    %c0_34 = arith.constant 0 : index
    %c0_35 = arith.constant 0 : index
    %99 = vector.load %arg1[%c0, %c0_34, %c0_35] : memref<1x8x256xf32, #tpu.memory_space<vmem>>, vector<1x8x256xf32>
    %100 = vector.shape_cast %99 : vector<1x8x256xf32> to vector<8x256xf32>
    %c17_i32 = arith.constant 17 : i32
    %101 = tpu.dynamic_rotate %100 by %c17_i32 dim 1 : vector<8x256xf32>, i32 -> vector<8x256xf32>
    %cst = arith.constant 0.000000e+00 : f32
    %102 = vector.shape_cast %9 : vector<1x256xi1> to vector<1x256xi1>
    %103 = vector.broadcast %102 : vector<1x256xi1> to vector<8x256xi1>
    %104 = vector.broadcast %cst : f32 to vector<8x256xf32>
    %105 = arith.select %103, %101, %104 : vector<8x256xi1>, vector<8x256xf32>
    %c16_i32 = arith.constant 16 : i32
    %106 = tpu.dynamic_rotate %100 by %c16_i32 dim 1 : vector<8x256xf32>, i32 -> vector<8x256xf32>
    %cst_36 = arith.constant 0.000000e+00 : f32
    %107 = vector.shape_cast %11 : vector<1x256xi1> to vector<1x256xi1>
    %108 = vector.broadcast %107 : vector<1x256xi1> to vector<8x256xi1>
    %109 = vector.broadcast %cst_36 : f32 to vector<8x256xf32>
    %110 = arith.select %108, %106, %109 : vector<8x256xi1>, vector<8x256xf32>
    %c15_i32_37 = arith.constant 15 : i32
    %111 = tpu.dynamic_rotate %100 by %c15_i32_37 dim 1 : vector<8x256xf32>, i32 -> vector<8x256xf32>
    %cst_38 = arith.constant 0.000000e+00 : f32
    %112 = vector.shape_cast %16 : vector<1x256xi1> to vector<1x256xi1>
    %113 = vector.broadcast %112 : vector<1x256xi1> to vector<8x256xi1>
    %114 = vector.broadcast %cst_38 : f32 to vector<8x256xf32>
    %115 = arith.select %113, %111, %114 : vector<8x256xi1>, vector<8x256xf32>
    %c1_i32_39 = arith.constant 1 : i32
    %116 = tpu.dynamic_rotate %100 by %c1_i32_39 dim 1 : vector<8x256xf32>, i32 -> vector<8x256xf32>
    %cst_40 = arith.constant 0.000000e+00 : f32
    %117 = vector.shape_cast %18 : vector<1x256xi1> to vector<1x256xi1>
    %118 = vector.broadcast %117 : vector<1x256xi1> to vector<8x256xi1>
    %119 = vector.broadcast %cst_40 : f32 to vector<8x256xf32>
    %120 = arith.select %118, %116, %119 : vector<8x256xi1>, vector<8x256xf32>
    %c255_i32 = arith.constant 255 : i32
    %121 = tpu.dynamic_rotate %100 by %c255_i32 dim 1 : vector<8x256xf32>, i32 -> vector<8x256xf32>
    %cst_41 = arith.constant 0.000000e+00 : f32
    %122 = vector.shape_cast %20 : vector<1x256xi1> to vector<1x256xi1>
    %123 = vector.broadcast %122 : vector<1x256xi1> to vector<8x256xi1>
    %124 = vector.broadcast %cst_41 : f32 to vector<8x256xf32>
    %125 = arith.select %123, %121, %124 : vector<8x256xi1>, vector<8x256xf32>
    %c241_i32 = arith.constant 241 : i32
    %126 = tpu.dynamic_rotate %100 by %c241_i32 dim 1 : vector<8x256xf32>, i32 -> vector<8x256xf32>
    %cst_42 = arith.constant 0.000000e+00 : f32
    %127 = vector.shape_cast %25 : vector<1x256xi1> to vector<1x256xi1>
    %128 = vector.broadcast %127 : vector<1x256xi1> to vector<8x256xi1>
    %129 = vector.broadcast %cst_42 : f32 to vector<8x256xf32>
    %130 = arith.select %128, %126, %129 : vector<8x256xi1>, vector<8x256xf32>
    %c240_i32 = arith.constant 240 : i32
    %131 = tpu.dynamic_rotate %100 by %c240_i32 dim 1 : vector<8x256xf32>, i32 -> vector<8x256xf32>
    %cst_43 = arith.constant 0.000000e+00 : f32
    %132 = vector.shape_cast %27 : vector<1x256xi1> to vector<1x256xi1>
    %133 = vector.broadcast %132 : vector<1x256xi1> to vector<8x256xi1>
    %134 = vector.broadcast %cst_43 : f32 to vector<8x256xf32>
    %135 = arith.select %133, %131, %134 : vector<8x256xi1>, vector<8x256xf32>
    %c239_i32 = arith.constant 239 : i32
    %136 = tpu.dynamic_rotate %100 by %c239_i32 dim 1 : vector<8x256xf32>, i32 -> vector<8x256xf32>
    %cst_44 = arith.constant 0.000000e+00 : f32
    %137 = vector.shape_cast %32 : vector<1x256xi1> to vector<1x256xi1>
    %138 = vector.broadcast %137 : vector<1x256xi1> to vector<8x256xi1>
    %139 = vector.broadcast %cst_44 : f32 to vector<8x256xf32>
    %140 = arith.select %138, %136, %139 : vector<8x256xi1>, vector<8x256xf32>
    %141 = tpu.concatenate %105, %110, %115, %120, %100, %125, %130, %135, %140 in 0 : vector<8x256xf32>, vector<8x256xf32>, vector<8x256xf32>, vector<8x256xf32>, vector<8x256xf32>, vector<8x256xf32>, vector<8x256xf32>, vector<8x256xf32>, vector<8x256xf32> -> vector<72x256xf32>
    %c0_45 = arith.constant 0 : index
    %c0_46 = arith.constant 0 : index
    %142 = vector.load %arg3[%c0_45, %c0_46] : memref<8x72xf32, #tpu.memory_space<vmem>>, vector<8x72xf32>
    %cst_47 = arith.constant dense<0.000000e+00> : vector<8x256xf32>
    %143 = tpu.matmul %142, %141, %cst_47 {dimension_numbers = #tpu.dot_dimension_numbers<[1], [0], [0], [1], [0, 0, 1, 1], [], []>} : vector<8x72xf32>, vector<72x256xf32>, vector<8x256xf32> -> vector<8x256xf32>
    %c0_48 = arith.constant 0 : index
    %c0_49 = arith.constant 0 : index
    %144 = vector.load %arg4[%c0_48, %c0_49] : memref<8x1xf32, #tpu.memory_space<vmem>>, vector<8x1xf32>
    %145 = vector.broadcast %144 : vector<8x1xf32> to vector<8x256xf32>
    %146 = arith.addf %143, %145 : vector<8x256xf32>
    %cst_50 = arith.constant 0.000000e+00 : f32
    %147 = vector.broadcast %cst_50 : f32 to vector<8x256xf32>
    %148 = arith.maximumf %146, %147 : vector<8x256xf32>
    %c255_i32_51 = arith.constant 255 : i32
    %149 = tpu.dynamic_rotate %148 by %c255_i32_51 dim 1 : vector<8x256xf32>, i32 -> vector<8x256xf32>
    %150 = arith.maximumf %148, %149 : vector<8x256xf32>
    %c240_i32_52 = arith.constant 240 : i32
    %151 = tpu.dynamic_rotate %148 by %c240_i32_52 dim 1 : vector<8x256xf32>, i32 -> vector<8x256xf32>
    %c239_i32_53 = arith.constant 239 : i32
    %152 = tpu.dynamic_rotate %148 by %c239_i32_53 dim 1 : vector<8x256xf32>, i32 -> vector<8x256xf32>
    %153 = arith.maximumf %151, %152 : vector<8x256xf32>
    %154 = arith.maximumf %150, %153 : vector<8x256xf32>
    %c0_54 = arith.constant 0 : index
    %c0_55 = arith.constant 0 : index
    %155 = vector.load %arg15[%c0_54, %c0_55] : memref<256x64xf32, #tpu.memory_space<vmem>>, vector<256x64xf32>
    %cst_56 = arith.constant dense<0.000000e+00> : vector<8x64xf32>
    %156 = tpu.matmul %154, %155, %cst_56 {dimension_numbers = #tpu.dot_dimension_numbers<[1], [0], [0], [1], [0, 0, 1, 1], [], []>} : vector<8x256xf32>, vector<256x64xf32>, vector<8x64xf32> -> vector<8x64xf32>
    %157 = vector.extract_strided_slice %156 {offsets = [0, 55], sizes = [8, 9], strides = [1, 1]} : vector<8x64xf32> to vector<8x9xf32>
    %158 = vector.extract_strided_slice %156 {offsets = [0, 0], sizes = [8, 55], strides = [1, 1]} : vector<8x64xf32> to vector<8x55xf32>
    %159 = tpu.concatenate %157, %158 in 1 : vector<8x9xf32>, vector<8x55xf32> -> vector<8x64xf32>
    %cst_57 = arith.constant 0.000000e+00 : f32
    %160 = vector.shape_cast %42 : vector<1x64xi1> to vector<1x64xi1>
    %161 = vector.broadcast %160 : vector<1x64xi1> to vector<8x64xi1>
    %162 = vector.broadcast %cst_57 : f32 to vector<8x64xf32>
    %163 = arith.select %161, %159, %162 : vector<8x64xi1>, vector<8x64xf32>
    %164 = vector.extract_strided_slice %156 {offsets = [0, 56], sizes = [8, 8], strides = [1, 1]} : vector<8x64xf32> to vector<8x8xf32>
    %165 = vector.extract_strided_slice %156 {offsets = [0, 0], sizes = [8, 56], strides = [1, 1]} : vector<8x64xf32> to vector<8x56xf32>
    %166 = tpu.concatenate %164, %165 in 1 : vector<8x8xf32>, vector<8x56xf32> -> vector<8x64xf32>
    %cst_58 = arith.constant 0.000000e+00 : f32
    %167 = vector.shape_cast %44 : vector<1x64xi1> to vector<1x64xi1>
    %168 = vector.broadcast %167 : vector<1x64xi1> to vector<8x64xi1>
    %169 = vector.broadcast %cst_58 : f32 to vector<8x64xf32>
    %170 = arith.select %168, %166, %169 : vector<8x64xi1>, vector<8x64xf32>
    %171 = vector.extract_strided_slice %156 {offsets = [0, 57], sizes = [8, 7], strides = [1, 1]} : vector<8x64xf32> to vector<8x7xf32>
    %172 = vector.extract_strided_slice %156 {offsets = [0, 0], sizes = [8, 57], strides = [1, 1]} : vector<8x64xf32> to vector<8x57xf32>
    %173 = tpu.concatenate %171, %172 in 1 : vector<8x7xf32>, vector<8x57xf32> -> vector<8x64xf32>
    %cst_59 = arith.constant 0.000000e+00 : f32
    %174 = vector.shape_cast %49 : vector<1x64xi1> to vector<1x64xi1>
    %175 = vector.broadcast %174 : vector<1x64xi1> to vector<8x64xi1>
    %176 = vector.broadcast %cst_59 : f32 to vector<8x64xf32>
    %177 = arith.select %175, %173, %176 : vector<8x64xi1>, vector<8x64xf32>
    %178 = vector.extract_strided_slice %156 {offsets = [0, 63], sizes = [8, 1], strides = [1, 1]} : vector<8x64xf32> to vector<8x1xf32>
    %179 = vector.extract_strided_slice %156 {offsets = [0, 0], sizes = [8, 63], strides = [1, 1]} : vector<8x64xf32> to vector<8x63xf32>
    %180 = tpu.concatenate %178, %179 in 1 : vector<8x1xf32>, vector<8x63xf32> -> vector<8x64xf32>
    %cst_60 = arith.constant 0.000000e+00 : f32
    %181 = vector.shape_cast %51 : vector<1x64xi1> to vector<1x64xi1>
    %182 = vector.broadcast %181 : vector<1x64xi1> to vector<8x64xi1>
    %183 = vector.broadcast %cst_60 : f32 to vector<8x64xf32>
    %184 = arith.select %182, %180, %183 : vector<8x64xi1>, vector<8x64xf32>
    %185 = vector.extract_strided_slice %156 {offsets = [0, 1], sizes = [8, 63], strides = [1, 1]} : vector<8x64xf32> to vector<8x63xf32>
    %186 = vector.extract_strided_slice %156 {offsets = [0, 0], sizes = [8, 1], strides = [1, 1]} : vector<8x64xf32> to vector<8x1xf32>
    %187 = tpu.concatenate %185, %186 in 1 : vector<8x63xf32>, vector<8x1xf32> -> vector<8x64xf32>
    %cst_61 = arith.constant 0.000000e+00 : f32
    %188 = vector.shape_cast %53 : vector<1x64xi1> to vector<1x64xi1>
    %189 = vector.broadcast %188 : vector<1x64xi1> to vector<8x64xi1>
    %190 = vector.broadcast %cst_61 : f32 to vector<8x64xf32>
    %191 = arith.select %189, %187, %190 : vector<8x64xi1>, vector<8x64xf32>
    %192 = vector.extract_strided_slice %156 {offsets = [0, 7], sizes = [8, 57], strides = [1, 1]} : vector<8x64xf32> to vector<8x57xf32>
    %193 = vector.extract_strided_slice %156 {offsets = [0, 0], sizes = [8, 7], strides = [1, 1]} : vector<8x64xf32> to vector<8x7xf32>
    %194 = tpu.concatenate %192, %193 in 1 : vector<8x57xf32>, vector<8x7xf32> -> vector<8x64xf32>
    %cst_62 = arith.constant 0.000000e+00 : f32
    %195 = vector.shape_cast %58 : vector<1x64xi1> to vector<1x64xi1>
    %196 = vector.broadcast %195 : vector<1x64xi1> to vector<8x64xi1>
    %197 = vector.broadcast %cst_62 : f32 to vector<8x64xf32>
    %198 = arith.select %196, %194, %197 : vector<8x64xi1>, vector<8x64xf32>
    %199 = vector.extract_strided_slice %156 {offsets = [0, 8], sizes = [8, 56], strides = [1, 1]} : vector<8x64xf32> to vector<8x56xf32>
    %200 = vector.extract_strided_slice %156 {offsets = [0, 0], sizes = [8, 8], strides = [1, 1]} : vector<8x64xf32> to vector<8x8xf32>
    %201 = tpu.concatenate %199, %200 in 1 : vector<8x56xf32>, vector<8x8xf32> -> vector<8x64xf32>
    %cst_63 = arith.constant 0.000000e+00 : f32
    %202 = vector.shape_cast %60 : vector<1x64xi1> to vector<1x64xi1>
    %203 = vector.broadcast %202 : vector<1x64xi1> to vector<8x64xi1>
    %204 = vector.broadcast %cst_63 : f32 to vector<8x64xf32>
    %205 = arith.select %203, %201, %204 : vector<8x64xi1>, vector<8x64xf32>
    %206 = vector.extract_strided_slice %156 {offsets = [0, 9], sizes = [8, 55], strides = [1, 1]} : vector<8x64xf32> to vector<8x55xf32>
    %207 = vector.extract_strided_slice %156 {offsets = [0, 0], sizes = [8, 9], strides = [1, 1]} : vector<8x64xf32> to vector<8x9xf32>
    %208 = tpu.concatenate %206, %207 in 1 : vector<8x55xf32>, vector<8x9xf32> -> vector<8x64xf32>
    %cst_64 = arith.constant 0.000000e+00 : f32
    %209 = vector.shape_cast %65 : vector<1x64xi1> to vector<1x64xi1>
    %210 = vector.broadcast %209 : vector<1x64xi1> to vector<8x64xi1>
    %211 = vector.broadcast %cst_64 : f32 to vector<8x64xf32>
    %212 = arith.select %210, %208, %211 : vector<8x64xi1>, vector<8x64xf32>
    %213 = tpu.concatenate %163, %170, %177, %184, %156, %191, %198, %205, %212 in 0 : vector<8x64xf32>, vector<8x64xf32>, vector<8x64xf32>, vector<8x64xf32>, vector<8x64xf32>, vector<8x64xf32>, vector<8x64xf32>, vector<8x64xf32>, vector<8x64xf32> -> vector<72x64xf32>
    %c0_65 = arith.constant 0 : index
    %c0_66 = arith.constant 0 : index
    %214 = vector.load %arg5[%c0_65, %c0_66] : memref<16x72xf32, #tpu.memory_space<vmem>>, vector<16x72xf32>
    %cst_67 = arith.constant dense<0.000000e+00> : vector<16x64xf32>
    %215 = tpu.matmul %214, %213, %cst_67 {dimension_numbers = #tpu.dot_dimension_numbers<[1], [0], [0], [1], [0, 0, 1, 1], [], []>} : vector<16x72xf32>, vector<72x64xf32>, vector<16x64xf32> -> vector<16x64xf32>
    %c0_68 = arith.constant 0 : index
    %c0_69 = arith.constant 0 : index
    %216 = vector.load %arg6[%c0_68, %c0_69] : memref<16x1xf32, #tpu.memory_space<vmem>>, vector<16x1xf32>
    %217 = vector.broadcast %216 : vector<16x1xf32> to vector<16x64xf32>
    %218 = arith.addf %215, %217 : vector<16x64xf32>
    %cst_70 = arith.constant 0.000000e+00 : f32
    %219 = vector.broadcast %cst_70 : f32 to vector<16x64xf32>
    %220 = arith.maximumf %218, %219 : vector<16x64xf32>
    %221 = vector.extract_strided_slice %220 {offsets = [0, 1], sizes = [16, 63], strides = [1, 1]} : vector<16x64xf32> to vector<16x63xf32>
    %222 = vector.extract_strided_slice %220 {offsets = [0, 0], sizes = [16, 1], strides = [1, 1]} : vector<16x64xf32> to vector<16x1xf32>
    %223 = tpu.concatenate %221, %222 in 1 : vector<16x63xf32>, vector<16x1xf32> -> vector<16x64xf32>
    %224 = arith.maximumf %220, %223 : vector<16x64xf32>
    %225 = vector.extract_strided_slice %220 {offsets = [0, 8], sizes = [16, 56], strides = [1, 1]} : vector<16x64xf32> to vector<16x56xf32>
    %226 = vector.extract_strided_slice %220 {offsets = [0, 0], sizes = [16, 8], strides = [1, 1]} : vector<16x64xf32> to vector<16x8xf32>
    %227 = tpu.concatenate %225, %226 in 1 : vector<16x56xf32>, vector<16x8xf32> -> vector<16x64xf32>
    %228 = vector.extract_strided_slice %220 {offsets = [0, 9], sizes = [16, 55], strides = [1, 1]} : vector<16x64xf32> to vector<16x55xf32>
    %229 = vector.extract_strided_slice %220 {offsets = [0, 0], sizes = [16, 9], strides = [1, 1]} : vector<16x64xf32> to vector<16x9xf32>
    %230 = tpu.concatenate %228, %229 in 1 : vector<16x55xf32>, vector<16x9xf32> -> vector<16x64xf32>
    %231 = arith.maximumf %227, %230 : vector<16x64xf32>
    %232 = arith.maximumf %224, %231 : vector<16x64xf32>
    %c0_71 = arith.constant 0 : index
    %c0_72 = arith.constant 0 : index
    %233 = vector.load %arg16[%c0_71, %c0_72] : memref<64x16xf32, #tpu.memory_space<vmem>>, vector<64x16xf32>
    %cst_73 = arith.constant dense<0.000000e+00> : vector<16x16xf32>
    %234 = tpu.matmul %232, %233, %cst_73 {dimension_numbers = #tpu.dot_dimension_numbers<[1], [0], [0], [1], [0, 0, 1, 1], [], []>} : vector<16x64xf32>, vector<64x16xf32>, vector<16x16xf32> -> vector<16x16xf32>
    %235 = vector.extract_strided_slice %234 {offsets = [0, 11], sizes = [16, 5], strides = [1, 1]} : vector<16x16xf32> to vector<16x5xf32>
    %236 = vector.extract_strided_slice %234 {offsets = [0, 0], sizes = [16, 11], strides = [1, 1]} : vector<16x16xf32> to vector<16x11xf32>
    %237 = tpu.concatenate %235, %236 in 1 : vector<16x5xf32>, vector<16x11xf32> -> vector<16x16xf32>
    %cst_74 = arith.constant 0.000000e+00 : f32
    %238 = vector.shape_cast %75 : vector<1x16xi1> to vector<1x16xi1>
    %239 = vector.broadcast %238 : vector<1x16xi1> to vector<16x16xi1>
    %240 = vector.broadcast %cst_74 : f32 to vector<16x16xf32>
    %241 = arith.select %239, %237, %240 : vector<16x16xi1>, vector<16x16xf32>
    %242 = vector.extract_strided_slice %234 {offsets = [0, 12], sizes = [16, 4], strides = [1, 1]} : vector<16x16xf32> to vector<16x4xf32>
    %243 = vector.extract_strided_slice %234 {offsets = [0, 0], sizes = [16, 12], strides = [1, 1]} : vector<16x16xf32> to vector<16x12xf32>
    %244 = tpu.concatenate %242, %243 in 1 : vector<16x4xf32>, vector<16x12xf32> -> vector<16x16xf32>
    %cst_75 = arith.constant 0.000000e+00 : f32
    %245 = vector.shape_cast %77 : vector<1x16xi1> to vector<1x16xi1>
    %246 = vector.broadcast %245 : vector<1x16xi1> to vector<16x16xi1>
    %247 = vector.broadcast %cst_75 : f32 to vector<16x16xf32>
    %248 = arith.select %246, %244, %247 : vector<16x16xi1>, vector<16x16xf32>
    %249 = vector.extract_strided_slice %234 {offsets = [0, 13], sizes = [16, 3], strides = [1, 1]} : vector<16x16xf32> to vector<16x3xf32>
    %250 = vector.extract_strided_slice %234 {offsets = [0, 0], sizes = [16, 13], strides = [1, 1]} : vector<16x16xf32> to vector<16x13xf32>
    %251 = tpu.concatenate %249, %250 in 1 : vector<16x3xf32>, vector<16x13xf32> -> vector<16x16xf32>
    %cst_76 = arith.constant 0.000000e+00 : f32
    %252 = vector.shape_cast %82 : vector<1x16xi1> to vector<1x16xi1>
    %253 = vector.broadcast %252 : vector<1x16xi1> to vector<16x16xi1>
    %254 = vector.broadcast %cst_76 : f32 to vector<16x16xf32>
    %255 = arith.select %253, %251, %254 : vector<16x16xi1>, vector<16x16xf32>
    %256 = vector.extract_strided_slice %234 {offsets = [0, 15], sizes = [16, 1], strides = [1, 1]} : vector<16x16xf32> to vector<16x1xf32>
    %257 = vector.extract_strided_slice %234 {offsets = [0, 0], sizes = [16, 15], strides = [1, 1]} : vector<16x16xf32> to vector<16x15xf32>
    %258 = tpu.concatenate %256, %257 in 1 : vector<16x1xf32>, vector<16x15xf32> -> vector<16x16xf32>
    %cst_77 = arith.constant 0.000000e+00 : f32
    %259 = vector.shape_cast %84 : vector<1x16xi1> to vector<1x16xi1>
    %260 = vector.broadcast %259 : vector<1x16xi1> to vector<16x16xi1>
    %261 = vector.broadcast %cst_77 : f32 to vector<16x16xf32>
    %262 = arith.select %260, %258, %261 : vector<16x16xi1>, vector<16x16xf32>
    %263 = vector.extract_strided_slice %234 {offsets = [0, 1], sizes = [16, 15], strides = [1, 1]} : vector<16x16xf32> to vector<16x15xf32>
    %264 = vector.extract_strided_slice %234 {offsets = [0, 0], sizes = [16, 1], strides = [1, 1]} : vector<16x16xf32> to vector<16x1xf32>
    %265 = tpu.concatenate %263, %264 in 1 : vector<16x15xf32>, vector<16x1xf32> -> vector<16x16xf32>
    %cst_78 = arith.constant 0.000000e+00 : f32
    %266 = vector.shape_cast %86 : vector<1x16xi1> to vector<1x16xi1>
    %267 = vector.broadcast %266 : vector<1x16xi1> to vector<16x16xi1>
    %268 = vector.broadcast %cst_78 : f32 to vector<16x16xf32>
    %269 = arith.select %267, %265, %268 : vector<16x16xi1>, vector<16x16xf32>
    %270 = vector.extract_strided_slice %234 {offsets = [0, 3], sizes = [16, 13], strides = [1, 1]} : vector<16x16xf32> to vector<16x13xf32>
    %271 = vector.extract_strided_slice %234 {offsets = [0, 0], sizes = [16, 3], strides = [1, 1]} : vector<16x16xf32> to vector<16x3xf32>
    %272 = tpu.concatenate %270, %271 in 1 : vector<16x13xf32>, vector<16x3xf32> -> vector<16x16xf32>
    %cst_79 = arith.constant 0.000000e+00 : f32
    %273 = vector.shape_cast %91 : vector<1x16xi1> to vector<1x16xi1>
    %274 = vector.broadcast %273 : vector<1x16xi1> to vector<16x16xi1>
    %275 = vector.broadcast %cst_79 : f32 to vector<16x16xf32>
    %276 = arith.select %274, %272, %275 : vector<16x16xi1>, vector<16x16xf32>
    %277 = vector.extract_strided_slice %234 {offsets = [0, 4], sizes = [16, 12], strides = [1, 1]} : vector<16x16xf32> to vector<16x12xf32>
    %278 = vector.extract_strided_slice %234 {offsets = [0, 0], sizes = [16, 4], strides = [1, 1]} : vector<16x16xf32> to vector<16x4xf32>
    %279 = tpu.concatenate %277, %278 in 1 : vector<16x12xf32>, vector<16x4xf32> -> vector<16x16xf32>
    %cst_80 = arith.constant 0.000000e+00 : f32
    %280 = vector.shape_cast %93 : vector<1x16xi1> to vector<1x16xi1>
    %281 = vector.broadcast %280 : vector<1x16xi1> to vector<16x16xi1>
    %282 = vector.broadcast %cst_80 : f32 to vector<16x16xf32>
    %283 = arith.select %281, %279, %282 : vector<16x16xi1>, vector<16x16xf32>
    %284 = vector.extract_strided_slice %234 {offsets = [0, 5], sizes = [16, 11], strides = [1, 1]} : vector<16x16xf32> to vector<16x11xf32>
    %285 = vector.extract_strided_slice %234 {offsets = [0, 0], sizes = [16, 5], strides = [1, 1]} : vector<16x16xf32> to vector<16x5xf32>
    %286 = tpu.concatenate %284, %285 in 1 : vector<16x11xf32>, vector<16x5xf32> -> vector<16x16xf32>
    %cst_81 = arith.constant 0.000000e+00 : f32
    %287 = vector.shape_cast %98 : vector<1x16xi1> to vector<1x16xi1>
    %288 = vector.broadcast %287 : vector<1x16xi1> to vector<16x16xi1>
    %289 = vector.broadcast %cst_81 : f32 to vector<16x16xf32>
    %290 = arith.select %288, %286, %289 : vector<16x16xi1>, vector<16x16xf32>
    %291 = tpu.concatenate %241, %248, %255, %262, %234, %269, %276, %283, %290 in 0 : vector<16x16xf32>, vector<16x16xf32>, vector<16x16xf32>, vector<16x16xf32>, vector<16x16xf32>, vector<16x16xf32>, vector<16x16xf32>, vector<16x16xf32>, vector<16x16xf32> -> vector<144x16xf32>
    %c0_82 = arith.constant 0 : index
    %c0_83 = arith.constant 0 : index
    %292 = vector.load %arg7[%c0_82, %c0_83] : memref<32x144xf32, #tpu.memory_space<vmem>>, vector<32x144xf32>
    %cst_84 = arith.constant dense<0.000000e+00> : vector<32x16xf32>
    %293 = tpu.matmul %292, %291, %cst_84 {dimension_numbers = #tpu.dot_dimension_numbers<[1], [0], [0], [1], [0, 0, 1, 1], [], []>} : vector<32x144xf32>, vector<144x16xf32>, vector<32x16xf32> -> vector<32x16xf32>
    %c0_85 = arith.constant 0 : index
    %c0_86 = arith.constant 0 : index
    %294 = vector.load %arg8[%c0_85, %c0_86] : memref<32x1xf32, #tpu.memory_space<vmem>>, vector<32x1xf32>
    %295 = vector.broadcast %294 : vector<32x1xf32> to vector<32x16xf32>
    %296 = arith.addf %293, %295 : vector<32x16xf32>
    %cst_87 = arith.constant 0.000000e+00 : f32
    %297 = vector.broadcast %cst_87 : f32 to vector<32x16xf32>
    %298 = arith.maximumf %296, %297 : vector<32x16xf32>
    %c0_88 = arith.constant 0 : index
    %c0_89 = arith.constant 0 : index
    %299 = vector.load %arg17[%c0_88, %c0_89] : memref<16x64xf32, #tpu.memory_space<vmem>>, vector<16x64xf32>
    %cst_90 = arith.constant dense<0.000000e+00> : vector<32x64xf32>
    %300 = tpu.matmul %298, %299, %cst_90 {dimension_numbers = #tpu.dot_dimension_numbers<[1], [0], [0], [1], [0, 0, 1, 1], [], []>} : vector<32x16xf32>, vector<16x64xf32>, vector<32x64xf32> -> vector<32x64xf32>
    %301 = tpu.concatenate %300, %220 in 0 : vector<32x64xf32>, vector<16x64xf32> -> vector<48x64xf32>
    %302 = vector.extract_strided_slice %301 {offsets = [0, 55], sizes = [48, 9], strides = [1, 1]} : vector<48x64xf32> to vector<48x9xf32>
    %303 = vector.extract_strided_slice %301 {offsets = [0, 0], sizes = [48, 55], strides = [1, 1]} : vector<48x64xf32> to vector<48x55xf32>
    %304 = tpu.concatenate %302, %303 in 1 : vector<48x9xf32>, vector<48x55xf32> -> vector<48x64xf32>
    %cst_91 = arith.constant 0.000000e+00 : f32
    %305 = vector.shape_cast %42 : vector<1x64xi1> to vector<1x64xi1>
    %306 = vector.broadcast %305 : vector<1x64xi1> to vector<48x64xi1>
    %307 = vector.broadcast %cst_91 : f32 to vector<48x64xf32>
    %308 = arith.select %306, %304, %307 : vector<48x64xi1>, vector<48x64xf32>
    %309 = vector.extract_strided_slice %301 {offsets = [0, 56], sizes = [48, 8], strides = [1, 1]} : vector<48x64xf32> to vector<48x8xf32>
    %310 = vector.extract_strided_slice %301 {offsets = [0, 0], sizes = [48, 56], strides = [1, 1]} : vector<48x64xf32> to vector<48x56xf32>
    %311 = tpu.concatenate %309, %310 in 1 : vector<48x8xf32>, vector<48x56xf32> -> vector<48x64xf32>
    %cst_92 = arith.constant 0.000000e+00 : f32
    %312 = vector.shape_cast %44 : vector<1x64xi1> to vector<1x64xi1>
    %313 = vector.broadcast %312 : vector<1x64xi1> to vector<48x64xi1>
    %314 = vector.broadcast %cst_92 : f32 to vector<48x64xf32>
    %315 = arith.select %313, %311, %314 : vector<48x64xi1>, vector<48x64xf32>
    %316 = vector.extract_strided_slice %301 {offsets = [0, 57], sizes = [48, 7], strides = [1, 1]} : vector<48x64xf32> to vector<48x7xf32>
    %317 = vector.extract_strided_slice %301 {offsets = [0, 0], sizes = [48, 57], strides = [1, 1]} : vector<48x64xf32> to vector<48x57xf32>
    %318 = tpu.concatenate %316, %317 in 1 : vector<48x7xf32>, vector<48x57xf32> -> vector<48x64xf32>
    %cst_93 = arith.constant 0.000000e+00 : f32
    %319 = vector.shape_cast %49 : vector<1x64xi1> to vector<1x64xi1>
    %320 = vector.broadcast %319 : vector<1x64xi1> to vector<48x64xi1>
    %321 = vector.broadcast %cst_93 : f32 to vector<48x64xf32>
    %322 = arith.select %320, %318, %321 : vector<48x64xi1>, vector<48x64xf32>
    %323 = vector.extract_strided_slice %301 {offsets = [0, 63], sizes = [48, 1], strides = [1, 1]} : vector<48x64xf32> to vector<48x1xf32>
    %324 = vector.extract_strided_slice %301 {offsets = [0, 0], sizes = [48, 63], strides = [1, 1]} : vector<48x64xf32> to vector<48x63xf32>
    %325 = tpu.concatenate %323, %324 in 1 : vector<48x1xf32>, vector<48x63xf32> -> vector<48x64xf32>
    %cst_94 = arith.constant 0.000000e+00 : f32
    %326 = vector.shape_cast %51 : vector<1x64xi1> to vector<1x64xi1>
    %327 = vector.broadcast %326 : vector<1x64xi1> to vector<48x64xi1>
    %328 = vector.broadcast %cst_94 : f32 to vector<48x64xf32>
    %329 = arith.select %327, %325, %328 : vector<48x64xi1>, vector<48x64xf32>
    %330 = vector.extract_strided_slice %301 {offsets = [0, 1], sizes = [48, 63], strides = [1, 1]} : vector<48x64xf32> to vector<48x63xf32>
    %331 = vector.extract_strided_slice %301 {offsets = [0, 0], sizes = [48, 1], strides = [1, 1]} : vector<48x64xf32> to vector<48x1xf32>
    %332 = tpu.concatenate %330, %331 in 1 : vector<48x63xf32>, vector<48x1xf32> -> vector<48x64xf32>
    %cst_95 = arith.constant 0.000000e+00 : f32
    %333 = vector.shape_cast %53 : vector<1x64xi1> to vector<1x64xi1>
    %334 = vector.broadcast %333 : vector<1x64xi1> to vector<48x64xi1>
    %335 = vector.broadcast %cst_95 : f32 to vector<48x64xf32>
    %336 = arith.select %334, %332, %335 : vector<48x64xi1>, vector<48x64xf32>
    %337 = vector.extract_strided_slice %301 {offsets = [0, 7], sizes = [48, 57], strides = [1, 1]} : vector<48x64xf32> to vector<48x57xf32>
    %338 = vector.extract_strided_slice %301 {offsets = [0, 0], sizes = [48, 7], strides = [1, 1]} : vector<48x64xf32> to vector<48x7xf32>
    %339 = tpu.concatenate %337, %338 in 1 : vector<48x57xf32>, vector<48x7xf32> -> vector<48x64xf32>
    %cst_96 = arith.constant 0.000000e+00 : f32
    %340 = vector.shape_cast %58 : vector<1x64xi1> to vector<1x64xi1>
    %341 = vector.broadcast %340 : vector<1x64xi1> to vector<48x64xi1>
    %342 = vector.broadcast %cst_96 : f32 to vector<48x64xf32>
    %343 = arith.select %341, %339, %342 : vector<48x64xi1>, vector<48x64xf32>
    %344 = vector.extract_strided_slice %301 {offsets = [0, 8], sizes = [48, 56], strides = [1, 1]} : vector<48x64xf32> to vector<48x56xf32>
    %345 = vector.extract_strided_slice %301 {offsets = [0, 0], sizes = [48, 8], strides = [1, 1]} : vector<48x64xf32> to vector<48x8xf32>
    %346 = tpu.concatenate %344, %345 in 1 : vector<48x56xf32>, vector<48x8xf32> -> vector<48x64xf32>
    %cst_97 = arith.constant 0.000000e+00 : f32
    %347 = vector.shape_cast %60 : vector<1x64xi1> to vector<1x64xi1>
    %348 = vector.broadcast %347 : vector<1x64xi1> to vector<48x64xi1>
    %349 = vector.broadcast %cst_97 : f32 to vector<48x64xf32>
    %350 = arith.select %348, %346, %349 : vector<48x64xi1>, vector<48x64xf32>
    %351 = vector.extract_strided_slice %301 {offsets = [0, 9], sizes = [48, 55], strides = [1, 1]} : vector<48x64xf32> to vector<48x55xf32>
    %352 = vector.extract_strided_slice %301 {offsets = [0, 0], sizes = [48, 9], strides = [1, 1]} : vector<48x64xf32> to vector<48x9xf32>
    %353 = tpu.concatenate %351, %352 in 1 : vector<48x55xf32>, vector<48x9xf32> -> vector<48x64xf32>
    %cst_98 = arith.constant 0.000000e+00 : f32
    %354 = vector.shape_cast %65 : vector<1x64xi1> to vector<1x64xi1>
    %355 = vector.broadcast %354 : vector<1x64xi1> to vector<48x64xi1>
    %356 = vector.broadcast %cst_98 : f32 to vector<48x64xf32>
    %357 = arith.select %355, %353, %356 : vector<48x64xi1>, vector<48x64xf32>
    %358 = tpu.concatenate %308, %315, %322, %329, %301, %336, %343, %350, %357 in 0 : vector<48x64xf32>, vector<48x64xf32>, vector<48x64xf32>, vector<48x64xf32>, vector<48x64xf32>, vector<48x64xf32>, vector<48x64xf32>, vector<48x64xf32>, vector<48x64xf32> -> vector<432x64xf32>
    %c0_99 = arith.constant 0 : index
    %c0_100 = arith.constant 0 : index
    %359 = vector.load %arg9[%c0_99, %c0_100] : memref<16x432xf32, #tpu.memory_space<vmem>>, vector<16x432xf32>
    %cst_101 = arith.constant dense<0.000000e+00> : vector<16x64xf32>
    %360 = tpu.matmul %359, %358, %cst_101 {dimension_numbers = #tpu.dot_dimension_numbers<[1], [0], [0], [1], [0, 0, 1, 1], [], []>} : vector<16x432xf32>, vector<432x64xf32>, vector<16x64xf32> -> vector<16x64xf32>
    %c0_102 = arith.constant 0 : index
    %c0_103 = arith.constant 0 : index
    %361 = vector.load %arg10[%c0_102, %c0_103] : memref<16x1xf32, #tpu.memory_space<vmem>>, vector<16x1xf32>
    %362 = vector.broadcast %361 : vector<16x1xf32> to vector<16x64xf32>
    %363 = arith.addf %360, %362 : vector<16x64xf32>
    %cst_104 = arith.constant 0.000000e+00 : f32
    %364 = vector.broadcast %cst_104 : f32 to vector<16x64xf32>
    %365 = arith.maximumf %363, %364 : vector<16x64xf32>
    %c0_105 = arith.constant 0 : index
    %c0_106 = arith.constant 0 : index
    %366 = vector.load %arg18[%c0_105, %c0_106] : memref<64x256xf32, #tpu.memory_space<vmem>>, vector<64x256xf32>
    %cst_107 = arith.constant dense<0.000000e+00> : vector<16x256xf32>
    %367 = tpu.matmul %365, %366, %cst_107 {dimension_numbers = #tpu.dot_dimension_numbers<[1], [0], [0], [1], [0, 0, 1, 1], [], []>} : vector<16x64xf32>, vector<64x256xf32>, vector<16x256xf32> -> vector<16x256xf32>
    %368 = tpu.concatenate %367, %148 in 0 : vector<16x256xf32>, vector<8x256xf32> -> vector<24x256xf32>
    %c17_i32_108 = arith.constant 17 : i32
    %369 = tpu.dynamic_rotate %368 by %c17_i32_108 dim 1 : vector<24x256xf32>, i32 -> vector<24x256xf32>
    %cst_109 = arith.constant 0.000000e+00 : f32
    %370 = vector.shape_cast %9 : vector<1x256xi1> to vector<1x256xi1>
    %371 = vector.broadcast %370 : vector<1x256xi1> to vector<24x256xi1>
    %372 = vector.broadcast %cst_109 : f32 to vector<24x256xf32>
    %373 = arith.select %371, %369, %372 : vector<24x256xi1>, vector<24x256xf32>
    %c16_i32_110 = arith.constant 16 : i32
    %374 = tpu.dynamic_rotate %368 by %c16_i32_110 dim 1 : vector<24x256xf32>, i32 -> vector<24x256xf32>
    %cst_111 = arith.constant 0.000000e+00 : f32
    %375 = vector.shape_cast %11 : vector<1x256xi1> to vector<1x256xi1>
    %376 = vector.broadcast %375 : vector<1x256xi1> to vector<24x256xi1>
    %377 = vector.broadcast %cst_111 : f32 to vector<24x256xf32>
    %378 = arith.select %376, %374, %377 : vector<24x256xi1>, vector<24x256xf32>
    %c15_i32_112 = arith.constant 15 : i32
    %379 = tpu.dynamic_rotate %368 by %c15_i32_112 dim 1 : vector<24x256xf32>, i32 -> vector<24x256xf32>
    %cst_113 = arith.constant 0.000000e+00 : f32
    %380 = vector.shape_cast %16 : vector<1x256xi1> to vector<1x256xi1>
    %381 = vector.broadcast %380 : vector<1x256xi1> to vector<24x256xi1>
    %382 = vector.broadcast %cst_113 : f32 to vector<24x256xf32>
    %383 = arith.select %381, %379, %382 : vector<24x256xi1>, vector<24x256xf32>
    %c1_i32_114 = arith.constant 1 : i32
    %384 = tpu.dynamic_rotate %368 by %c1_i32_114 dim 1 : vector<24x256xf32>, i32 -> vector<24x256xf32>
    %cst_115 = arith.constant 0.000000e+00 : f32
    %385 = vector.shape_cast %18 : vector<1x256xi1> to vector<1x256xi1>
    %386 = vector.broadcast %385 : vector<1x256xi1> to vector<24x256xi1>
    %387 = vector.broadcast %cst_115 : f32 to vector<24x256xf32>
    %388 = arith.select %386, %384, %387 : vector<24x256xi1>, vector<24x256xf32>
    %c255_i32_116 = arith.constant 255 : i32
    %389 = tpu.dynamic_rotate %368 by %c255_i32_116 dim 1 : vector<24x256xf32>, i32 -> vector<24x256xf32>
    %cst_117 = arith.constant 0.000000e+00 : f32
    %390 = vector.shape_cast %20 : vector<1x256xi1> to vector<1x256xi1>
    %391 = vector.broadcast %390 : vector<1x256xi1> to vector<24x256xi1>
    %392 = vector.broadcast %cst_117 : f32 to vector<24x256xf32>
    %393 = arith.select %391, %389, %392 : vector<24x256xi1>, vector<24x256xf32>
    %c241_i32_118 = arith.constant 241 : i32
    %394 = tpu.dynamic_rotate %368 by %c241_i32_118 dim 1 : vector<24x256xf32>, i32 -> vector<24x256xf32>
    %cst_119 = arith.constant 0.000000e+00 : f32
    %395 = vector.shape_cast %25 : vector<1x256xi1> to vector<1x256xi1>
    %396 = vector.broadcast %395 : vector<1x256xi1> to vector<24x256xi1>
    %397 = vector.broadcast %cst_119 : f32 to vector<24x256xf32>
    %398 = arith.select %396, %394, %397 : vector<24x256xi1>, vector<24x256xf32>
    %c240_i32_120 = arith.constant 240 : i32
    %399 = tpu.dynamic_rotate %368 by %c240_i32_120 dim 1 : vector<24x256xf32>, i32 -> vector<24x256xf32>
    %cst_121 = arith.constant 0.000000e+00 : f32
    %400 = vector.shape_cast %27 : vector<1x256xi1> to vector<1x256xi1>
    %401 = vector.broadcast %400 : vector<1x256xi1> to vector<24x256xi1>
    %402 = vector.broadcast %cst_121 : f32 to vector<24x256xf32>
    %403 = arith.select %401, %399, %402 : vector<24x256xi1>, vector<24x256xf32>
    %c239_i32_122 = arith.constant 239 : i32
    %404 = tpu.dynamic_rotate %368 by %c239_i32_122 dim 1 : vector<24x256xf32>, i32 -> vector<24x256xf32>
    %cst_123 = arith.constant 0.000000e+00 : f32
    %405 = vector.shape_cast %32 : vector<1x256xi1> to vector<1x256xi1>
    %406 = vector.broadcast %405 : vector<1x256xi1> to vector<24x256xi1>
    %407 = vector.broadcast %cst_123 : f32 to vector<24x256xf32>
    %408 = arith.select %406, %404, %407 : vector<24x256xi1>, vector<24x256xf32>
    %409 = tpu.concatenate %373, %378, %383, %388, %368, %393, %398, %403, %408 in 0 : vector<24x256xf32>, vector<24x256xf32>, vector<24x256xf32>, vector<24x256xf32>, vector<24x256xf32>, vector<24x256xf32>, vector<24x256xf32>, vector<24x256xf32>, vector<24x256xf32> -> vector<216x256xf32>
    %c0_124 = arith.constant 0 : index
    %c0_125 = arith.constant 0 : index
    %410 = vector.load %arg11[%c0_124, %c0_125] : memref<8x216xf32, #tpu.memory_space<vmem>>, vector<8x216xf32>
    %cst_126 = arith.constant dense<0.000000e+00> : vector<8x256xf32>
    %411 = tpu.matmul %410, %409, %cst_126 {dimension_numbers = #tpu.dot_dimension_numbers<[1], [0], [0], [1], [0, 0, 1, 1], [], []>} : vector<8x216xf32>, vector<216x256xf32>, vector<8x256xf32> -> vector<8x256xf32>
    %c0_127 = arith.constant 0 : index
    %c0_128 = arith.constant 0 : index
    %412 = vector.load %arg12[%c0_127, %c0_128] : memref<8x1xf32, #tpu.memory_space<vmem>>, vector<8x1xf32>
    %413 = vector.broadcast %412 : vector<8x1xf32> to vector<8x256xf32>
    %414 = arith.addf %411, %413 : vector<8x256xf32>
    %cst_129 = arith.constant 0.000000e+00 : f32
    %415 = vector.broadcast %cst_129 : f32 to vector<8x256xf32>
    %416 = arith.maximumf %414, %415 : vector<8x256xf32>
    %c0_130 = arith.constant 0 : index
    %c0_131 = arith.constant 0 : index
    %417 = vector.load %arg13[%c0_130, %c0_131] : memref<3x8xf32, #tpu.memory_space<vmem>>, vector<3x8xf32>
    %cst_132 = arith.constant dense<0.000000e+00> : vector<3x256xf32>
    %418 = tpu.matmul %417, %416, %cst_132 {dimension_numbers = #tpu.dot_dimension_numbers<[1], [0], [0], [1], [0, 0, 1, 1], [], []>} : vector<3x8xf32>, vector<8x256xf32>, vector<3x256xf32> -> vector<3x256xf32>
    %c0_133 = arith.constant 0 : index
    %c0_134 = arith.constant 0 : index
    %419 = vector.load %arg14[%c0_133, %c0_134] : memref<3x1xf32, #tpu.memory_space<vmem>>, vector<3x1xf32>
    %420 = vector.broadcast %419 : vector<3x1xf32> to vector<3x256xf32>
    %421 = arith.addf %418, %420 : vector<3x256xf32>
    %422 = vector.shape_cast %421 : vector<3x256xf32> to vector<1x3x256xf32>
    %c0_135 = arith.constant 0 : index
    %c0_136 = arith.constant 0 : index
    %c0_137 = arith.constant 0 : index
    %423 = vector.load %arg19[%c0_135, %c0_136, %c0_137] : memref<1x3x256xf32, #tpu.memory_space<vmem>>, vector<1x3x256xf32>
    tpu.vector_store %arg19[%c0_135, %c0_136, %c0_137], %422 {strides = array<i32>} : memref<1x3x256xf32, #tpu.memory_space<vmem>>, vector<1x3x256xf32>,
    %c0_138 = arith.constant 0 : index
    %c0_139 = arith.constant 0 : index
    %c0_140 = arith.constant 0 : index
    %424 = vector.load %arg2[%c0_138, %c0_139, %c0_140] : memref<1x1x256xi32, #tpu.memory_space<vmem>>, vector<1x1x256xi32>
    %425 = vector.shape_cast %424 : vector<1x1x256xi32> to vector<1x256xi32>
    %cst_141 = arith.constant dense<0xFF800000> : vector<256xf32>
    %426 = vector.multi_reduction <maximumf>, %421, %cst_141 [0] : vector<3x256xf32> to vector<256xf32>
    %427 = vector.shape_cast %426 : vector<256xf32> to vector<1x256xf32>
    %428 = vector.broadcast %427 : vector<1x256xf32> to vector<3x256xf32>
    %429 = arith.subf %421, %428 : vector<3x256xf32>
    %430 = math.exp %429 : vector<3x256xf32>
    %cst_142 = arith.constant dense<0.000000e+00> : vector<256xf32>
    %431 = vector.multi_reduction <add>, %430, %cst_142 [0] : vector<3x256xf32> to vector<256xf32>
    %432 = vector.shape_cast %431 : vector<256xf32> to vector<1x256xf32>
    %433 = math.log %432 : vector<1x256xf32>
    %434 = arith.addf %427, %433 : vector<1x256xf32>
    %435 = tpu.iota {dimensions = array<i32: 0>} : vector<3x256xi32>
    %436 = vector.broadcast %425 : vector<1x256xi32> to vector<3x256xi32>
    %437 = arith.cmpi eq, %435, %436 : vector<3x256xi32>
    %cst_143 = arith.constant 0.000000e+00 : f32
    %438 = vector.broadcast %cst_143 : f32 to vector<3x256xf32>
    %439 = arith.select %437, %421, %438 : vector<3x256xi1>, vector<3x256xf32>
    %cst_144 = arith.constant dense<0.000000e+00> : vector<256xf32>
    %440 = vector.multi_reduction <add>, %439, %cst_144 [0] : vector<3x256xf32> to vector<256xf32>
    %441 = vector.shape_cast %440 : vector<256xf32> to vector<1x256xf32>
    %442 = arith.subf %434, %441 : vector<1x256xf32>
    %cst_145 = arith.constant dense<0.000000e+00> : vector<1xf32>
    %443 = vector.multi_reduction <add>, %442, %cst_145 [1] : vector<1x256xf32> to vector<1xf32>
    %444 = vector.shape_cast %443 : vector<1xf32> to vector<1x1xf32>
    %cst_146 = arith.constant 0.001953125 : f32
    %445 = vector.broadcast %cst_146 : f32 to vector<1x1xf32>
    %446 = arith.mulf %444, %445 : vector<1x1xf32>
    %447 = vector.shape_cast %446 : vector<1x1xf32> to vector<1x1x1xf32>
    %c0_147 = arith.constant 0 : index
    %c0_148 = arith.constant 0 : index
    %c0_149 = arith.constant 0 : index
    %448 = vector.load %arg20[%c0_147, %c0_148, %c0_149] : memref<1x1x1xf32, #tpu.memory_space<vmem>>, vector<1x1x1xf32>
    tpu.vector_store %arg20[%c0_147, %c0_148, %c0_149], %447 {strides = array<i32>} : memref<1x1x1xf32, #tpu.memory_space<vmem>>, vector<1x1x1xf32>,
    return
  }
  func.func @transform_0(%arg0: i32) -> (i32, i32, i32) {
    %c0_i32 = arith.constant 0 : i32
    %c0_i32_0 = arith.constant 0 : i32
    %c0_i32_1 = arith.constant 0 : i32
    return %arg0, %c0_i32, %c0_i32_0 : i32, i32, i32
  }
  func.func @transform_1(%arg0: i32) -> (i32, i32, i32) {
    %c0_i32 = arith.constant 0 : i32
    %c0_i32_0 = arith.constant 0 : i32
    %c0_i32_1 = arith.constant 0 : i32
    return %arg0, %c0_i32, %c0_i32_0 : i32, i32, i32
  }
  func.func @transform_2(%arg0: i32) -> (i32, i32) {
    %c0_i32 = arith.constant 0 : i32
    %c0_i32_0 = arith.constant 0 : i32
    %c0_i32_1 = arith.constant 0 : i32
    return %c0_i32, %c0_i32_0 : i32, i32
  }
  func.func @transform_3(%arg0: i32) -> (i32, i32) {
    %c0_i32 = arith.constant 0 : i32
    %c0_i32_0 = arith.constant 0 : i32
    %c0_i32_1 = arith.constant 0 : i32
    return %c0_i32, %c0_i32_0 : i32, i32
  }
  func.func @transform_4(%arg0: i32) -> (i32, i32) {
    %c0_i32 = arith.constant 0 : i32
    %c0_i32_0 = arith.constant 0 : i32
    %c0_i32_1 = arith.constant 0 : i32
    return %c0_i32, %c0_i32_0 : i32, i32
  }
  func.func @transform_5(%arg0: i32) -> (i32, i32) {
    %c0_i32 = arith.constant 0 : i32
    %c0_i32_0 = arith.constant 0 : i32
    %c0_i32_1 = arith.constant 0 : i32
    return %c0_i32, %c0_i32_0 : i32, i32
  }
  func.func @transform_6(%arg0: i32) -> (i32, i32) {
    %c0_i32 = arith.constant 0 : i32
    %c0_i32_0 = arith.constant 0 : i32
    %c0_i32_1 = arith.constant 0 : i32
    return %c0_i32, %c0_i32_0 : i32, i32
  }
  func.func @transform_7(%arg0: i32) -> (i32, i32) {
    %c0_i32 = arith.constant 0 : i32
    %c0_i32_0 = arith.constant 0 : i32
    %c0_i32_1 = arith.constant 0 : i32
    return %c0_i32, %c0_i32_0 : i32, i32
  }
  func.func @transform_8(%arg0: i32) -> (i32, i32) {
    %c0_i32 = arith.constant 0 : i32
    %c0_i32_0 = arith.constant 0 : i32
    %c0_i32_1 = arith.constant 0 : i32
    return %c0_i32, %c0_i32_0 : i32, i32
  }
  func.func @transform_9(%arg0: i32) -> (i32, i32) {
    %c0_i32 = arith.constant 0 : i32
    %c0_i32_0 = arith.constant 0 : i32
    %c0_i32_1 = arith.constant 0 : i32
    return %c0_i32, %c0_i32_0 : i32, i32
  }
  func.func @transform_10(%arg0: i32) -> (i32, i32) {
    %c0_i32 = arith.constant 0 : i32
    %c0_i32_0 = arith.constant 0 : i32
    %c0_i32_1 = arith.constant 0 : i32
    return %c0_i32, %c0_i32_0 : i32, i32
  }
  func.func @transform_11(%arg0: i32) -> (i32, i32) {
    %c0_i32 = arith.constant 0 : i32
    %c0_i32_0 = arith.constant 0 : i32
    %c0_i32_1 = arith.constant 0 : i32
    return %c0_i32, %c0_i32_0 : i32, i32
  }
  func.func @transform_12(%arg0: i32) -> (i32, i32) {
    %c0_i32 = arith.constant 0 : i32
    %c0_i32_0 = arith.constant 0 : i32
    %c0_i32_1 = arith.constant 0 : i32
    return %c0_i32, %c0_i32_0 : i32, i32
  }
  func.func @transform_13(%arg0: i32) -> (i32, i32) {
    %c0_i32 = arith.constant 0 : i32
    %c0_i32_0 = arith.constant 0 : i32
    %c0_i32_1 = arith.constant 0 : i32
    return %c0_i32, %c0_i32_0 : i32, i32
  }
  func.func @transform_14(%arg0: i32) -> (i32, i32) {
    %c0_i32 = arith.constant 0 : i32
    %c0_i32_0 = arith.constant 0 : i32
    %c0_i32_1 = arith.constant 0 : i32
    return %c0_i32, %c0_i32_0 : i32, i32
  }
  func.func @transform_15(%arg0: i32) -> (i32, i32) {
    %c0_i32 = arith.constant 0 : i32
    %c0_i32_0 = arith.constant 0 : i32
    %c0_i32_1 = arith.constant 0 : i32
    return %c0_i32, %c0_i32_0 : i32, i32
  }
  func.func @transform_16(%arg0: i32) -> (i32, i32) {
    %c0_i32 = arith.constant 0 : i32
    %c0_i32_0 = arith.constant 0 : i32
    %c0_i32_1 = arith.constant 0 : i32
    return %c0_i32, %c0_i32_0 : i32, i32
  }
  func.func @transform_17(%arg0: i32) -> (i32, i32) {
    %c0_i32 = arith.constant 0 : i32
    %c0_i32_0 = arith.constant 0 : i32
    %c0_i32_1 = arith.constant 0 : i32
    return %c0_i32, %c0_i32_0 : i32, i32
  }
  func.func @transform_18(%arg0: i32) -> (i32, i32, i32) {
    %c0_i32 = arith.constant 0 : i32
    %c0_i32_0 = arith.constant 0 : i32
    %c0_i32_1 = arith.constant 0 : i32
    return %arg0, %c0_i32, %c0_i32_0 : i32, i32, i32
  }
  func.func @transform_19(%arg0: i32) -> (i32, i32, i32) {
    %c0_i32 = arith.constant 0 : i32
    %c0_i32_0 = arith.constant 0 : i32
    %c0_i32_1 = arith.constant 0 : i32
    return %arg0, %c0_i32, %c0_i32_0 : i32, i32, i32
  }
}

</mosaic_0001>

<llo_original>
// kernel: segmentation_network_forward.1
$region0: #{segmentation_network_forward.1}
  #allocation0 [shape = 'u32[]', space=smem, size = 0x4, offset = 0x4, fixed_abs, tag = 'smem constant byte address 0x4 - core index']
  #allocation1 [shape = 'u32[144,128]{1,0:T(1,128)}', space=vmem, size = 0x12000, scoped, tag = 'internal scratch']
  %s0 = inlined_call_operand.vmem [shape: f32[2,8,256], index: 0, kind: input, shape index: {}]
  %s1 = inlined_call_operand.vmem [shape: s32[2,1,256], index: 1, kind: input, shape index: {}]
  %s2 = inlined_call_operand.vmem [shape: f32[8,72], index: 2, kind: input, shape index: {}]
  %s3 = inlined_call_operand.vmem [shape: f32[8,1], index: 3, kind: input, shape index: {}]
  %s4 = inlined_call_operand.vmem [shape: f32[16,72], index: 4, kind: input, shape index: {}]
  %s5 = inlined_call_operand.vmem [shape: f32[16,1], index: 5, kind: input, shape index: {}]
  %s6 = inlined_call_operand.vmem [shape: f32[32,144], index: 6, kind: input, shape index: {}]
  %s7 = inlined_call_operand.vmem [shape: f32[32,1], index: 7, kind: input, shape index: {}]
  %s8 = inlined_call_operand.vmem [shape: f32[16,432], index: 8, kind: input, shape index: {}]
  %s9 = inlined_call_operand.vmem [shape: f32[16,1], index: 9, kind: input, shape index: {}]
  %s10 = inlined_call_operand.vmem [shape: f32[8,216], index: 10, kind: input, shape index: {}]
  %s11 = inlined_call_operand.vmem [shape: f32[8,1], index: 11, kind: input, shape index: {}]
  %s12 = inlined_call_operand.vmem [shape: f32[3,8], index: 12, kind: input, shape index: {}]
  %s13 = inlined_call_operand.vmem [shape: f32[3,1], index: 13, kind: input, shape index: {}]
  %s14 = inlined_call_operand.vmem [shape: f32[256,64], index: 14, kind: input, shape index: {}]
  %s15 = inlined_call_operand.vmem [shape: f32[64,16], index: 15, kind: input, shape index: {}]
  %s16 = inlined_call_operand.vmem [shape: f32[16,64], index: 16, kind: input, shape index: {}]
  %s17 = inlined_call_operand.vmem [shape: f32[64,256], index: 17, kind: input, shape index: {}]
  %s18 = inlined_call_operand.vmem [shape: f32[2,3,256], index: 18, kind: output, shape index: {0}]
  %s19 = inlined_call_operand.vmem [shape: f32[2,1,1], index: 19, kind: output, shape index: {1}]
  %20 = xla_tuple %s18, %s19
  %s21 = sld [smem:[#allocation0]]
  $region113: #{segmentation_network_forward.1} parent=0
    _
  %s23 = ssub.s32 1, %s21
  %s24 = scalar_select 0, %s23, %s21
  loop: start=0, step=1, limit=4
  $region2: #{segmentation_network_forward.1} parent=0 // loop_pre_header
    _
  $region3: #{segmentation_network_forward.1} parent=0 // loop_header
    %s26 = sphi 0, %s30
    %p27 = scmp.ge.s32.totalorder %s26, 4
    %s36 = sphi 0, %s38
    %s39 = sphi 0, %s36
    %s40 = sphi 0, %s39
    %s56 = sphi 0, %s40
    %s62 = sphi 0, %s64
    %s65 = sphi 0, %s62
    %s66 = sphi 0, %s65
    %s82 = sphi 0, %s66
    %s86 = sphi 0, %s86
    %s88 = sphi 0, %s86
    %s89 = sphi 0, %s88
    %s103 = sphi 0, %s89
    %s107 = sphi 0, %s107
    %s109 = sphi 0, %s107
    %s110 = sphi 0, %s109
    %s124 = sphi 0, %s110
    %s128 = sphi 0, %s128
    %s130 = sphi 0, %s128
    %s131 = sphi 0, %s130
    %s145 = sphi 0, %s131
    %s149 = sphi 0, %s149
    %s151 = sphi 0, %s149
    %s152 = sphi 0, %s151
    %s166 = sphi 0, %s152
    %s170 = sphi 0, %s170
    %s172 = sphi 0, %s170
    %s173 = sphi 0, %s172
    %s187 = sphi 0, %s173
    %s191 = sphi 0, %s191
    %s193 = sphi 0, %s191
    %s194 = sphi 0, %s193
    %s208 = sphi 0, %s194
    %s212 = sphi 0, %s212
    %s214 = sphi 0, %s212
    %s215 = sphi 0, %s214
    %s229 = sphi 0, %s215
    %s233 = sphi 0, %s233
    %s235 = sphi 0, %s233
    %s236 = sphi 0, %s235
    %s250 = sphi 0, %s236
    %s254 = sphi 0, %s254
    %s256 = sphi 0, %s254
    %s257 = sphi 0, %s256
    %s271 = sphi 0, %s257
    %s275 = sphi 0, %s275
    %s277 = sphi 0, %s275
    %s278 = sphi 0, %s277
    %s292 = sphi 0, %s278
    %s296 = sphi 0, %s296
    %s298 = sphi 0, %s296
    %s299 = sphi 0, %s298
    %s313 = sphi 0, %s299
    %s317 = sphi 0, %s317
    %s319 = sphi 0, %s317
    %s320 = sphi 0, %s319
    %s334 = sphi 0, %s320
    %s338 = sphi 0, %s338
    %s340 = sphi 0, %s338
    %s341 = sphi 0, %s340
    %s355 = sphi 0, %s341
    %s359 = sphi 0, %s359
    %s361 = sphi 0, %s359
    %s362 = sphi 0, %s361
    %s376 = sphi 0, %s362
    %s380 = sphi 0, %s380
    %s382 = sphi 0, %s380
    %s383 = sphi 0, %s382
    %s397 = sphi 0, %s383
    %s401 = sphi 0, %s401
    %s403 = sphi 0, %s401
    %s404 = sphi 0, %s403
    %s418 = sphi 0, %s404
    %s424 = sphi 0, %s426
    %s427 = sphi 0, %s424
    %s428 = sphi 0, %s427
    %s444 = sphi 0, %s428
    %s450 = sphi 0, %s452
    %s453 = sphi 0, %s450
    %s454 = sphi 0, %s453
    %s470 = sphi 0, %s454
  $region4: #{segmentation_network_forward.1} parent=0 // loop_header_branch
    %29 = sbr.rel (%p27) target = $region8
  $region5: #{segmentation_network_forward.1} parent=0 // loop_body
    %s31 = ssub.s32 %s26, 1
    %s32 = ssub.s32 %s26, 2
    %s33 = sadd.s32 %s26, 1
    %s34 = ssub.s32 %s26, %s33
    %p35 = scmp.eq.s32.totalorder %s34, 0
    %s37 = sadd.s32 %s36, 1
    %s38 = scalar_select %p35, %s36, %s37
    %p41 = pneg %p35
    %p42 = scmp.eq.s32.totalorder %s26, 1
    %p43 = por %p41, %p42
    %p44 = scmp.ne.s32.totalorder %s36, %s39
    %p45 = scmp.eq.s32.totalorder %s26, 0
    %p46 = por %p44, %p45
    %p47 = scmp.ne.s32.totalorder %s36, %s39
    %p48 = scmp.eq.s32.totalorder %s31, 1
    %p49 = por %p47, %p48
    %p50 = scmp.ne.s32.totalorder %s39, %s40
    %p51 = scmp.eq.s32.totalorder %s31, 0
    %p52 = por %p50, %p51
    %p53 = scmp.ne.s32.totalorder %s39, %s40
    %p54 = scmp.eq.s32.totalorder %s32, 1
    %p55 = por %p53, %p54
    %p57 = scmp.ne.s32.totalorder %s40, %s56
    %p58 = scmp.eq.s32.totalorder %s32, 0
    %p59 = por %p57, %p58
    %s60 = ssub.s32 %s26, %s33
    %p61 = scmp.eq.s32.totalorder %s60, 0
    %s63 = sadd.s32 %s62, 1
    %s64 = scalar_select %p61, %s62, %s63
    %p67 = pneg %p61
    %p68 = scmp.eq.s32.totalorder %s26, 1
    %p69 = por %p67, %p68
    %p70 = scmp.ne.s32.totalorder %s62, %s65
    %p71 = scmp.eq.s32.totalorder %s26, 0
    %p72 = por %p70, %p71
    %p73 = scmp.ne.s32.totalorder %s62, %s65
    %p74 = scmp.eq.s32.totalorder %s31, 1
    %p75 = por %p73, %p74
    %p76 = scmp.ne.s32.totalorder %s65, %s66
    %p77 = scmp.eq.s32.totalorder %s31, 0
    %p78 = por %p76, %p77
    %p79 = scmp.ne.s32.totalorder %s65, %s66
    %p80 = scmp.eq.s32.totalorder %s32, 1
    %p81 = por %p79, %p80
    %p83 = scmp.ne.s32.totalorder %s66, %s82
    %p84 = scmp.eq.s32.totalorder %s32, 0
    %p85 = por %p83, %p84
    %s87 = sadd.s32 %s86, 1
    %p90 = scmp.eq.s32.totalorder %s26, 1
    %p91 = scmp.ne.s32.totalorder %s86, %s88
    %p92 = scmp.eq.s32.totalorder %s26, 0
    %p93 = por %p91, %p92
    %p94 = scmp.ne.s32.totalorder %s86, %s88
    %p95 = scmp.eq.s32.totalorder %s31, 1
    %p96 = por %p94, %p95
    %p97 = scmp.ne.s32.totalorder %s88, %s89
    %p98 = scmp.eq.s32.totalorder %s31, 0
    %p99 = por %p97, %p98
    %p100 = scmp.ne.s32.totalorder %s88, %s89
    %p101 = scmp.eq.s32.totalorder %s32, 1
    %p102 = por %p100, %p101
    %p104 = scmp.ne.s32.totalorder %s89, %s103
    %p105 = scmp.eq.s32.totalorder %s32, 0
    %p106 = por %p104, %p105
    %s108 = sadd.s32 %s107, 1
    %p111 = scmp.eq.s32.totalorder %s26, 1
    %p112 = scmp.ne.s32.totalorder %s107, %s109
    %p113 = scmp.eq.s32.totalorder %s26, 0
    %p114 = por %p112, %p113
    %p115 = scmp.ne.s32.totalorder %s107, %s109
    %p116 = scmp.eq.s32.totalorder %s31, 1
    %p117 = por %p115, %p116
    %p118 = scmp.ne.s32.totalorder %s109, %s110
    %p119 = scmp.eq.s32.totalorder %s31, 0
    %p120 = por %p118, %p119
    %p121 = scmp.ne.s32.totalorder %s109, %s110
    %p122 = scmp.eq.s32.totalorder %s32, 1
    %p123 = por %p121, %p122
    %p125 = scmp.ne.s32.totalorder %s110, %s124
    %p126 = scmp.eq.s32.totalorder %s32, 0
    %p127 = por %p125, %p126
    %s129 = sadd.s32 %s128, 1
    %p132 = scmp.eq.s32.totalorder %s26, 1
    %p133 = scmp.ne.s32.totalorder %s128, %s130
    %p134 = scmp.eq.s32.totalorder %s26, 0
    %p135 = por %p133, %p134
    %p136 = scmp.ne.s32.totalorder %s128, %s130
    %p137 = scmp.eq.s32.totalorder %s31, 1
    %p138 = por %p136, %p137
    %p139 = scmp.ne.s32.totalorder %s130, %s131
    %p140 = scmp.eq.s32.totalorder %s31, 0
    %p141 = por %p139, %p140
    %p142 = scmp.ne.s32.totalorder %s130, %s131
    %p143 = scmp.eq.s32.totalorder %s32, 1
    %p144 = por %p142, %p143
    %p146 = scmp.ne.s32.totalorder %s131, %s145
    %p147 = scmp.eq.s32.totalorder %s32, 0
    %p148 = por %p146, %p147
    %s150 = sadd.s32 %s149, 1
    %p153 = scmp.eq.s32.totalorder %s26, 1
    %p154 = scmp.ne.s32.totalorder %s149, %s151
    %p155 = scmp.eq.s32.totalorder %s26, 0
    %p156 = por %p154, %p155
    %p157 = scmp.ne.s32.totalorder %s149, %s151
    %p158 = scmp.eq.s32.totalorder %s31, 1
    %p159 = por %p157, %p158
    %p160 = scmp.ne.s32.totalorder %s151, %s152
    %p161 = scmp.eq.s32.totalorder %s31, 0
    %p162 = por %p160, %p161
    %p163 = scmp.ne.s32.totalorder %s151, %s152
    %p164 = scmp.eq.s32.totalorder %s32, 1
    %p165 = por %p163, %p164
    %p167 = scmp.ne.s32.totalorder %s152, %s166
    %p168 = scmp.eq.s32.totalorder %s32, 0
    %p169 = por %p167, %p168
    %s171 = sadd.s32 %s170, 1
    %p174 = scmp.eq.s32.totalorder %s26, 1
    %p175 = scmp.ne.s32.totalorder %s170, %s172
    %p176 = scmp.eq.s32.totalorder %s26, 0
    %p177 = por %p175, %p176
    %p178 = scmp.ne.s32.totalorder %s170, %s172
    %p179 = scmp.eq.s32.totalorder %s31, 1
    %p180 = por %p178, %p179
    %p181 = scmp.ne.s32.totalorder %s172, %s173
    %p182 = scmp.eq.s32.totalorder %s31, 0
    %p183 = por %p181, %p182
    %p184 = scmp.ne.s32.totalorder %s172, %s173
    %p185 = scmp.eq.s32.totalorder %s32, 1
    %p186 = por %p184, %p185
    %p188 = scmp.ne.s32.totalorder %s173, %s187
    %p189 = scmp.eq.s32.totalorder %s32, 0
    %p190 = por %p188, %p189
    %s192 = sadd.s32 %s191, 1
    %p195 = scmp.eq.s32.totalorder %s26, 1
    %p196 = scmp.ne.s32.totalorder %s191, %s193
    %p197 = scmp.eq.s32.totalorder %s26, 0
    %p198 = por %p196, %p197
    %p199 = scmp.ne.s32.totalorder %s191, %s193
    %p200 = scmp.eq.s32.totalorder %s31, 1
    %p201 = por %p199, %p200
    %p202 = scmp.ne.s32.totalorder %s193, %s194
    %p203 = scmp.eq.s32.totalorder %s31, 0
    %p204 = por %p202, %p203
    %p205 = scmp.ne.s32.totalorder %s193, %s194
    %p206 = scmp.eq.s32.totalorder %s32, 1
    %p207 = por %p205, %p206
    %p209 = scmp.ne.s32.totalorder %s194, %s208
    %p210 = scmp.eq.s32.totalorder %s32, 0
    %p211 = por %p209, %p210
    %s213 = sadd.s32 %s212, 1
    %p216 = scmp.eq.s32.totalorder %s26, 1
    %p217 = scmp.ne.s32.totalorder %s212, %s214
    %p218 = scmp.eq.s32.totalorder %s26, 0
    %p219 = por %p217, %p218
    %p220 = scmp.ne.s32.totalorder %s212, %s214
    %p221 = scmp.eq.s32.totalorder %s31, 1
    %p222 = por %p220, %p221
    %p223 = scmp.ne.s32.totalorder %s214, %s215
    %p224 = scmp.eq.s32.totalorder %s31, 0
    %p225 = por %p223, %p224
    %p226 = scmp.ne.s32.totalorder %s214, %s215
    %p227 = scmp.eq.s32.totalorder %s32, 1
    %p228 = por %p226, %p227
    %p230 = scmp.ne.s32.totalorder %s215, %s229
    %p231 = scmp.eq.s32.totalorder %s32, 0
    %p232 = por %p230, %p231
    %s234 = sadd.s32 %s233, 1
    %p237 = scmp.eq.s32.totalorder %s26, 1
    %p238 = scmp.ne.s32.totalorder %s233, %s235
    %p239 = scmp.eq.s32.totalorder %s26, 0
    %p240 = por %p238, %p239
    %p241 = scmp.ne.s32.totalorder %s233, %s235
    %p242 = scmp.eq.s32.totalorder %s31, 1
    %p243 = por %p241, %p242
    %p244 = scmp.ne.s32.totalorder %s235, %s236
    %p245 = scmp.eq.s32.totalorder %s31, 0
    %p246 = por %p244, %p245
    %p247 = scmp.ne.s32.totalorder %s235, %s236
    %p248 = scmp.eq.s32.totalorder %s32, 1
    %p249 = por %p247, %p248
    %p251 = scmp.ne.s32.totalorder %s236, %s250
    %p252 = scmp.eq.s32.totalorder %s32, 0
    %p253 = por %p251, %p252
    %s255 = sadd.s32 %s254, 1
    %p258 = scmp.eq.s32.totalorder %s26, 1
    %p259 = scmp.ne.s32.totalorder %s254, %s256
    %p260 = scmp.eq.s32.totalorder %s26, 0
    %p261 = por %p259, %p260
    %p262 = scmp.ne.s32.totalorder %s254, %s256
    %p263 = scmp.eq.s32.totalorder %s31, 1
    %p264 = por %p262, %p263
    %p265 = scmp.ne.s32.totalorder %s256, %s257
    %p266 = scmp.eq.s32.totalorder %s31, 0
    %p267 = por %p265, %p266
    %p268 = scmp.ne.s32.totalorder %s256, %s257
    %p269 = scmp.eq.s32.totalorder %s32, 1
    %p270 = por %p268, %p269
    %p272 = scmp.ne.s32.totalorder %s257, %s271
    %p273 = scmp.eq.s32.totalorder %s32, 0
    %p274 = por %p272, %p273
    %s276 = sadd.s32 %s275, 1
    %p279 = scmp.eq.s32.totalorder %s26, 1
    %p280 = scmp.ne.s32.totalorder %s275, %s277
    %p281 = scmp.eq.s32.totalorder %s26, 0
    %p282 = por %p280, %p281
    %p283 = scmp.ne.s32.totalorder %s275, %s277
    %p284 = scmp.eq.s32.totalorder %s31, 1
    %p285 = por %p283, %p284
    %p286 = scmp.ne.s32.totalorder %s277, %s278
    %p287 = scmp.eq.s32.totalorder %s31, 0
    %p288 = por %p286, %p287
    %p289 = scmp.ne.s32.totalorder %s277, %s278
    %p290 = scmp.eq.s32.totalorder %s32, 1
    %p291 = por %p289, %p290
    %p293 = scmp.ne.s32.totalorder %s278, %s292
    %p294 = scmp.eq.s32.totalorder %s32, 0
    %p295 = por %p293, %p294
    %s297 = sadd.s32 %s296, 1
    %p300 = scmp.eq.s32.totalorder %s26, 1
    %p301 = scmp.ne.s32.totalorder %s296, %s298
    %p302 = scmp.eq.s32.totalorder %s26, 0
    %p303 = por %p301, %p302
    %p304 = scmp.ne.s32.totalorder %s296, %s298
    %p305 = scmp.eq.s32.totalorder %s31, 1
    %p306 = por %p304, %p305
    %p307 = scmp.ne.s32.totalorder %s298, %s299
    %p308 = scmp.eq.s32.totalorder %s31, 0
    %p309 = por %p307, %p308
    %p310 = scmp.ne.s32.totalorder %s298, %s299
    %p311 = scmp.eq.s32.totalorder %s32, 1
    %p312 = por %p310, %p311
    %p314 = scmp.ne.s32.totalorder %s299, %s313
    %p315 = scmp.eq.s32.totalorder %s32, 0
    %p316 = por %p314, %p315
    %s318 = sadd.s32 %s317, 1
    %p321 = scmp.eq.s32.totalorder %s26, 1
    %p322 = scmp.ne.s32.totalorder %s317, %s319
    %p323 = scmp.eq.s32.totalorder %s26, 0
    %p324 = por %p322, %p323
    %p325 = scmp.ne.s32.totalorder %s317, %s319
    %p326 = scmp.eq.s32.totalorder %s31, 1
    %p327 = por %p325, %p326
    %p328 = scmp.ne.s32.totalorder %s319, %s320
    %p329 = scmp.eq.s32.totalorder %s31, 0
    %p330 = por %p328, %p329
    %p331 = scmp.ne.s32.totalorder %s319, %s320
    %p332 = scmp.eq.s32.totalorder %s32, 1
    %p333 = por %p331, %p332
    %p335 = scmp.ne.s32.totalorder %s320, %s334
    %p336 = scmp.eq.s32.totalorder %s32, 0
    %p337 = por %p335, %p336
    %s339 = sadd.s32 %s338, 1
    %p342 = scmp.eq.s32.totalorder %s26, 1
    %p343 = scmp.ne.s32.totalorder %s338, %s340
    %p344 = scmp.eq.s32.totalorder %s26, 0
    %p345 = por %p343, %p344
    %p346 = scmp.ne.s32.totalorder %s338, %s340
    %p347 = scmp.eq.s32.totalorder %s31, 1
    %p348 = por %p346, %p347
    %p349 = scmp.ne.s32.totalorder %s340, %s341
    %p350 = scmp.eq.s32.totalorder %s31, 0
    %p351 = por %p349, %p350
    %p352 = scmp.ne.s32.totalorder %s340, %s341
    %p353 = scmp.eq.s32.totalorder %s32, 1
    %p354 = por %p352, %p353
    %p356 = scmp.ne.s32.totalorder %s341, %s355
    %p357 = scmp.eq.s32.totalorder %s32, 0
    %p358 = por %p356, %p357
    %s360 = sadd.s32 %s359, 1
    %p363 = scmp.eq.s32.totalorder %s26, 1
    %p364 = scmp.ne.s32.totalorder %s359, %s361
    %p365 = scmp.eq.s32.totalorder %s26, 0
    %p366 = por %p364, %p365
    %p367 = scmp.ne.s32.totalorder %s359, %s361
    %p368 = scmp.eq.s32.totalorder %s31, 1
    %p369 = por %p367, %p368
    %p370 = scmp.ne.s32.totalorder %s361, %s362
    %p371 = scmp.eq.s32.totalorder %s31, 0
    %p372 = por %p370, %p371
    %p373 = scmp.ne.s32.totalorder %s361, %s362
    %p374 = scmp.eq.s32.totalorder %s32, 1
    %p375 = por %p373, %p374
    %p377 = scmp.ne.s32.totalorder %s362, %s376
    %p378 = scmp.eq.s32.totalorder %s32, 0
    %p379 = por %p377, %p378
    %s381 = sadd.s32 %s380, 1
    %p384 = scmp.eq.s32.totalorder %s26, 1
    %p385 = scmp.ne.s32.totalorder %s380, %s382
    %p386 = scmp.eq.s32.totalorder %s26, 0
    %p387 = por %p385, %p386
    %p388 = scmp.ne.s32.totalorder %s380, %s382
    %p389 = scmp.eq.s32.totalorder %s31, 1
    %p390 = por %p388, %p389
    %p391 = scmp.ne.s32.totalorder %s382, %s383
    %p392 = scmp.eq.s32.totalorder %s31, 0
    %p393 = por %p391, %p392
    %p394 = scmp.ne.s32.totalorder %s382, %s383
    %p395 = scmp.eq.s32.totalorder %s32, 1
    %p396 = por %p394, %p395
    %p398 = scmp.ne.s32.totalorder %s383, %s397
    %p399 = scmp.eq.s32.totalorder %s32, 0
    %p400 = por %p398, %p399
    %s402 = sadd.s32 %s401, 1
    %p405 = scmp.eq.s32.totalorder %s26, 1
    %p406 = scmp.ne.s32.totalorder %s401, %s403
    %p407 = scmp.eq.s32.totalorder %s26, 0
    %p408 = por %p406, %p407
    %p409 = scmp.ne.s32.totalorder %s401, %s403
    %p410 = scmp.eq.s32.totalorder %s31, 1
    %p411 = por %p409, %p410
    %p412 = scmp.ne.s32.totalorder %s403, %s404
    %p413 = scmp.eq.s32.totalorder %s31, 0
    %p414 = por %p412, %p413
    %p415 = scmp.ne.s32.totalorder %s403, %s404
    %p416 = scmp.eq.s32.totalorder %s32, 1
    %p417 = por %p415, %p416
    %p419 = scmp.ne.s32.totalorder %s404, %s418
    %p420 = scmp.eq.s32.totalorder %s32, 0
    %p421 = por %p419, %p420
    %s422 = ssub.s32 %s26, %s33
    %p423 = scmp.eq.s32.totalorder %s422, 0
    %s425 = sadd.s32 %s424, 1
    %s426 = scalar_select %p423, %s424, %s425
    %p429 = pneg %p423
    %p430 = scmp.eq.s32.totalorder %s26, 1
    %p431 = por %p429, %p430
    %p432 = scmp.ne.s32.totalorder %s424, %s427
    %p433 = scmp.eq.s32.totalorder %s26, 0
    %p434 = por %p432, %p433
    %p435 = scmp.ne.s32.totalorder %s424, %s427
    %p436 = scmp.eq.s32.totalorder %s31, 1
    %p437 = por %p435, %p436
    %p438 = scmp.ne.s32.totalorder %s427, %s428
    %p439 = scmp.eq.s32.totalorder %s31, 0
    %p440 = por %p438, %p439
    %p441 = scmp.ne.s32.totalorder %s427, %s428
    %p442 = scmp.eq.s32.totalorder %s32, 1
    %p443 = por %p441, %p442
    %p445 = scmp.ne.s32.totalorder %s428, %s444
    %p446 = scmp.eq.s32.totalorder %s32, 0
    %p447 = por %p445, %p446
    %s448 = ssub.s32 %s26, %s33
    %p449 = scmp.eq.s32.totalorder %s448, 0
    %s451 = sadd.s32 %s450, 1
    %s452 = scalar_select %p449, %s450, %s451
    %p455 = pneg %p449
    %p456 = scmp.eq.s32.totalorder %s26, 1
    %p457 = por %p455, %p456
    %p458 = scmp.ne.s32.totalorder %s450, %s453
    %p459 = scmp.eq.s32.totalorder %s26, 0
    %p460 = por %p458, %p459
    %p461 = scmp.ne.s32.totalorder %s450, %s453
    %p462 = scmp.eq.s32.totalorder %s31, 1
    %p463 = por %p461, %p462
    %p464 = scmp.ne.s32.totalorder %s453, %s454
    %p465 = scmp.eq.s32.totalorder %s31, 0
    %p466 = por %p464, %p465
    %p467 = scmp.ne.s32.totalorder %s453, %s454
    %p468 = scmp.eq.s32.totalorder %s32, 1
    %p469 = por %p467, %p468
    %p471 = scmp.ne.s32.totalorder %s454, %s470
    %p472 = scmp.eq.s32.totalorder %s32, 0
    %p473 = por %p471, %p472
    %p474 = scmp.le.s32.totalorder 1, %s26
    %p475 = scmp.lt.s32.totalorder %s26, 3
    %p476 = pnand %p474, %p475
    %p477 = pneg %p476
    // Predicated region
    $region9: #{segmentation_network_forward.1} parent=5 // pred_check
      _
    $region10: #{segmentation_network_forward.1} parent=5 // pred_check_branch
      %479 = sbr.rel (%p476) target = $region12
    $region11: #{segmentation_network_forward.1} parent=5 // pred_region
      %s480 = ssub.s32 %s26, 1
      // Predicated region
      $region13: #{segmentation_network_forward.1} parent=11 // pred_check
        %p481 = pneg %p99
      $region14: #{segmentation_network_forward.1} parent=11 // pred_check_branch
        %483 = sbr.rel (%p481) target = $region16
      $region15: #{segmentation_network_forward.1} parent=11 // pred_region
        _
      $region16: #{segmentation_network_forward.1} parent=11 // pred_fallthru
        _
      // Predicated region
      $region17: #{segmentation_network_forward.1} parent=11 // pred_check
        %p484 = pneg %p120
      $region18: #{segmentation_network_forward.1} parent=11 // pred_check_branch
        %486 = sbr.rel (%p484) target = $region20
      $region19: #{segmentation_network_forward.1} parent=11 // pred_region
        _
      $region20: #{segmentation_network_forward.1} parent=11 // pred_fallthru
        _
      // Predicated region
      $region21: #{segmentation_network_forward.1} parent=11 // pred_check
        %p487 = pneg %p141
      $region22: #{segmentation_network_forward.1} parent=11 // pred_check_branch
        %489 = sbr.rel (%p487) target = $region24
      $region23: #{segmentation_network_forward.1} parent=11 // pred_region
        _
      $region24: #{segmentation_network_forward.1} parent=11 // pred_fallthru
        _
      // Predicated region
      $region25: #{segmentation_network_forward.1} parent=11 // pred_check
        %p490 = pneg %p162
      $region26: #{segmentation_network_forward.1} parent=11 // pred_check_branch
        %492 = sbr.rel (%p490) target = $region28
      $region27: #{segmentation_network_forward.1} parent=11 // pred_region
        _
      $region28: #{segmentation_network_forward.1} parent=11 // pred_fallthru
        _
      // Predicated region
      $region29: #{segmentation_network_forward.1} parent=11 // pred_check
        %p493 = pneg %p183
      $region30: #{segmentation_network_forward.1} parent=11 // pred_check_branch
        %495 = sbr.rel (%p493) target = $region32
      $region31: #{segmentation_network_forward.1} parent=11 // pred_region
        _
      $region32: #{segmentation_network_forward.1} parent=11 // pred_fallthru
        _
      // Predicated region
      $region33: #{segmentation_network_forward.1} parent=11 // pred_check
        %p496 = pneg %p204
      $region34: #{segmentation_network_forward.1} parent=11 // pred_check_branch
        %498 = sbr.rel (%p496) target = $region36
      $region35: #{segmentation_network_forward.1} parent=11 // pred_region
        _
      $region36: #{segmentation_network_forward.1} parent=11 // pred_fallthru
        _
      // Predicated region
      $region37: #{segmentation_network_forward.1} parent=11 // pred_check
        %p499 = pneg %p225
      $region38: #{segmentation_network_forward.1} parent=11 // pred_check_branch
        %501 = sbr.rel (%p499) target = $region40
      $region39: #{segmentation_network_forward.1} parent=11 // pred_region
        _
      $region40: #{segmentation_network_forward.1} parent=11 // pred_fallthru
        _
      // Predicated region
      $region41: #{segmentation_network_forward.1} parent=11 // pred_check
        %p502 = pneg %p246
      $region42: #{segmentation_network_forward.1} parent=11 // pred_check_branch
        %504 = sbr.rel (%p502) target = $region44
      $region43: #{segmentation_network_forward.1} parent=11 // pred_region
        _
      $region44: #{segmentation_network_forward.1} parent=11 // pred_fallthru
        _
      // Predicated region
      $region45: #{segmentation_network_forward.1} parent=11 // pred_check
        %p505 = pneg %p267
      $region46: #{segmentation_network_forward.1} parent=11 // pred_check_branch
        %507 = sbr.rel (%p505) target = $region48
      $region47: #{segmentation_network_forward.1} parent=11 // pred_region
        _
      $region48: #{segmentation_network_forward.1} parent=11 // pred_fallthru
        _
      // Predicated region
      $region49: #{segmentation_network_forward.1} parent=11 // pred_check
        %p508 = pneg %p288
      $region50: #{segmentation_network_forward.1} parent=11 // pred_check_branch
        %510 = sbr.rel (%p508) target = $region52
      $region51: #{segmentation_network_forward.1} parent=11 // pred_region
        _
      $region52: #{segmentation_network_forward.1} parent=11 // pred_fallthru
        _
      // Predicated region
      $region53: #{segmentation_network_forward.1} parent=11 // pred_check
        %p511 = pneg %p309
      $region54: #{segmentation_network_forward.1} parent=11 // pred_check_branch
        %513 = sbr.rel (%p511) target = $region56
      $region55: #{segmentation_network_forward.1} parent=11 // pred_region
        _
      $region56: #{segmentation_network_forward.1} parent=11 // pred_fallthru
        _
      // Predicated region
      $region57: #{segmentation_network_forward.1} parent=11 // pred_check
        %p514 = pneg %p330
      $region58: #{segmentation_network_forward.1} parent=11 // pred_check_branch
        %516 = sbr.rel (%p514) target = $region60
      $region59: #{segmentation_network_forward.1} parent=11 // pred_region
        _
      $region60: #{segmentation_network_forward.1} parent=11 // pred_fallthru
        _
      // Predicated region
      $region61: #{segmentation_network_forward.1} parent=11 // pred_check
        %p517 = pneg %p351
      $region62: #{segmentation_network_forward.1} parent=11 // pred_check_branch
        %519 = sbr.rel (%p517) target = $region64
      $region63: #{segmentation_network_forward.1} parent=11 // pred_region
        _
      $region64: #{segmentation_network_forward.1} parent=11 // pred_fallthru
        _
      // Predicated region
      $region65: #{segmentation_network_forward.1} parent=11 // pred_check
        %p520 = pneg %p372
      $region66: #{segmentation_network_forward.1} parent=11 // pred_check_branch
        %522 = sbr.rel (%p520) target = $region68
      $region67: #{segmentation_network_forward.1} parent=11 // pred_region
        _
      $region68: #{segmentation_network_forward.1} parent=11 // pred_fallthru
        _
      // Predicated region
      $region69: #{segmentation_network_forward.1} parent=11 // pred_check
        %p523 = pneg %p393
      $region70: #{segmentation_network_forward.1} parent=11 // pred_check_branch
        %525 = sbr.rel (%p523) target = $region72
      $region71: #{segmentation_network_forward.1} parent=11 // pred_region
        _
      $region72: #{segmentation_network_forward.1} parent=11 // pred_fallthru
        _
      // Predicated region
      $region73: #{segmentation_network_forward.1} parent=11 // pred_check
        %p526 = pneg %p414
      $region74: #{segmentation_network_forward.1} parent=11 // pred_check_branch
        %528 = sbr.rel (%p526) target = $region76
      $region75: #{segmentation_network_forward.1} parent=11 // pred_region
        _
      $region76: #{segmentation_network_forward.1} parent=11 // pred_fallthru
        _
    $region12: #{segmentation_network_forward.1} parent=5 // pred_fallthru
      _
    %p529 = scmp.lt.s32.totalorder %s26, 2
    // Predicated region
    $region77: #{segmentation_network_forward.1} parent=5 // pred_check
      %p530 = pneg %p529
    $region78: #{segmentation_network_forward.1} parent=5 // pred_check_branch
      %532 = sbr.rel (%p530) target = $region80
    $region79: #{segmentation_network_forward.1} parent=5 // pred_region
      // Predicated region
      $region81: #{segmentation_network_forward.1} parent=79 // pred_check
        %p533 = pneg %p46
      $region82: #{segmentation_network_forward.1} parent=79 // pred_check_branch
        %535 = sbr.rel (%p533) target = $region84
      $region83: #{segmentation_network_forward.1} parent=79 // pred_region
        %p536 = scmp.lt.s32.totalorder %s26, 1
        %s537 = scalar_select %p536, %s26, 1
        %s538 = smul.addr %s537, 2
        %s539 = smul.addr %s538, 8
        %s540 = scalar_lea.vmem %s0, %s539
      $region84: #{segmentation_network_forward.1} parent=79 // pred_fallthru
        _
      // Predicated region
      $region85: #{segmentation_network_forward.1} parent=79 // pred_check
        %p541 = pneg %p72
      $region86: #{segmentation_network_forward.1} parent=79 // pred_check_branch
        %543 = sbr.rel (%p541) target = $region88
      $region87: #{segmentation_network_forward.1} parent=79 // pred_region
        %p544 = scmp.lt.s32.totalorder %s26, 1
        %s545 = scalar_select %p544, %s26, 1
        %s546 = smul.addr %s545, 2
        %s547 = scalar_lea.vmem %s1, %s546
      $region88: #{segmentation_network_forward.1} parent=79 // pred_fallthru
        _
    $region80: #{segmentation_network_forward.1} parent=5 // pred_fallthru
      _
    %p548 = scmp.le.s32.totalorder 1, %s26
    %p549 = scmp.lt.s32.totalorder %s26, 3
    %p550 = pnand %p548, %p549
    %p551 = pneg %p550
    // Predicated region
    $region89: #{segmentation_network_forward.1} parent=5 // pred_check
      _
    $region90: #{segmentation_network_forward.1} parent=5 // pred_check_branch
      %553 = sbr.rel (%p550) target = $region92
    $region91: #{segmentation_network_forward.1} parent=5 // pred_region
      %s554 = ssub.s32 %s26, 1
      %p555 = scmp.lt.s32.totalorder %s31, 1
      %s556 = scalar_select %p555, %s31, 1
      %s557 = smul.addr %s556, 2
      %s558 = smul.addr %s557, 8
      %s559 = scalar_lea.vmem %s0, %s558
      %p560 = pneg %p52
      %p561 = pneg %p49
      %p562 = scmp.lt.s32.totalorder %s31, 1
      %s563 = scalar_select %p562, %s31, 1
      %s564 = smul.addr %s563, 2
      %s565 = scalar_lea.vmem %s1, %s564
      %p566 = pneg %p78
      %p567 = pneg %p75
      %p568 = pneg %p99
      %p569 = pneg %p96
      %p570 = pneg %p120
      %p571 = pneg %p117
      %p572 = pneg %p141
      %p573 = pneg %p138
      %p574 = pneg %p162
      %p575 = pneg %p159
      %p576 = pneg %p183
      %p577 = pneg %p180
      %p578 = pneg %p204
      %p579 = pneg %p201
      %p580 = pneg %p225
      %p581 = pneg %p222
      %p582 = pneg %p246
      %p583 = pneg %p243
      %p584 = pneg %p267
      %p585 = pneg %p264
      %p586 = pneg %p288
      %p587 = pneg %p285
      %p588 = pneg %p309
      %p589 = pneg %p306
      %p590 = pneg %p330
      %p591 = pneg %p327
      %p592 = pneg %p351
      %p593 = pneg %p348
      %p594 = pneg %p372
      %p595 = pneg %p369
      %p596 = pneg %p393
      %p597 = pneg %p390
      %p598 = pneg %p414
      %p599 = pneg %p411
      %p600 = pneg %p440
      %p601 = pneg %p437
      %p602 = scmp.lt.s32.totalorder %s31, 1
      %s603 = scalar_select %p602, %s31, 1
      %s604 = smul.addr %s603, 2
      %s605 = smul.addr %s604, 4
      %s606 = scalar_lea.vmem %s18, %s605
      %p607 = pneg %p466
      %p608 = pneg %p463
      %p609 = scmp.lt.s32.totalorder %s31, 1
      %s610 = scalar_select %p609, %s31, 1
      %s611 = scalar_lea.vmem %s19, %s610
      %p612 = scmp.lt.s32.totalorder %s31, 1
      %s613 = scalar_select %p612, %s31, 1
      %s614 = smul.addr %s613, 2
      %s615 = smul.addr %s614, 8
      %s616 = scalar_lea.vmem %s0, %s615
      %p617 = scmp.lt.s32.totalorder %s31, 1
      %s618 = scalar_select %p617, %s31, 1
      %s619 = smul.addr %s618, 2
      %s620 = scalar_lea.vmem %s1, %s619
      %p621 = scmp.lt.s32.totalorder %s31, 1
      %s622 = scalar_select %p621, %s31, 1
      %s623 = smul.addr %s622, 2
      %s624 = smul.addr %s623, 4
      %s625 = scalar_lea.vmem %s18, %s624
      %p626 = scmp.lt.s32.totalorder %s31, 1
      %s627 = scalar_select %p626, %s31, 1
      %s628 = scalar_lea.vmem %s19, %s627
      %v629 = vlaneseq
      %v630 = vand.u32 %v629, 127
      %v631 = vadd.s32 %v630, 128
      %v632 = vand.u32 %v630, 15
      %v633 = vand.u32 %v631, 15
      %v634 = vshra.s32 %v630, 4
      %v635 = vshra.s32 %v631, 4
      %vm636 = vcmp.ge.s32.totalorder %v634, 1
      %vm637 = vcmp.ge.s32.totalorder %v635, 1
      %vm638 = vcmp.ge.s32.totalorder %v632, 1
      %vm639 = vcmp.ge.s32.totalorder %v633, 1
      %vm640 = vmand %vm636, %vm638
      %vm641 = vmand %vm637, %vm639
      %vm642 = vcmp.le.s32.totalorder %v632, 14
      %vm643 = vcmp.le.s32.totalorder %v633, 14
      %vm644 = vmand %vm636, %vm642
      %vm645 = vmand %vm637, %vm643
      %vm646 = vcmp.le.s32.totalorder %v634, 14
      %vm647 = vcmp.le.s32.totalorder %v635, 14
      %vm648 = vmand %vm646, %vm638
      %vm649 = vmand %vm647, %vm639
      %vm650 = vmand %vm646, %vm642
      %vm651 = vmand %vm647, %vm643
      %v652 = vand.u32 %v630, 7
      %v653 = vshra.s32 %v630, 3
      %vm654 = vcmp.ge.s32.totalorder %v653, 1
      %vm655 = vcmp.ge.s32.totalorder %v652, 1
      %vm656 = vmand %vm654, %vm655
      %vm657 = vcmp.le.s32.totalorder %v652, 6
      %vm658 = vmand %vm654, %vm657
      %vm659 = vcmp.le.s32.totalorder %v653, 6
      %vm660 = vmand %vm659, %vm655
      %vm661 = vmand %vm659, %vm657
      %v662 = vand.u32 %v630, 3
      %v663 = vshra.s32 %v630, 2
      %vm664 = vcmp.ge.s32.totalorder %v663, 1
      %vm665 = vcmp.ge.s32.totalorder %v662, 1
      %vm666 = vmand %vm664, %vm665
      %vm667 = vcmp.le.s32.totalorder %v662, 2
      %vm668 = vmand %vm664, %vm667
      %vm669 = vcmp.le.s32.totalorder %v663, 2
      %vm670 = vmand %vm669, %vm665
      %vm671 = vmand %vm669, %vm667
      %v672 = vld [vmem:[%s616] sm:$0xff]
      %v673 = vld [vmem:[%s616 + $0x8] sm:$0xff]
      %674 = vrot.lane.b32.xlu0 %v672, 17
      %v675 = vpop.permute.xlu0 %674
      %676 = vrot.lane.b32.xlu0 %v673, 17
      %v677 = vpop.permute.xlu0 %676
      %vm678 = vcmp.lt.s32.totalorder %v630, 17
      %v679 = vsel %vm678, %v675, %v677
      %v680 = vsel %vm678, %v677, %v675
      %v681 = vsel %vm640, 1, 0
      %v682 = vsel %vm641, 1, 0
      %vm683 = vcmp.eq.s32.totalorder %v681, 1
      %vm684 = vcmp.eq.s32.totalorder %v682, 1
      %v685 = vsel %vm683, %v680, 0.0
      %v686 = vsel %vm684, %v679, 0.0
      %687 = vrot.lane.b32.xlu0 %v672, 16
      %v688 = vpop.permute.xlu0 %687
      %689 = vrot.lane.b32.xlu0 %v673, 16
      %v690 = vpop.permute.xlu0 %689
      %vm691 = vcmp.lt.s32.totalorder %v630, 16
      %v692 = vsel %vm691, %v688, %v690
      %v693 = vsel %vm691, %v690, %v688
      %v694 = vsel %vm636, 1, 0
      %v695 = vsel %vm637, 1, 0
      %vm696 = vcmp.eq.s32.totalorder %v694, 1
      %vm697 = vcmp.eq.s32.totalorder %v695, 1
      %v698 = vsel %vm696, %v693, 0.0
      %v699 = vsel %vm697, %v692, 0.0
      %700 = vrot.lane.b32.xlu0 %v672, 15
      %v701 = vpop.permute.xlu0 %700
      %702 = vrot.lane.b32.xlu0 %v673, 15
      %v703 = vpop.permute.xlu0 %702
      %vm704 = vcmp.lt.s32.totalorder %v630, 15
      %v705 = vsel %vm704, %v701, %v703
      %v706 = vsel %vm704, %v703, %v701
      %v707 = vsel %vm644, 1, 0
      %v708 = vsel %vm645, 1, 0
      %vm709 = vcmp.eq.s32.totalorder %v707, 1
      %vm710 = vcmp.eq.s32.totalorder %v708, 1
      %v711 = vsel %vm709, %v706, 0.0
      %v712 = vsel %vm710, %v705, 0.0
      %713 = vrot.lane.b32.xlu0 %v672, 1
      %v714 = vpop.permute.xlu0 %713
      %715 = vrot.lane.b32.xlu0 %v673, 1
      %v716 = vpop.permute.xlu0 %715
      %vm717 = vcmp.lt.s32.totalorder %v630, 1
      %v718 = vsel %vm717, %v714, %v716
      %v719 = vsel %vm717, %v716, %v714
      %v720 = vsel %vm638, 1, 0
      %v721 = vsel %vm639, 1, 0
      %vm722 = vcmp.eq.s32.totalorder %v720, 1
      %vm723 = vcmp.eq.s32.totalorder %v721, 1
      %v724 = vsel %vm722, %v719, 0.0
      %v725 = vsel %vm723, %v718, 0.0
      %726 = vrot.lane.b32.xlu0 %v672, 127
      %v727 = vpop.permute.xlu0 %726
      %728 = vrot.lane.b32.xlu0 %v673, 127
      %v729 = vpop.permute.xlu0 %728
      %vm730 = vcmp.lt.s32.totalorder %v630, 127
      %v731 = vsel %vm730, %v727, %v729
      %v732 = vsel %vm730, %v729, %v727
      %v733 = vsel %vm642, 1, 0
      %v734 = vsel %vm643, 1, 0
      %vm735 = vcmp.eq.s32.totalorder %v733, 1
      %vm736 = vcmp.eq.s32.totalorder %v734, 1
      %v737 = vsel %vm735, %v731, 0.0
      %v738 = vsel %vm736, %v732, 0.0
      %739 = vrot.lane.b32.xlu0 %v672, 113
      %v740 = vpop.permute.xlu0 %739
      %741 = vrot.lane.b32.xlu0 %v673, 113
      %v742 = vpop.permute.xlu0 %741
      %vm743 = vcmp.lt.s32.totalorder %v630, 113
      %v744 = vsel %vm743, %v740, %v742
      %v745 = vsel %vm743, %v742, %v740
      %v746 = vsel %vm648, 1, 0
      %v747 = vsel %vm649, 1, 0
      %vm748 = vcmp.eq.s32.totalorder %v746, 1
      %vm749 = vcmp.eq.s32.totalorder %v747, 1
      %v750 = vsel %vm748, %v744, 0.0
      %v751 = vsel %vm749, %v745, 0.0
      %752 = vrot.lane.b32.xlu0 %v672, 112
      %v753 = vpop.permute.xlu0 %752
      %754 = vrot.lane.b32.xlu0 %v673, 112
      %v755 = vpop.permute.xlu0 %754
      %vm756 = vcmp.lt.s32.totalorder %v630, 112
      %v757 = vsel %vm756, %v753, %v755
      %v758 = vsel %vm756, %v755, %v753
      %v759 = vsel %vm646, 1, 0
      %v760 = vsel %vm647, 1, 0
      %vm761 = vcmp.eq.s32.totalorder %v759, 1
      %vm762 = vcmp.eq.s32.totalorder %v760, 1
      %v763 = vsel %vm761, %v757, 0.0
      %v764 = vsel %vm762, %v758, 0.0
      %765 = vrot.lane.b32.xlu0 %v672, 111
      %v766 = vpop.permute.xlu0 %765
      %767 = vrot.lane.b32.xlu0 %v673, 111
      %v768 = vpop.permute.xlu0 %767
      %vm769 = vcmp.lt.s32.totalorder %v630, 111
      %v770 = vsel %vm769, %v766, %v768
      %v771 = vsel %vm769, %v768, %v766
      %v772 = vsel %vm650, 1, 0
      %v773 = vsel %vm651, 1, 0
      %vm774 = vcmp.eq.s32.totalorder %v772, 1
      %vm775 = vcmp.eq.s32.totalorder %v773, 1
      %v776 = vsel %vm774, %v770, 0.0
      %v777 = vsel %vm775, %v771, 0.0
      %v778 = vld [vmem:[%s2] sm:$0xff]
      %v779 = vld [vmem:[%s3] sm:$0xff]
      %781 = vset.pattern.permute.xlu0 0
      %782 = vperm.xlu0 %781, %v779
      %v783 = vpop.permute.xlu0 %782
      %vm785 = vcmask 588800
      %v787 = vsel %vm785, %v778, 0
      %789 = vmatprep.subr.mxu0 %v686
      %790 = vmatpush1.msra.mxu0 %v685
      %791 = vmatprep.subr.mxu0 %v699
      %792 = vmatpush1.msra.mxu0 %v698
      %793 = vmatprep.subr.mxu0 %v712
      %794 = vmatpush1.msra.mxu0 %v711
      %795 = vmatprep.subr.mxu0 %v725
      %796 = vmatpush1.msra.mxu0 %v724
      %797 = vmatprep.subr.mxu0 %v673
      %798 = vmatpush1.msra.mxu0 %v672
      %799 = vmatprep.subr.mxu0 %v738
      %800 = vmatpush1.msra.mxu0 %v737
      %801 = vmatprep.subr.mxu0 %v751
      %802 = vmatpush1.msra.mxu0 %v750
      %803 = vmatprep.subr.mxu0 %v764
      %804 = vmatpush1.msra.mxu0 %v763
      %805 = vmatprep.subr.mxu0 %v777
      %806 = vmatpush1.msra.mxu0 %v776
      %807 = vmatprep.subr.mxu0 0.0
      %808 = vmatpush1.msra.mxu0 0.0
      %809 = vmatprep.subr.mxu0 0.0
      %810 = vmatpush1.msra.mxu0 0.0
      %811 = vmatprep.subr.mxu0 0.0
      %812 = vmatpush1.msra.mxu0 0.0
      %813 = vmatprep.subr.mxu0 0.0
      %814 = vmatpush1.msra.mxu0 0.0
      %815 = vmatprep.subr.mxu0 0.0
      %816 = vmatpush1.msra.mxu0 0.0
      %817 = vmatprep.subr.mxu0 0.0
      %818 = vmatpush1.msra.mxu0 0.0
      %819 = vmatprep.subr.mxu0 0.0
      %820 = vmatpush1.msra.mxu0 0.0
      %821 = vmatprep.subr.mxu0 0.0
      %822 = vmatpush1.msra.mxu0 0.0
      %823 = vmatprep.subr.mxu0 0.0
      %824 = vmatpush1.msra.mxu0 0.0
      %825 = vmatprep.subr.mxu0 0.0
      %826 = vmatpush1.msra.mxu0 0.0
      %827 = vmatprep.subr.mxu0 0.0
      %828 = vmatpush1.msra.mxu0 0.0
      %829 = vmatprep.subr.mxu0 0.0
      %830 = vmatpush1.msra.mxu0 0.0
      %831 = vmatprep.subr.mxu0 0.0
      %832 = vmatpush1.msra.mxu0 0.0
      %833 = vmatprep.subr.mxu0 0.0
      %834 = vmatpush1.msra.mxu0 0.0
      %835 = vmatprep.subr.mxu0 0.0
      %836 = vmatpush1.msra.mxu0 0.0
      %837 = vmatprep.subr.mxu0 0.0
      %838 = vmatpush1.msra.mxu0 0.0
      %839 = vmatprep.subr.mxu0 0.0
      %840 = vmatpush1.msra.mxu0 0.0
      %841 = vmatprep.subr.mxu0 0.0
      %842 = vmatpush1.msra.mxu0 0.0
      %843 = vmatprep.subr.mxu0 0.0
      %844 = vmatpush1.msra.mxu0 0.0
      %845 = vmatprep.subr.mxu0 0.0
      %846 = vmatpush1.msra.mxu0 0.0
      %847 = vmatprep.subr.mxu0 0.0
      %848 = vmatpush1.msra.mxu0 0.0
      %849 = vmatprep.subr.mxu0 0.0
      %850 = vmatpush1.msra.mxu0 0.0
      %851 = vmatprep.subr.mxu0 0.0
      %852 = vmatpush1.msra.mxu0 0.0
      %853 = vmatprep.mubr.f32.mxu0 0.0
      %854 = vmatmul.mubr.f32.gmra.mrb[0].mxu0 %v787
      %v855 = vpop.f32.mrb[0].mxu0
      %v856 = vadd.f32 %v783, %v855
      %v857 = vpop.f32.mrb[0].mxu0
      %v858 = vadd.f32 %v783, %v857
      %859 = vdwg.mxu0
      %v860 = vmax.f32 %v856, 0.0
      %v861 = vmax.f32 %v858, 0.0
      %862 = vrot.lane.b32.xlu0 %v860, 127
      %v863 = vpop.permute.xlu0 %862
      %864 = vrot.lane.b32.xlu0 %v861, 127
      %v865 = vpop.permute.xlu0 %864
      %v866 = vsel %vm730, %v863, %v865
      %v867 = vsel %vm730, %v865, %v863
      %v868 = vmax.f32 %v860, %v866
      %v869 = vmax.f32 %v861, %v867
      %870 = vrot.lane.b32.xlu0 %v860, 112
      %v871 = vpop.permute.xlu0 %870
      %872 = vrot.lane.b32.xlu0 %v861, 112
      %v873 = vpop.permute.xlu0 %872
      %v874 = vsel %vm756, %v871, %v873
      %v875 = vsel %vm756, %v873, %v871
      %876 = vrot.lane.b32.xlu0 %v860, 111
      %v877 = vpop.permute.xlu0 %876
      %878 = vrot.lane.b32.xlu0 %v861, 111
      %v879 = vpop.permute.xlu0 %878
      %v880 = vsel %vm769, %v877, %v879
      %v881 = vsel %vm769, %v879, %v877
      %v882 = vmax.f32 %v874, %v880
      %v883 = vmax.f32 %v875, %v881
      %v884 = vmax.f32 %v868, %v882
      %v885 = vmax.f32 %v869, %v883
      %v886 = vld [vmem:[%s14] sm:$0xff]
      %v887 = vld [vmem:[%s14 + $0x8] sm:$0xff]
      %v888 = vld [vmem:[%s14 + $0x10] sm:$0xff]
      %v889 = vld [vmem:[%s14 + $0x18] sm:$0xff]
      %v890 = vld [vmem:[%s14 + $0x20] sm:$0xff]
      %v891 = vld [vmem:[%s14 + $0x28] sm:$0xff]
      %v892 = vld [vmem:[%s14 + $0x30] sm:$0xff]
      %v893 = vld [vmem:[%s14 + $0x38] sm:$0xff]
      %v894 = vld [vmem:[%s14 + $0x40] sm:$0xff]
      %v895 = vld [vmem:[%s14 + $0x48] sm:$0xff]
      %v896 = vld [vmem:[%s14 + $0x50] sm:$0xff]
      %v897 = vld [vmem:[%s14 + $0x58] sm:$0xff]
      %v898 = vld [vmem:[%s14 + $0x60] sm:$0xff]
      %v899 = vld [vmem:[%s14 + $0x68] sm:$0xff]
      %v900 = vld [vmem:[%s14 + $0x70] sm:$0xff]
      %v901 = vld [vmem:[%s14 + $0x78] sm:$0xff]
      %v902 = vld [vmem:[%s14 + $0x80] sm:$0xff]
      %v903 = vld [vmem:[%s14 + $0x88] sm:$0xff]
      %v904 = vld [vmem:[%s14 + $0x90] sm:$0xff]
      %v905 = vld [vmem:[%s14 + $0x98] sm:$0xff]
      %v906 = vld [vmem:[%s14 + $0xa0] sm:$0xff]
      %v907 = vld [vmem:[%s14 + $0xa8] sm:$0xff]
      %v908 = vld [vmem:[%s14 + $0xb0] sm:$0xff]
      %v909 = vld [vmem:[%s14 + $0xb8] sm:$0xff]
      %v910 = vld [vmem:[%s14 + $0xc0] sm:$0xff]
      %v911 = vld [vmem:[%s14 + $0xc8] sm:$0xff]
      %v912 = vld [vmem:[%s14 + $0xd0] sm:$0xff]
      %v913 = vld [vmem:[%s14 + $0xd8] sm:$0xff]
      %v914 = vld [vmem:[%s14 + $0xe0] sm:$0xff]
      %v915 = vld [vmem:[%s14 + $0xe8] sm:$0xff]
      %v916 = vld [vmem:[%s14 + $0xf0] sm:$0xff]
      %v917 = vld [vmem:[%s14 + $0xf8] sm:$0xff]
      %918 = vmatprep.subr.mxu0 0.0
      %919 = vmatpush1.msra.mxu0 %v886
      %920 = vmatprep.subr.mxu0 0.0
      %921 = vmatpush1.msra.mxu0 %v887
      %922 = vmatprep.subr.mxu0 0.0
      %923 = vmatpush1.msra.mxu0 %v888
      %924 = vmatprep.subr.mxu0 0.0
      %925 = vmatpush1.msra.mxu0 %v889
      %926 = vmatprep.subr.mxu0 0.0
      %927 = vmatpush1.msra.mxu0 %v890
      %928 = vmatprep.subr.mxu0 0.0
      %929 = vmatpush1.msra.mxu0 %v891
      %930 = vmatprep.subr.mxu0 0.0
      %931 = vmatpush1.msra.mxu0 %v892
      %932 = vmatprep.subr.mxu0 0.0
      %933 = vmatpush1.msra.mxu0 %v893
      %934 = vmatprep.subr.mxu0 0.0
      %935 = vmatpush1.msra.mxu0 %v894
      %936 = vmatprep.subr.mxu0 0.0
      %937 = vmatpush1.msra.mxu0 %v895
      %938 = vmatprep.subr.mxu0 0.0
      %939 = vmatpush1.msra.mxu0 %v896
      %940 = vmatprep.subr.mxu0 0.0
      %941 = vmatpush1.msra.mxu0 %v897
      %942 = vmatprep.subr.mxu0 0.0
      %943 = vmatpush1.msra.mxu0 %v898
      %944 = vmatprep.subr.mxu0 0.0
      %945 = vmatpush1.msra.mxu0 %v899
      %946 = vmatprep.subr.mxu0 0.0
      %947 = vmatpush1.msra.mxu0 %v900
      %948 = vmatprep.subr.mxu0 0.0
      %949 = vmatpush1.msra.mxu0 %v901
      %950 = vmatprep.subr.mxu0 0.0
      %951 = vmatpush1.msra.mxu0 %v902
      %952 = vmatprep.subr.mxu0 0.0
      %953 = vmatpush1.msra.mxu0 %v903
      %954 = vmatprep.subr.mxu0 0.0
      %955 = vmatpush1.msra.mxu0 %v904
      %956 = vmatprep.subr.mxu0 0.0
      %957 = vmatpush1.msra.mxu0 %v905
      %958 = vmatprep.subr.mxu0 0.0
      %959 = vmatpush1.msra.mxu0 %v906
      %960 = vmatprep.subr.mxu0 0.0
      %961 = vmatpush1.msra.mxu0 %v907
      %962 = vmatprep.subr.mxu0 0.0
      %963 = vmatpush1.msra.mxu0 %v908
      %964 = vmatprep.subr.mxu0 0.0
      %965 = vmatpush1.msra.mxu0 %v909
      %966 = vmatprep.subr.mxu0 0.0
      %967 = vmatpush1.msra.mxu0 %v910
      %968 = vmatprep.subr.mxu0 0.0
      %969 = vmatpush1.msra.mxu0 %v911
      %970 = vmatprep.subr.mxu0 0.0
      %971 = vmatpush1.msra.mxu0 %v912
      %972 = vmatprep.subr.mxu0 0.0
      %973 = vmatpush1.msra.mxu0 %v913
      %974 = vmatprep.subr.mxu0 0.0
      %975 = vmatpush1.msra.mxu0 %v914
      %976 = vmatprep.subr.mxu0 0.0
      %977 = vmatpush1.msra.mxu0 %v915
      %978 = vmatprep.subr.mxu0 0.0
      %979 = vmatpush1.msra.mxu0 %v916
      %980 = vmatprep.subr.mxu0 0.0
      %981 = vmatpush1.msra.mxu0 %v917
      %982 = vmatprep.mubr.f32.mxu0 %v885
      %983 = vmatmul.mubr.f32.gmra.mrb[0].mxu0 %v884
      %v984 = vpop.f32.mrb[0].mxu0
      %v985 = vadd.f32 0.0, %v984
      %v986 = vpop.f32.mrb[0].mxu0
      %987 = vdwg.mxu0
      %989 = vrot.lane.b32.xlu0 %v985, 73
      %v990 = vpop.permute.xlu0 %989
      %992 = vrot.lane.b32.xlu0 %v985, 9
      %v993 = vpop.permute.xlu0 %992
      %vm995 = vcmask 72704
      %v996 = vsel %vm995, %v990, %v993
      %v997 = vsel %vm656, 1, 0
      %vm998 = vcmp.eq.s32.totalorder %v997, 1
      %v999 = vsel %vm998, %v996, 0.0
      %1000 = vrot.lane.b32.xlu0 %v985, 72
      %v1001 = vpop.permute.xlu0 %1000
      %1003 = vrot.lane.b32.xlu0 %v985, 8
      %v1004 = vpop.permute.xlu0 %1003
      %vm1006 = vcmask 64512
      %v1007 = vsel %vm1006, %v1001, %v1004
      %v1008 = vsel %vm654, 1, 0
      %vm1009 = vcmp.eq.s32.totalorder %v1008, 1
      %v1010 = vsel %vm1009, %v1007, 0.0
      %1011 = vrot.lane.b32.xlu0 %v985, 71
      %v1012 = vpop.permute.xlu0 %1011
      %1014 = vrot.lane.b32.xlu0 %v985, 7
      %v1015 = vpop.permute.xlu0 %1014
      %vm1017 = vcmask 56320
      %v1018 = vsel %vm1017, %v1012, %v1015
      %v1019 = vsel %vm658, 1, 0
      %vm1020 = vcmp.eq.s32.totalorder %v1019, 1
      %v1021 = vsel %vm1020, %v1018, 0.0
      %1022 = vrot.lane.b32.xlu0 %v985, 65
      %v1023 = vpop.permute.xlu0 %1022
      %1025 = vrot.lane.b32.xlu0 %v985, 1
      %v1026 = vpop.permute.xlu0 %1025
      %vm1028 = vcmask 7168
      %v1029 = vsel %vm1028, %v1023, %v1026
      %v1030 = vsel %vm655, 1, 0
      %vm1031 = vcmp.eq.s32.totalorder %v1030, 1
      %v1032 = vsel %vm1031, %v1029, 0.0
      %1033 = vrot.lane.b32.xlu0 %v985, 127
      %v1034 = vpop.permute.xlu0 %1033
      %1036 = vrot.lane.b32.xlu0 %v985, 63
      %v1037 = vpop.permute.xlu0 %1036
      %vm1039 = vcmask 515072
      %v1040 = vsel %vm1039, %v1034, %v1037
      %v1041 = vsel %vm657, 1, 0
      %vm1042 = vcmp.eq.s32.totalorder %v1041, 1
      %v1043 = vsel %vm1042, %v1040, 0.0
      %1044 = vrot.lane.b32.xlu0 %v985, 121
      %v1045 = vpop.permute.xlu0 %1044
      %1047 = vrot.lane.b32.xlu0 %v985, 57
      %v1048 = vpop.permute.xlu0 %1047
      %vm1050 = vcmask 465920
      %v1051 = vsel %vm1050, %v1045, %v1048
      %v1052 = vsel %vm660, 1, 0
      %vm1053 = vcmp.eq.s32.totalorder %v1052, 1
      %v1054 = vsel %vm1053, %v1051, 0.0
      %1055 = vrot.lane.b32.xlu0 %v985, 120
      %v1056 = vpop.permute.xlu0 %1055
      %1058 = vrot.lane.b32.xlu0 %v985, 56
      %v1059 = vpop.permute.xlu0 %1058
      %vm1061 = vcmask 457728
      %v1062 = vsel %vm1061, %v1056, %v1059
      %v1063 = vsel %vm659, 1, 0
      %vm1064 = vcmp.eq.s32.totalorder %v1063, 1
      %v1065 = vsel %vm1064, %v1062, 0.0
      %1066 = vrot.lane.b32.xlu0 %v985, 119
      %v1067 = vpop.permute.xlu0 %1066
      %1069 = vrot.lane.b32.xlu0 %v985, 55
      %v1070 = vpop.permute.xlu0 %1069
      %vm1072 = vcmask 449536
      %v1073 = vsel %vm1072, %v1067, %v1070
      %v1074 = vsel %vm661, 1, 0
      %vm1075 = vcmp.eq.s32.totalorder %v1074, 1
      %v1076 = vsel %vm1075, %v1073, 0.0
      %v1077 = vld [vmem:[%s4] sm:$0xff]
      %v1078 = vld [vmem:[%s4 + $0x8] sm:$0xff]
      %v1079 = vld [vmem:[%s5] sm:$0xff]
      %v1080 = vld [vmem:[%s5 + $0x8] sm:$0xff]
      %1082 = vset.pattern.permute.xlu0 0
      %1083 = vperm.xlu0 %1082, %v1079
      %v1084 = vpop.permute.xlu0 %1083
      %1087 = vset.pattern.permute.xlu0 0
      %1088 = vperm.xlu0 %1087, %v1080
      %v1089 = vpop.permute.xlu0 %1088
      %v1092 = vsel %vm785, %v1077, 0
      %v1095 = vsel %vm785, %v1078, 0
      %1097 = vmatprep.subr.mxu0 0.0
      %1098 = vmatpush1.msra.mxu0 %v999
      %1099 = vmatprep.subr.mxu0 0.0
      %1100 = vmatpush1.msra.mxu0 %v1010
      %1101 = vmatprep.subr.mxu0 0.0
      %1102 = vmatpush1.msra.mxu0 %v1021
      %1103 = vmatprep.subr.mxu0 0.0
      %1104 = vmatpush1.msra.mxu0 %v1032
      %1105 = vmatprep.subr.mxu0 0.0
      %1106 = vmatpush1.msra.mxu0 %v985
      %1107 = vmatprep.subr.mxu0 0.0
      %1108 = vmatpush1.msra.mxu0 %v1043
      %1109 = vmatprep.subr.mxu0 0.0
      %1110 = vmatpush1.msra.mxu0 %v1054
      %1111 = vmatprep.subr.mxu0 0.0
      %1112 = vmatpush1.msra.mxu0 %v1065
      %1113 = vmatprep.subr.mxu0 0.0
      %1114 = vmatpush1.msra.mxu0 %v1076
      %1115 = vmatprep.subr.mxu0 0.0
      %1116 = vmatpush1.msra.mxu0 0.0
      %1117 = vmatprep.subr.mxu0 0.0
      %1118 = vmatpush1.msra.mxu0 0.0
      %1119 = vmatprep.subr.mxu0 0.0
      %1120 = vmatpush1.msra.mxu0 0.0
      %1121 = vmatprep.subr.mxu0 0.0
      %1122 = vmatpush1.msra.mxu0 0.0
      %1123 = vmatprep.subr.mxu0 0.0
      %1124 = vmatpush1.msra.mxu0 0.0
      %1125 = vmatprep.subr.mxu0 0.0
      %1126 = vmatpush1.msra.mxu0 0.0
      %1127 = vmatprep.subr.mxu0 0.0
      %1128 = vmatpush1.msra.mxu0 0.0
      %1129 = vmatprep.subr.mxu0 0.0
      %1130 = vmatpush1.msra.mxu0 0.0
      %1131 = vmatprep.subr.mxu0 0.0
      %1132 = vmatpush1.msra.mxu0 0.0
      %1133 = vmatprep.subr.mxu0 0.0
      %1134 = vmatpush1.msra.mxu0 0.0
      %1135 = vmatprep.subr.mxu0 0.0
      %1136 = vmatpush1.msra.mxu0 0.0
      %1137 = vmatprep.subr.mxu0 0.0
      %1138 = vmatpush1.msra.mxu0 0.0
      %1139 = vmatprep.subr.mxu0 0.0
      %1140 = vmatpush1.msra.mxu0 0.0
      %1141 = vmatprep.subr.mxu0 0.0
      %1142 = vmatpush1.msra.mxu0 0.0
      %1143 = vmatprep.subr.mxu0 0.0
      %1144 = vmatpush1.msra.mxu0 0.0
      %1145 = vmatprep.subr.mxu0 0.0
      %1146 = vmatpush1.msra.mxu0 0.0
      %1147 = vmatprep.subr.mxu0 0.0
      %1148 = vmatpush1.msra.mxu0 0.0
      %1149 = vmatprep.subr.mxu0 0.0
      %1150 = vmatpush1.msra.mxu0 0.0
      %1151 = vmatprep.subr.mxu0 0.0
      %1152 = vmatpush1.msra.mxu0 0.0
      %1153 = vmatprep.subr.mxu0 0.0
      %1154 = vmatpush1.msra.mxu0 0.0
      %1155 = vmatprep.subr.mxu0 0.0
      %1156 = vmatpush1.msra.mxu0 0.0
      %1157 = vmatprep.subr.mxu0 0.0
      %1158 = vmatpush1.msra.mxu0 0.0
      %1159 = vmatprep.subr.mxu0 0.0
      %1160 = vmatpush1.msra.mxu0 0.0
      %1161 = vmatprep.mubr.f32.mxu0 0.0
      %1162 = vmatmul.mubr.f32.gmra.mrb[0].mxu0 %v1092
      %v1163 = vpop.f32.mrb[0].mxu0
      %v1164 = vadd.f32 %v1084, %v1163
      %v1165 = vpop.f32.mrb[0].mxu0
      %1166 = vmatprep.mubr.f32.mxu0 0.0
      %1167 = vmatmul.mubr.f32.gmra.mrb[0].mxu0 %v1095
      %v1168 = vpop.f32.mrb[0].mxu0
      %v1169 = vadd.f32 %v1089, %v1168
      %v1170 = vpop.f32.mrb[0].mxu0
      %1171 = vdwg.mxu0
      %v1172 = vmax.f32 %v1164, 0.0
      %v1173 = vmax.f32 %v1169, 0.0
      %1176 = vrot.lane.b32.xlu0 %v1172, 127
      %v1177 = vpop.permute.xlu0 %1176
      %1178 = vrot.lane.b32.xlu0 %v1173, 127
      %v1179 = vpop.permute.xlu0 %1178
      %1182 = vrot.lane.b32.xlu0 %v1172, 63
      %v1183 = vpop.permute.xlu0 %1182
      %1184 = vrot.lane.b32.xlu0 %v1173, 63
      %v1185 = vpop.permute.xlu0 %1184
      %v1188 = vsel %vm1039, %v1177, %v1183
      %v1189 = vsel %vm1039, %v1179, %v1185
      %v1190 = vmax.f32 %v1172, %v1188
      %v1191 = vmax.f32 %v1173, %v1189
      %1192 = vrot.lane.b32.xlu0 %v1172, 120
      %v1193 = vpop.permute.xlu0 %1192
      %1194 = vrot.lane.b32.xlu0 %v1173, 120
      %v1195 = vpop.permute.xlu0 %1194
      %1198 = vrot.lane.b32.xlu0 %v1172, 56
      %v1199 = vpop.permute.xlu0 %1198
      %1200 = vrot.lane.b32.xlu0 %v1173, 56
      %v1201 = vpop.permute.xlu0 %1200
      %v1204 = vsel %vm1061, %v1193, %v1199
      %v1205 = vsel %vm1061, %v1195, %v1201
      %1206 = vrot.lane.b32.xlu0 %v1172, 119
      %v1207 = vpop.permute.xlu0 %1206
      %1208 = vrot.lane.b32.xlu0 %v1173, 119
      %v1209 = vpop.permute.xlu0 %1208
      %1212 = vrot.lane.b32.xlu0 %v1172, 55
      %v1213 = vpop.permute.xlu0 %1212
      %1214 = vrot.lane.b32.xlu0 %v1173, 55
      %v1215 = vpop.permute.xlu0 %1214
      %v1218 = vsel %vm1072, %v1207, %v1213
      %v1219 = vsel %vm1072, %v1209, %v1215
      %v1220 = vmax.f32 %v1204, %v1218
      %v1221 = vmax.f32 %v1205, %v1219
      %v1222 = vmax.f32 %v1190, %v1220
      %v1223 = vmax.f32 %v1191, %v1221
      %v1224 = vld [vmem:[%s15] sm:$0xff]
      %v1225 = vld [vmem:[%s15 + $0x8] sm:$0xff]
      %v1226 = vld [vmem:[%s15 + $0x10] sm:$0xff]
      %v1227 = vld [vmem:[%s15 + $0x18] sm:$0xff]
      %v1228 = vld [vmem:[%s15 + $0x20] sm:$0xff]
      %v1229 = vld [vmem:[%s15 + $0x28] sm:$0xff]
      %v1230 = vld [vmem:[%s15 + $0x30] sm:$0xff]
      %v1231 = vld [vmem:[%s15 + $0x38] sm:$0xff]
      %vm1232 = vcmask 523264
      %v1234 = vsel %vm1232, %v1222, 0
      %v1237 = vsel %vm1232, %v1223, 0
      %1239 = vmatprep.subr.mxu0 0.0
      %1240 = vmatpush1.msra.mxu0 %v1224
      %1241 = vmatprep.subr.mxu0 0.0
      %1242 = vmatpush1.msra.mxu0 %v1225
      %1243 = vmatprep.subr.mxu0 0.0
      %1244 = vmatpush1.msra.mxu0 %v1226
      %1245 = vmatprep.subr.mxu0 0.0
      %1246 = vmatpush1.msra.mxu0 %v1227
      %1247 = vmatprep.subr.mxu0 0.0
      %1248 = vmatpush1.msra.mxu0 %v1228
      %1249 = vmatprep.subr.mxu0 0.0
      %1250 = vmatpush1.msra.mxu0 %v1229
      %1251 = vmatprep.subr.mxu0 0.0
      %1252 = vmatpush1.msra.mxu0 %v1230
      %1253 = vmatprep.subr.mxu0 0.0
      %1254 = vmatpush1.msra.mxu0 %v1231
      %1255 = vmatprep.subr.mxu0 0.0
      %1256 = vmatpush1.msra.mxu0 0.0
      %1257 = vmatprep.subr.mxu0 0.0
      %1258 = vmatpush1.msra.mxu0 0.0
      %1259 = vmatprep.subr.mxu0 0.0
      %1260 = vmatpush1.msra.mxu0 0.0
      %1261 = vmatprep.subr.mxu0 0.0
      %1262 = vmatpush1.msra.mxu0 0.0
      %1263 = vmatprep.subr.mxu0 0.0
      %1264 = vmatpush1.msra.mxu0 0.0
      %1265 = vmatprep.subr.mxu0 0.0
      %1266 = vmatpush1.msra.mxu0 0.0
      %1267 = vmatprep.subr.mxu0 0.0
      %1268 = vmatpush1.msra.mxu0 0.0
      %1269 = vmatprep.subr.mxu0 0.0
      %1270 = vmatpush1.msra.mxu0 0.0
      %1271 = vmatprep.subr.mxu0 0.0
      %1272 = vmatpush1.msra.mxu0 0.0
      %1273 = vmatprep.subr.mxu0 0.0
      %1274 = vmatpush1.msra.mxu0 0.0
      %1275 = vmatprep.subr.mxu0 0.0
      %1276 = vmatpush1.msra.mxu0 0.0
      %1277 = vmatprep.subr.mxu0 0.0
      %1278 = vmatpush1.msra.mxu0 0.0
      %1279 = vmatprep.subr.mxu0 0.0
      %1280 = vmatpush1.msra.mxu0 0.0
      %1281 = vmatprep.subr.mxu0 0.0
      %1282 = vmatpush1.msra.mxu0 0.0
      %1283 = vmatprep.subr.mxu0 0.0
      %1284 = vmatpush1.msra.mxu0 0.0
      %1285 = vmatprep.subr.mxu0 0.0
      %1286 = vmatpush1.msra.mxu0 0.0
      %1287 = vmatprep.subr.mxu0 0.0
      %1288 = vmatpush1.msra.mxu0 0.0
      %1289 = vmatprep.subr.mxu0 0.0
      %1290 = vmatpush1.msra.mxu0 0.0
      %1291 = vmatprep.subr.mxu0 0.0
      %1292 = vmatpush1.msra.mxu0 0.0
      %1293 = vmatprep.subr.mxu0 0.0
      %1294 = vmatpush1.msra.mxu0 0.0
      %1295 = vmatprep.subr.mxu0 0.0
      %1296 = vmatpush1.msra.mxu0 0.0
      %1297 = vmatprep.subr.mxu0 0.0
      %1298 = vmatpush1.msra.mxu0 0.0
      %1299 = vmatprep.subr.mxu0 0.0
      %1300 = vmatpush1.msra.mxu0 0.0
      %1301 = vmatprep.subr.mxu0 0.0
      %1302 = vmatpush1.msra.mxu0 0.0
      %1303 = vmatprep.mubr.f32.mxu0 0.0
      %1304 = vmatmul.mubr.f32.gmra.mrb[0].mxu0 %v1234
      %v1305 = vpop.f32.mrb[0].mxu0
      %v1306 = vadd.f32 0.0, %v1305
      %v1307 = vpop.f32.mrb[0].mxu0
      %1308 = vmatprep.mubr.f32.mxu0 0.0
      %1309 = vmatmul.mubr.f32.gmra.mrb[0].mxu0 %v1237
      %v1310 = vpop.f32.mrb[0].mxu0
      %v1311 = vadd.f32 0.0, %v1310
      %v1312 = vpop.f32.mrb[0].mxu0
      %1313 = vdwg.mxu0
      %1316 = vrot.lane.b32.xlu0 %v1306, 117
      %v1317 = vpop.permute.xlu0 %1316
      %1318 = vrot.lane.b32.xlu0 %v1311, 117
      %v1319 = vpop.permute.xlu0 %1318
      %1322 = vrot.lane.b32.xlu0 %v1306, 5
      %v1323 = vpop.permute.xlu0 %1322
      %1324 = vrot.lane.b32.xlu0 %v1311, 5
      %v1325 = vpop.permute.xlu0 %1324
      %vm1328 = vcmask 39936
      %v1329 = vsel %vm1328, %v1317, %v1323
      %v1330 = vsel %vm1328, %v1319, %v1325
      %v1331 = vsel %vm666, 1, 0
      %vm1332 = vcmp.eq.s32.totalorder %v1331, 1
      %v1333 = vsel %vm1332, %v1329, 0.0
      %v1334 = vsel %vm1332, %v1330, 0.0
      %1335 = vrot.lane.b32.xlu0 %v1306, 116
      %v1336 = vpop.permute.xlu0 %1335
      %1337 = vrot.lane.b32.xlu0 %v1311, 116
      %v1338 = vpop.permute.xlu0 %1337
      %1341 = vrot.lane.b32.xlu0 %v1306, 4
      %v1342 = vpop.permute.xlu0 %1341
      %1343 = vrot.lane.b32.xlu0 %v1311, 4
      %v1344 = vpop.permute.xlu0 %1343
      %vm1347 = vcmask 31744
      %v1348 = vsel %vm1347, %v1336, %v1342
      %v1349 = vsel %vm1347, %v1338, %v1344
      %v1350 = vsel %vm664, 1, 0
      %vm1351 = vcmp.eq.s32.totalorder %v1350, 1
      %v1352 = vsel %vm1351, %v1348, 0.0
      %v1353 = vsel %vm1351, %v1349, 0.0
      %1354 = vrot.lane.b32.xlu0 %v1306, 115
      %v1355 = vpop.permute.xlu0 %1354
      %1356 = vrot.lane.b32.xlu0 %v1311, 115
      %v1357 = vpop.permute.xlu0 %1356
      %1360 = vrot.lane.b32.xlu0 %v1306, 3
      %v1361 = vpop.permute.xlu0 %1360
      %1362 = vrot.lane.b32.xlu0 %v1311, 3
      %v1363 = vpop.permute.xlu0 %1362
      %vm1366 = vcmask 23552
      %v1367 = vsel %vm1366, %v1355, %v1361
      %v1368 = vsel %vm1366, %v1357, %v1363
      %v1369 = vsel %vm668, 1, 0
      %vm1370 = vcmp.eq.s32.totalorder %v1369, 1
      %v1371 = vsel %vm1370, %v1367, 0.0
      %v1372 = vsel %vm1370, %v1368, 0.0
      %1373 = vrot.lane.b32.xlu0 %v1306, 113
      %v1374 = vpop.permute.xlu0 %1373
      %1375 = vrot.lane.b32.xlu0 %v1311, 113
      %v1376 = vpop.permute.xlu0 %1375
      %1379 = vrot.lane.b32.xlu0 %v1306, 1
      %v1380 = vpop.permute.xlu0 %1379
      %1381 = vrot.lane.b32.xlu0 %v1311, 1
      %v1382 = vpop.permute.xlu0 %1381
      %v1385 = vsel %vm1028, %v1374, %v1380
      %v1386 = vsel %vm1028, %v1376, %v1382
      %v1387 = vsel %vm665, 1, 0
      %vm1388 = vcmp.eq.s32.totalorder %v1387, 1
      %v1389 = vsel %vm1388, %v1385, 0.0
      %v1390 = vsel %vm1388, %v1386, 0.0
      %1391 = vrot.lane.b32.xlu0 %v1306, 127
      %v1392 = vpop.permute.xlu0 %1391
      %1393 = vrot.lane.b32.xlu0 %v1311, 127
      %v1394 = vpop.permute.xlu0 %1393
      %1397 = vrot.lane.b32.xlu0 %v1306, 15
      %v1398 = vpop.permute.xlu0 %1397
      %1399 = vrot.lane.b32.xlu0 %v1311, 15
      %v1400 = vpop.permute.xlu0 %1399
      %vm1403 = vcmask 121856
      %v1404 = vsel %vm1403, %v1392, %v1398
      %v1405 = vsel %vm1403, %v1394, %v1400
      %v1406 = vsel %vm667, 1, 0
      %vm1407 = vcmp.eq.s32.totalorder %v1406, 1
      %v1408 = vsel %vm1407, %v1404, 0.0
      %v1409 = vsel %vm1407, %v1405, 0.0
      %1410 = vrot.lane.b32.xlu0 %v1306, 125
      %v1411 = vpop.permute.xlu0 %1410
      %1412 = vrot.lane.b32.xlu0 %v1311, 125
      %v1413 = vpop.permute.xlu0 %1412
      %1416 = vrot.lane.b32.xlu0 %v1306, 13
      %v1417 = vpop.permute.xlu0 %1416
      %1418 = vrot.lane.b32.xlu0 %v1311, 13
      %v1419 = vpop.permute.xlu0 %1418
      %vm1422 = vcmask 105472
      %v1423 = vsel %vm1422, %v1411, %v1417
      %v1424 = vsel %vm1422, %v1413, %v1419
      %v1425 = vsel %vm670, 1, 0
      %vm1426 = vcmp.eq.s32.totalorder %v1425, 1
      %v1427 = vsel %vm1426, %v1423, 0.0
      %v1428 = vsel %vm1426, %v1424, 0.0
      %1429 = vrot.lane.b32.xlu0 %v1306, 124
      %v1430 = vpop.permute.xlu0 %1429
      %1431 = vrot.lane.b32.xlu0 %v1311, 124
      %v1432 = vpop.permute.xlu0 %1431
      %1435 = vrot.lane.b32.xlu0 %v1306, 12
      %v1436 = vpop.permute.xlu0 %1435
      %1437 = vrot.lane.b32.xlu0 %v1311, 12
      %v1438 = vpop.permute.xlu0 %1437
      %vm1441 = vcmask 97280
      %v1442 = vsel %vm1441, %v1430, %v1436
      %v1443 = vsel %vm1441, %v1432, %v1438
      %v1444 = vsel %vm669, 1, 0
      %vm1445 = vcmp.eq.s32.totalorder %v1444, 1
      %v1446 = vsel %vm1445, %v1442, 0.0
      %v1447 = vsel %vm1445, %v1443, 0.0
      %1448 = vrot.lane.b32.xlu0 %v1306, 123
      %v1449 = vpop.permute.xlu0 %1448
      %1450 = vrot.lane.b32.xlu0 %v1311, 123
      %v1451 = vpop.permute.xlu0 %1450
      %1454 = vrot.lane.b32.xlu0 %v1306, 11
      %v1455 = vpop.permute.xlu0 %1454
      %1456 = vrot.lane.b32.xlu0 %v1311, 11
      %v1457 = vpop.permute.xlu0 %1456
      %vm1460 = vcmask 89088
      %v1461 = vsel %vm1460, %v1449, %v1455
      %v1462 = vsel %vm1460, %v1451, %v1457
      %v1463 = vsel %vm671, 1, 0
      %vm1464 = vcmp.eq.s32.totalorder %v1463, 1
      %v1465 = vsel %vm1464, %v1461, 0.0
      %v1466 = vsel %vm1464, %v1462, 0.0
      %v1467 = vld [vmem:[%s6] sm:$0xff]
      %v1468 = vld [vmem:[%s6 + $0x8] sm:$0xff]
      %v1469 = vld [vmem:[%s6 + $0x10] sm:$0xff]
      %v1470 = vld [vmem:[%s6 + $0x18] sm:$0xff]
      %v1471 = vld [vmem:[%s6 + $0x20] sm:$0xff]
      %v1472 = vld [vmem:[%s6 + $0x28] sm:$0xff]
      %v1473 = vld [vmem:[%s6 + $0x30] sm:$0xff]
      %v1474 = vld [vmem:[%s6 + $0x38] sm:$0xff]
      %v1475 = vld [vmem:[%s7] sm:$0xff]
      %v1476 = vld [vmem:[%s7 + $0x8] sm:$0xff]
      %v1477 = vld [vmem:[%s7 + $0x10] sm:$0xff]
      %v1478 = vld [vmem:[%s7 + $0x18] sm:$0xff]
      %1480 = vset.pattern.permute.xlu0 0
      %1481 = vperm.xlu0 %1480, %v1475
      %v1482 = vpop.permute.xlu0 %1481
      %1485 = vset.pattern.permute.xlu0 0
      %1486 = vperm.xlu0 %1485, %v1476
      %v1487 = vpop.permute.xlu0 %1486
      %1490 = vset.pattern.permute.xlu0 0
      %1491 = vperm.xlu0 %1490, %v1477
      %v1492 = vpop.permute.xlu0 %1491
      %1495 = vset.pattern.permute.xlu0 0
      %1496 = vperm.xlu0 %1495, %v1478
      %v1497 = vpop.permute.xlu0 %1496
      %vm1499 = vcmask 130048
      %v1501 = vsel %vm1499, %v1468, 0
      %v1504 = vsel %vm1499, %v1470, 0
      %v1507 = vsel %vm1499, %v1472, 0
      %v1510 = vsel %vm1499, %v1474, 0
      %1512 = vmatprep.subr.mxu0 0.0
      %1513 = vmatpush1.msra.mxu0 %v1333
      %1514 = vmatprep.subr.mxu0 0.0
      %1515 = vmatpush1.msra.mxu0 %v1334
      %1516 = vmatprep.subr.mxu0 0.0
      %1517 = vmatpush1.msra.mxu0 %v1352
      %1518 = vmatprep.subr.mxu0 0.0
      %1519 = vmatpush1.msra.mxu0 %v1353
      %1520 = vmatprep.subr.mxu0 0.0
      %1521 = vmatpush1.msra.mxu0 %v1371
      %1522 = vmatprep.subr.mxu0 0.0
      %1523 = vmatpush1.msra.mxu0 %v1372
      %1524 = vmatprep.subr.mxu0 0.0
      %1525 = vmatpush1.msra.mxu0 %v1389
      %1526 = vmatprep.subr.mxu0 0.0
      %1527 = vmatpush1.msra.mxu0 %v1390
      %1528 = vmatprep.subr.mxu0 0.0
      %1529 = vmatpush1.msra.mxu0 %v1306
      %1530 = vmatprep.subr.mxu0 0.0
      %1531 = vmatpush1.msra.mxu0 %v1311
      %1532 = vmatprep.subr.mxu0 0.0
      %1533 = vmatpush1.msra.mxu0 %v1408
      %1534 = vmatprep.subr.mxu0 0.0
      %1535 = vmatpush1.msra.mxu0 %v1409
      %1536 = vmatprep.subr.mxu0 0.0
      %1537 = vmatpush1.msra.mxu0 %v1427
      %1538 = vmatprep.subr.mxu0 0.0
      %1539 = vmatpush1.msra.mxu0 %v1428
      %1540 = vmatprep.subr.mxu0 0.0
      %1541 = vmatpush1.msra.mxu0 %v1446
      %1542 = vmatprep.subr.mxu0 0.0
      %1543 = vmatpush1.msra.mxu0 %v1447
      %1544 = vmatprep.subr.mxu0 0.0
      %1545 = vmatpush1.msra.mxu0 %v1465
      %1546 = vmatprep.subr.mxu0 0.0
      %1547 = vmatpush1.msra.mxu0 %v1466
      %1548 = vmatprep.subr.mxu0 0.0
      %1549 = vmatpush1.msra.mxu0 0.0
      %1550 = vmatprep.subr.mxu0 0.0
      %1551 = vmatpush1.msra.mxu0 0.0
      %1552 = vmatprep.subr.mxu0 0.0
      %1553 = vmatpush1.msra.mxu0 0.0
      %1554 = vmatprep.subr.mxu0 0.0
      %1555 = vmatpush1.msra.mxu0 0.0
      %1556 = vmatprep.subr.mxu0 0.0
      %1557 = vmatpush1.msra.mxu0 0.0
      %1558 = vmatprep.subr.mxu0 0.0
      %1559 = vmatpush1.msra.mxu0 0.0
      %1560 = vmatprep.subr.mxu0 0.0
      %1561 = vmatpush1.msra.mxu0 0.0
      %1562 = vmatprep.subr.mxu0 0.0
      %1563 = vmatpush1.msra.mxu0 0.0
      %1564 = vmatprep.subr.mxu0 0.0
      %1565 = vmatpush1.msra.mxu0 0.0
      %1566 = vmatprep.subr.mxu0 0.0
      %1567 = vmatpush1.msra.mxu0 0.0
      %1568 = vmatprep.subr.mxu0 0.0
      %1569 = vmatpush1.msra.mxu0 0.0
      %1570 = vmatprep.subr.mxu0 0.0
      %1571 = vmatpush1.msra.mxu0 0.0
      %1572 = vmatprep.subr.mxu0 0.0
      %1573 = vmatpush1.msra.mxu0 0.0
      %1574 = vmatprep.subr.mxu0 0.0
      %1575 = vmatpush1.msra.mxu0 0.0
      %1576 = vmatprep.mubr.f32.mxu0 %v1501
      %1577 = vmatmul.mubr.f32.gmra.mrb[0].mxu0 %v1467
      %v1578 = vpop.f32.mrb[0].mxu0
      %v1579 = vadd.f32 %v1482, %v1578
      %v1580 = vpop.f32.mrb[0].mxu0
      %1581 = vmatprep.mubr.f32.mxu0 %v1504
      %1582 = vmatmul.mubr.f32.gmra.mrb[0].mxu0 %v1469
      %v1583 = vpop.f32.mrb[0].mxu0
      %v1584 = vadd.f32 %v1487, %v1583
      %v1585 = vpop.f32.mrb[0].mxu0
      %1586 = vmatprep.mubr.f32.mxu0 %v1507
      %1587 = vmatmul.mubr.f32.gmra.mrb[0].mxu0 %v1471
      %v1588 = vpop.f32.mrb[0].mxu0
      %v1589 = vadd.f32 %v1492, %v1588
      %v1590 = vpop.f32.mrb[0].mxu0
      %1591 = vmatprep.mubr.f32.mxu0 %v1510
      %1592 = vmatmul.mubr.f32.gmra.mrb[0].mxu0 %v1473
      %v1593 = vpop.f32.mrb[0].mxu0
      %v1594 = vadd.f32 %v1497, %v1593
      %v1595 = vpop.f32.mrb[0].mxu0
      %1596 = vdwg.mxu0
      %v1597 = vmax.f32 %v1579, 0.0
      %v1598 = vmax.f32 %v1584, 0.0
      %v1599 = vmax.f32 %v1589, 0.0
      %v1600 = vmax.f32 %v1594, 0.0
      %v1601 = vld [vmem:[%s16] sm:$0xff]
      %v1602 = vld [vmem:[%s16 + $0x8] sm:$0xff]
      %v1604 = vsel %vm1499, %v1597, 0
      %v1607 = vsel %vm1499, %v1598, 0
      %v1610 = vsel %vm1499, %v1599, 0
      %v1613 = vsel %vm1499, %v1600, 0
      %1615 = vmatprep.subr.mxu0 0.0
      %1616 = vmatpush1.msra.mxu0 %v1601
      %1617 = vmatprep.subr.mxu0 0.0
      %1618 = vmatpush1.msra.mxu0 %v1602
      %1619 = vmatprep.subr.mxu0 0.0
      %1620 = vmatpush1.msra.mxu0 0.0
      %1621 = vmatprep.subr.mxu0 0.0
      %1622 = vmatpush1.msra.mxu0 0.0
      %1623 = vmatprep.subr.mxu0 0.0
      %1624 = vmatpush1.msra.mxu0 0.0
      %1625 = vmatprep.subr.mxu0 0.0
      %1626 = vmatpush1.msra.mxu0 0.0
      %1627 = vmatprep.subr.mxu0 0.0
      %1628 = vmatpush1.msra.mxu0 0.0
      %1629 = vmatprep.subr.mxu0 0.0
      %1630 = vmatpush1.msra.mxu0 0.0
      %1631 = vmatprep.subr.mxu0 0.0
      %1632 = vmatpush1.msra.mxu0 0.0
      %1633 = vmatprep.subr.mxu0 0.0
      %1634 = vmatpush1.msra.mxu0 0.0
      %1635 = vmatprep.subr.mxu0 0.0
      %1636 = vmatpush1.msra.mxu0 0.0
      %1637 = vmatprep.subr.mxu0 0.0
      %1638 = vmatpush1.msra.mxu0 0.0
      %1639 = vmatprep.subr.mxu0 0.0
      %1640 = vmatpush1.msra.mxu0 0.0
      %1641 = vmatprep.subr.mxu0 0.0
      %1642 = vmatpush1.msra.mxu0 0.0
      %1643 = vmatprep.subr.mxu0 0.0
      %1644 = vmatpush1.msra.mxu0 0.0
      %1645 = vmatprep.subr.mxu0 0.0
      %1646 = vmatpush1.msra.mxu0 0.0
      %1647 = vmatprep.subr.mxu0 0.0
      %1648 = vmatpush1.msra.mxu0 0.0
      %1649 = vmatprep.subr.mxu0 0.0
      %1650 = vmatpush1.msra.mxu0 0.0
      %1651 = vmatprep.subr.mxu0 0.0
      %1652 = vmatpush1.msra.mxu0 0.0
      %1653 = vmatprep.subr.mxu0 0.0
      %1654 = vmatpush1.msra.mxu0 0.0
      %1655 = vmatprep.subr.mxu0 0.0
      %1656 = vmatpush1.msra.mxu0 0.0
      %1657 = vmatprep.subr.mxu0 0.0
      %1658 = vmatpush1.msra.mxu0 0.0
      %1659 = vmatprep.subr.mxu0 0.0
      %1660 = vmatpush1.msra.mxu0 0.0
      %1661 = vmatprep.subr.mxu0 0.0
      %1662 = vmatpush1.msra.mxu0 0.0
      %1663 = vmatprep.subr.mxu0 0.0
      %1664 = vmatpush1.msra.mxu0 0.0
      %1665 = vmatprep.subr.mxu0 0.0
      %1666 = vmatpush1.msra.mxu0 0.0
      %1667 = vmatprep.subr.mxu0 0.0
      %1668 = vmatpush1.msra.mxu0 0.0
      %1669 = vmatprep.subr.mxu0 0.0
      %1670 = vmatpush1.msra.mxu0 0.0
      %1671 = vmatprep.subr.mxu0 0.0
      %1672 = vmatpush1.msra.mxu0 0.0
      %1673 = vmatprep.subr.mxu0 0.0
      %1674 = vmatpush1.msra.mxu0 0.0
      %1675 = vmatprep.subr.mxu0 0.0
      %1676 = vmatpush1.msra.mxu0 0.0
      %1677 = vmatprep.subr.mxu0 0.0
      %1678 = vmatpush1.msra.mxu0 0.0
      %1679 = vmatprep.mubr.f32.mxu0 0.0
      %1680 = vmatmul.mubr.f32.gmra.mrb[0].mxu0 %v1604
      %v1681 = vpop.f32.mrb[0].mxu0
      %v1682 = vadd.f32 0.0, %v1681
      %v1683 = vpop.f32.mrb[0].mxu0
      %1684 = vmatprep.mubr.f32.mxu0 0.0
      %1685 = vmatmul.mubr.f32.gmra.mrb[0].mxu0 %v1607
      %v1686 = vpop.f32.mrb[0].mxu0
      %v1687 = vadd.f32 0.0, %v1686
      %v1688 = vpop.f32.mrb[0].mxu0
      %1689 = vmatprep.mubr.f32.mxu0 0.0
      %1690 = vmatmul.mubr.f32.gmra.mrb[0].mxu0 %v1610
      %v1691 = vpop.f32.mrb[0].mxu0
      %v1692 = vadd.f32 0.0, %v1691
      %v1693 = vpop.f32.mrb[0].mxu0
      %1694 = vmatprep.mubr.f32.mxu0 0.0
      %1695 = vmatmul.mubr.f32.gmra.mrb[0].mxu0 %v1613
      %v1696 = vpop.f32.mrb[0].mxu0
      %v1697 = vadd.f32 0.0, %v1696
      %v1698 = vpop.f32.mrb[0].mxu0
      %1699 = vdwg.mxu0
      %1704 = vrot.lane.b32.xlu0 %v1682, 73
      %v1705 = vpop.permute.xlu0 %1704
      %1706 = vrot.lane.b32.xlu0 %v1687, 73
      %v1707 = vpop.permute.xlu0 %1706
      %1708 = vrot.lane.b32.xlu0 %v1692, 73
      %v1709 = vpop.permute.xlu0 %1708
      %1710 = vrot.lane.b32.xlu0 %v1697, 73
      %v1711 = vpop.permute.xlu0 %1710
      %1712 = vrot.lane.b32.xlu0 %v1172, 73
      %v1713 = vpop.permute.xlu0 %1712
      %1714 = vrot.lane.b32.xlu0 %v1173, 73
      %v1715 = vpop.permute.xlu0 %1714
      %1722 = vrot.lane.b32.xlu0 %v1682, 9
      %v1723 = vpop.permute.xlu0 %1722
      %1724 = vrot.lane.b32.xlu0 %v1687, 9
      %v1725 = vpop.permute.xlu0 %1724
      %1726 = vrot.lane.b32.xlu0 %v1692, 9
      %v1727 = vpop.permute.xlu0 %1726
      %1728 = vrot.lane.b32.xlu0 %v1697, 9
      %v1729 = vpop.permute.xlu0 %1728
      %1730 = vrot.lane.b32.xlu0 %v1172, 9
      %v1731 = vpop.permute.xlu0 %1730
      %1732 = vrot.lane.b32.xlu0 %v1173, 9
      %v1733 = vpop.permute.xlu0 %1732
      %v1740 = vsel %vm995, %v1705, %v1723
      %v1741 = vsel %vm995, %v1707, %v1725
      %v1742 = vsel %vm995, %v1709, %v1727
      %v1743 = vsel %vm995, %v1711, %v1729
      %v1744 = vsel %vm995, %v1713, %v1731
      %v1745 = vsel %vm995, %v1715, %v1733
      %v1746 = vsel %vm998, %v1740, 0.0
      %v1747 = vsel %vm998, %v1741, 0.0
      %v1748 = vsel %vm998, %v1742, 0.0
      %v1749 = vsel %vm998, %v1743, 0.0
      %v1750 = vsel %vm998, %v1744, 0.0
      %v1751 = vsel %vm998, %v1745, 0.0
      %1752 = vrot.lane.b32.xlu0 %v1682, 72
      %v1753 = vpop.permute.xlu0 %1752
      %1754 = vrot.lane.b32.xlu0 %v1687, 72
      %v1755 = vpop.permute.xlu0 %1754
      %1756 = vrot.lane.b32.xlu0 %v1692, 72
      %v1757 = vpop.permute.xlu0 %1756
      %1758 = vrot.lane.b32.xlu0 %v1697, 72
      %v1759 = vpop.permute.xlu0 %1758
      %1760 = vrot.lane.b32.xlu0 %v1172, 72
      %v1761 = vpop.permute.xlu0 %1760
      %1762 = vrot.lane.b32.xlu0 %v1173, 72
      %v1763 = vpop.permute.xlu0 %1762
      %1770 = vrot.lane.b32.xlu0 %v1682, 8
      %v1771 = vpop.permute.xlu0 %1770
      %1772 = vrot.lane.b32.xlu0 %v1687, 8
      %v1773 = vpop.permute.xlu0 %1772
      %1774 = vrot.lane.b32.xlu0 %v1692, 8
      %v1775 = vpop.permute.xlu0 %1774
      %1776 = vrot.lane.b32.xlu0 %v1697, 8
      %v1777 = vpop.permute.xlu0 %1776
      %1778 = vrot.lane.b32.xlu0 %v1172, 8
      %v1779 = vpop.permute.xlu0 %1778
      %1780 = vrot.lane.b32.xlu0 %v1173, 8
      %v1781 = vpop.permute.xlu0 %1780
      %v1788 = vsel %vm1006, %v1753, %v1771
      %v1789 = vsel %vm1006, %v1755, %v1773
      %v1790 = vsel %vm1006, %v1757, %v1775
      %v1791 = vsel %vm1006, %v1759, %v1777
      %v1792 = vsel %vm1006, %v1761, %v1779
      %v1793 = vsel %vm1006, %v1763, %v1781
      %v1794 = vsel %vm1009, %v1788, 0.0
      %v1795 = vsel %vm1009, %v1789, 0.0
      %v1796 = vsel %vm1009, %v1790, 0.0
      %v1797 = vsel %vm1009, %v1791, 0.0
      %v1798 = vsel %vm1009, %v1792, 0.0
      %v1799 = vsel %vm1009, %v1793, 0.0
      %1800 = vrot.lane.b32.xlu0 %v1682, 71
      %v1801 = vpop.permute.xlu0 %1800
      %1802 = vrot.lane.b32.xlu0 %v1687, 71
      %v1803 = vpop.permute.xlu0 %1802
      %1804 = vrot.lane.b32.xlu0 %v1692, 71
      %v1805 = vpop.permute.xlu0 %1804
      %1806 = vrot.lane.b32.xlu0 %v1697, 71
      %v1807 = vpop.permute.xlu0 %1806
      %1808 = vrot.lane.b32.xlu0 %v1172, 71
      %v1809 = vpop.permute.xlu0 %1808
      %1810 = vrot.lane.b32.xlu0 %v1173, 71
      %v1811 = vpop.permute.xlu0 %1810
      %1818 = vrot.lane.b32.xlu0 %v1682, 7
      %v1819 = vpop.permute.xlu0 %1818
      %1820 = vrot.lane.b32.xlu0 %v1687, 7
      %v1821 = vpop.permute.xlu0 %1820
      %1822 = vrot.lane.b32.xlu0 %v1692, 7
      %v1823 = vpop.permute.xlu0 %1822
      %1824 = vrot.lane.b32.xlu0 %v1697, 7
      %v1825 = vpop.permute.xlu0 %1824
      %1826 = vrot.lane.b32.xlu0 %v1172, 7
      %v1827 = vpop.permute.xlu0 %1826
      %1828 = vrot.lane.b32.xlu0 %v1173, 7
      %v1829 = vpop.permute.xlu0 %1828
      %v1836 = vsel %vm1017, %v1801, %v1819
      %v1837 = vsel %vm1017, %v1803, %v1821
      %v1838 = vsel %vm1017, %v1805, %v1823
      %v1839 = vsel %vm1017, %v1807, %v1825
      %v1840 = vsel %vm1017, %v1809, %v1827
      %v1841 = vsel %vm1017, %v1811, %v1829
      %v1842 = vsel %vm1020, %v1836, 0.0
      %v1843 = vsel %vm1020, %v1837, 0.0
      %v1844 = vsel %vm1020, %v1838, 0.0
      %v1845 = vsel %vm1020, %v1839, 0.0
      %v1846 = vsel %vm1020, %v1840, 0.0
      %v1847 = vsel %vm1020, %v1841, 0.0
      %1848 = vrot.lane.b32.xlu0 %v1682, 65
      %v1849 = vpop.permute.xlu0 %1848
      %1850 = vrot.lane.b32.xlu0 %v1687, 65
      %v1851 = vpop.permute.xlu0 %1850
      %1852 = vrot.lane.b32.xlu0 %v1692, 65
      %v1853 = vpop.permute.xlu0 %1852
      %1854 = vrot.lane.b32.xlu0 %v1697, 65
      %v1855 = vpop.permute.xlu0 %1854
      %1856 = vrot.lane.b32.xlu0 %v1172, 65
      %v1857 = vpop.permute.xlu0 %1856
      %1858 = vrot.lane.b32.xlu0 %v1173, 65
      %v1859 = vpop.permute.xlu0 %1858
      %1866 = vrot.lane.b32.xlu0 %v1682, 1
      %v1867 = vpop.permute.xlu0 %1866
      %1868 = vrot.lane.b32.xlu0 %v1687, 1
      %v1869 = vpop.permute.xlu0 %1868
      %1870 = vrot.lane.b32.xlu0 %v1692, 1
      %v1871 = vpop.permute.xlu0 %1870
      %1872 = vrot.lane.b32.xlu0 %v1697, 1
      %v1873 = vpop.permute.xlu0 %1872
      %1874 = vrot.lane.b32.xlu0 %v1172, 1
      %v1875 = vpop.permute.xlu0 %1874
      %1876 = vrot.lane.b32.xlu0 %v1173, 1
      %v1877 = vpop.permute.xlu0 %1876
      %v1884 = vsel %vm1028, %v1849, %v1867
      %v1885 = vsel %vm1028, %v1851, %v1869
      %v1886 = vsel %vm1028, %v1853, %v1871
      %v1887 = vsel %vm1028, %v1855, %v1873
      %v1888 = vsel %vm1028, %v1857, %v1875
      %v1889 = vsel %vm1028, %v1859, %v1877
      %v1890 = vsel %vm1031, %v1884, 0.0
      %v1891 = vsel %vm1031, %v1885, 0.0
      %v1892 = vsel %vm1031, %v1886, 0.0
      %v1893 = vsel %vm1031, %v1887, 0.0
      %v1894 = vsel %vm1031, %v1888, 0.0
      %v1895 = vsel %vm1031, %v1889, 0.0
      %1896 = vrot.lane.b32.xlu0 %v1682, 127
      %v1897 = vpop.permute.xlu0 %1896
      %1898 = vrot.lane.b32.xlu0 %v1687, 127
      %v1899 = vpop.permute.xlu0 %1898
      %1900 = vrot.lane.b32.xlu0 %v1692, 127
      %v1901 = vpop.permute.xlu0 %1900
      %1902 = vrot.lane.b32.xlu0 %v1697, 127
      %v1903 = vpop.permute.xlu0 %1902
      %1908 = vrot.lane.b32.xlu0 %v1682, 63
      %v1909 = vpop.permute.xlu0 %1908
      %1910 = vrot.lane.b32.xlu0 %v1687, 63
      %v1911 = vpop.permute.xlu0 %1910
      %1912 = vrot.lane.b32.xlu0 %v1692, 63
      %v1913 = vpop.permute.xlu0 %1912
      %1914 = vrot.lane.b32.xlu0 %v1697, 63
      %v1915 = vpop.permute.xlu0 %1914
      %v1920 = vsel %vm1039, %v1897, %v1909
      %v1921 = vsel %vm1039, %v1899, %v1911
      %v1922 = vsel %vm1039, %v1901, %v1913
      %v1923 = vsel %vm1039, %v1903, %v1915
      %v1924 = vsel %vm1042, %v1920, 0.0
      %v1925 = vsel %vm1042, %v1921, 0.0
      %v1926 = vsel %vm1042, %v1922, 0.0
      %v1927 = vsel %vm1042, %v1923, 0.0
      %v1928 = vsel %vm1042, %v1188, 0.0
      %v1929 = vsel %vm1042, %v1189, 0.0
      %1930 = vrot.lane.b32.xlu0 %v1682, 121
      %v1931 = vpop.permute.xlu0 %1930
      %1932 = vrot.lane.b32.xlu0 %v1687, 121
      %v1933 = vpop.permute.xlu0 %1932
      %1934 = vrot.lane.b32.xlu0 %v1692, 121
      %v1935 = vpop.permute.xlu0 %1934
      %1936 = vrot.lane.b32.xlu0 %v1697, 121
      %v1937 = vpop.permute.xlu0 %1936
      %1938 = vrot.lane.b32.xlu0 %v1172, 121
      %v1939 = vpop.permute.xlu0 %1938
      %1940 = vrot.lane.b32.xlu0 %v1173, 121
      %v1941 = vpop.permute.xlu0 %1940
      %1948 = vrot.lane.b32.xlu0 %v1682, 57
      %v1949 = vpop.permute.xlu0 %1948
      %1950 = vrot.lane.b32.xlu0 %v1687, 57
      %v1951 = vpop.permute.xlu0 %1950
      %1952 = vrot.lane.b32.xlu0 %v1692, 57
      %v1953 = vpop.permute.xlu0 %1952
      %1954 = vrot.lane.b32.xlu0 %v1697, 57
      %v1955 = vpop.permute.xlu0 %1954
      %1956 = vrot.lane.b32.xlu0 %v1172, 57
      %v1957 = vpop.permute.xlu0 %1956
      %1958 = vrot.lane.b32.xlu0 %v1173, 57
      %v1959 = vpop.permute.xlu0 %1958
      %v1966 = vsel %vm1050, %v1931, %v1949
      %v1967 = vsel %vm1050, %v1933, %v1951
      %v1968 = vsel %vm1050, %v1935, %v1953
      %v1969 = vsel %vm1050, %v1937, %v1955
      %v1970 = vsel %vm1050, %v1939, %v1957
      %v1971 = vsel %vm1050, %v1941, %v1959
      %v1972 = vsel %vm1053, %v1966, 0.0
      %v1973 = vsel %vm1053, %v1967, 0.0
      %v1974 = vsel %vm1053, %v1968, 0.0
      %v1975 = vsel %vm1053, %v1969, 0.0
      %v1976 = vsel %vm1053, %v1970, 0.0
      %v1977 = vsel %vm1053, %v1971, 0.0
      %1978 = vrot.lane.b32.xlu0 %v1682, 120
      %v1979 = vpop.permute.xlu0 %1978
      %1980 = vrot.lane.b32.xlu0 %v1687, 120
      %v1981 = vpop.permute.xlu0 %1980
      %1982 = vrot.lane.b32.xlu0 %v1692, 120
      %v1983 = vpop.permute.xlu0 %1982
      %1984 = vrot.lane.b32.xlu0 %v1697, 120
      %v1985 = vpop.permute.xlu0 %1984
      %1990 = vrot.lane.b32.xlu0 %v1682, 56
      %v1991 = vpop.permute.xlu0 %1990
      %1992 = vrot.lane.b32.xlu0 %v1687, 56
      %v1993 = vpop.permute.xlu0 %1992
      %1994 = vrot.lane.b32.xlu0 %v1692, 56
      %v1995 = vpop.permute.xlu0 %1994
      %1996 = vrot.lane.b32.xlu0 %v1697, 56
      %v1997 = vpop.permute.xlu0 %1996
      %v2002 = vsel %vm1061, %v1979, %v1991
      %v2003 = vsel %vm1061, %v1981, %v1993
      %v2004 = vsel %vm1061, %v1983, %v1995
      %v2005 = vsel %vm1061, %v1985, %v1997
      %v2006 = vsel %vm1064, %v2002, 0.0
      %v2007 = vsel %vm1064, %v2003, 0.0
      %v2008 = vsel %vm1064, %v2004, 0.0
      %v2009 = vsel %vm1064, %v2005, 0.0
      %v2010 = vsel %vm1064, %v1204, 0.0
      %v2011 = vsel %vm1064, %v1205, 0.0
      %2012 = vrot.lane.b32.xlu0 %v1682, 119
      %v2013 = vpop.permute.xlu0 %2012
      %2014 = vrot.lane.b32.xlu0 %v1687, 119
      %v2015 = vpop.permute.xlu0 %2014
      %2016 = vrot.lane.b32.xlu0 %v1692, 119
      %v2017 = vpop.permute.xlu0 %2016
      %2018 = vrot.lane.b32.xlu0 %v1697, 119
      %v2019 = vpop.permute.xlu0 %2018
      %2024 = vrot.lane.b32.xlu0 %v1682, 55
      %v2025 = vpop.permute.xlu0 %2024
      %2026 = vrot.lane.b32.xlu0 %v1687, 55
      %v2027 = vpop.permute.xlu0 %2026
      %2028 = vrot.lane.b32.xlu0 %v1692, 55
      %v2029 = vpop.permute.xlu0 %2028
      %2030 = vrot.lane.b32.xlu0 %v1697, 55
      %v2031 = vpop.permute.xlu0 %2030
      %v2036 = vsel %vm1072, %v2013, %v2025
      %v2037 = vsel %vm1072, %v2015, %v2027
      %v2038 = vsel %vm1072, %v2017, %v2029
      %v2039 = vsel %vm1072, %v2019, %v2031
      %v2040 = vsel %vm1075, %v2036, 0.0
      %v2041 = vsel %vm1075, %v2037, 0.0
      %v2042 = vsel %vm1075, %v2038, 0.0
      %v2043 = vsel %vm1075, %v2039, 0.0
      %v2044 = vsel %vm1075, %v1218, 0.0
      %v2045 = vsel %vm1075, %v1219, 0.0
      %v2046 = vld [vmem:[%s8] sm:$0xff]
      %v2047 = vld [vmem:[%s8 + $0x8] sm:$0xff]
      %v2048 = vld [vmem:[%s8 + $0x10] sm:$0xff]
      %v2049 = vld [vmem:[%s8 + $0x18] sm:$0xff]
      %v2050 = vld [vmem:[%s8 + $0x20] sm:$0xff]
      %v2051 = vld [vmem:[%s8 + $0x28] sm:$0xff]
      %v2052 = vld [vmem:[%s8 + $0x30] sm:$0xff]
      %v2053 = vld [vmem:[%s8 + $0x38] sm:$0xff]
      %v2054 = vld [vmem:[%s9] sm:$0xff]
      %v2055 = vld [vmem:[%s9 + $0x8] sm:$0xff]
      %2057 = vset.pattern.permute.xlu0 0
      %2058 = vperm.xlu0 %2057, %v2054
      %v2059 = vpop.permute.xlu0 %2058
      %2062 = vset.pattern.permute.xlu0 0
      %2063 = vperm.xlu0 %2062, %v2055
      %v2064 = vpop.permute.xlu0 %2063
      %vm2066 = vcmask 392192
      %v2068 = vsel %vm2066, %v2049, 0
      %v2071 = vsel %vm2066, %v2053, 0
      %2073 = vmatprep.subr.mxu0 0.0
      %2074 = vmatpush1.msra.mxu0 %v1746
      %2075 = vmatprep.subr.mxu0 0.0
      %2076 = vmatpush1.msra.mxu0 %v1747
      %2077 = vmatprep.subr.mxu0 0.0
      %2078 = vmatpush1.msra.mxu0 %v1748
      %2079 = vmatprep.subr.mxu0 0.0
      %2080 = vmatpush1.msra.mxu0 %v1749
      %2081 = vmatprep.subr.mxu0 0.0
      %2082 = vmatpush1.msra.mxu0 %v1750
      %2083 = vmatprep.subr.mxu0 0.0
      %2084 = vmatpush1.msra.mxu0 %v1751
      %2085 = vmatprep.subr.mxu0 0.0
      %2086 = vmatpush1.msra.mxu0 %v1794
      %2087 = vmatprep.subr.mxu0 0.0
      %2088 = vmatpush1.msra.mxu0 %v1795
      %2089 = vmatprep.subr.mxu0 0.0
      %2090 = vmatpush1.msra.mxu0 %v1796
      %2091 = vmatprep.subr.mxu0 0.0
      %2092 = vmatpush1.msra.mxu0 %v1797
      %2093 = vmatprep.subr.mxu0 0.0
      %2094 = vmatpush1.msra.mxu0 %v1798
      %2095 = vmatprep.subr.mxu0 0.0
      %2096 = vmatpush1.msra.mxu0 %v1799
      %2097 = vmatprep.subr.mxu0 0.0
      %2098 = vmatpush1.msra.mxu0 %v1842
      %2099 = vmatprep.subr.mxu0 0.0
      %2100 = vmatpush1.msra.mxu0 %v1843
      %2101 = vmatprep.subr.mxu0 0.0
      %2102 = vmatpush1.msra.mxu0 %v1844
      %2103 = vmatprep.subr.mxu0 0.0
      %2104 = vmatpush1.msra.mxu0 %v1845
      %2105 = vmatprep.subr.mxu0 0.0
      %2106 = vmatpush1.msra.mxu0 %v1846
      %2107 = vmatprep.subr.mxu0 0.0
      %2108 = vmatpush1.msra.mxu0 %v1847
      %2109 = vmatprep.subr.mxu0 0.0
      %2110 = vmatpush1.msra.mxu0 %v1890
      %2111 = vmatprep.subr.mxu0 0.0
      %2112 = vmatpush1.msra.mxu0 %v1891
      %2113 = vmatprep.subr.mxu0 0.0
      %2114 = vmatpush1.msra.mxu0 %v1892
      %2115 = vmatprep.subr.mxu0 0.0
      %2116 = vmatpush1.msra.mxu0 %v1893
      %2117 = vmatprep.subr.mxu0 0.0
      %2118 = vmatpush1.msra.mxu0 %v1894
      %2119 = vmatprep.subr.mxu0 0.0
      %2120 = vmatpush1.msra.mxu0 %v1895
      %2121 = vmatprep.subr.mxu0 0.0
      %2122 = vmatpush1.msra.mxu0 %v1682
      %2123 = vmatprep.subr.mxu0 0.0
      %2124 = vmatpush1.msra.mxu0 %v1687
      %2125 = vmatprep.subr.mxu0 0.0
      %2126 = vmatpush1.msra.mxu0 %v1692
      %2127 = vmatprep.subr.mxu0 0.0
      %2128 = vmatpush1.msra.mxu0 %v1697
      %2129 = vmatprep.subr.mxu0 0.0
      %2130 = vmatpush1.msra.mxu0 %v1172
      %2131 = vmatprep.subr.mxu0 0.0
      %2132 = vmatpush1.msra.mxu0 %v1173
      %2133 = vmatprep.subr.mxu0 0.0
      %2134 = vmatpush1.msra.mxu0 %v1924
      %2135 = vmatprep.subr.mxu0 0.0
      %2136 = vmatpush1.msra.mxu0 %v1925
      %2137 = vmatprep.mubr.f32.mxu0 %v2047
      %2138 = vmatmul.mubr.f32.gmra.mrb[0].mxu0 %v2046
      %v2139 = vpop.f32.mrb[0].mxu0
      %v2140 = vadd.f32 %v2059, %v2139
      %v2141 = vpop.f32.mrb[0].mxu0
      %2142 = vmatprep.mubr.f32.mxu0 %v2051
      %2143 = vmatmul.mubr.f32.gmra.mrb[0].mxu0 %v2050
      %v2144 = vpop.f32.mrb[0].mxu0
      %v2145 = vadd.f32 %v2064, %v2144
      %v2146 = vpop.f32.mrb[0].mxu0
      %2147 = vdwg.mxu0
      %2148 = vmatprep.subr.mxu0 0.0
      %2149 = vmatpush1.msra.mxu0 %v1926
      %2150 = vmatprep.subr.mxu0 0.0
      %2151 = vmatpush1.msra.mxu0 %v1927
      %2152 = vmatprep.subr.mxu0 0.0
      %2153 = vmatpush1.msra.mxu0 %v1928
      %2154 = vmatprep.subr.mxu0 0.0
      %2155 = vmatpush1.msra.mxu0 %v1929
      %2156 = vmatprep.subr.mxu0 0.0
      %2157 = vmatpush1.msra.mxu0 %v1972
      %2158 = vmatprep.subr.mxu0 0.0
      %2159 = vmatpush1.msra.mxu0 %v1973
      %2160 = vmatprep.subr.mxu0 0.0
      %2161 = vmatpush1.msra.mxu0 %v1974
      %2162 = vmatprep.subr.mxu0 0.0
      %2163 = vmatpush1.msra.mxu0 %v1975
      %2164 = vmatprep.subr.mxu0 0.0
      %2165 = vmatpush1.msra.mxu0 %v1976
      %2166 = vmatprep.subr.mxu0 0.0
      %2167 = vmatpush1.msra.mxu0 %v1977
      %2168 = vmatprep.subr.mxu0 0.0
      %2169 = vmatpush1.msra.mxu0 %v2006
      %2170 = vmatprep.subr.mxu0 0.0
      %2171 = vmatpush1.msra.mxu0 %v2007
      %2172 = vmatprep.subr.mxu0 0.0
      %2173 = vmatpush1.msra.mxu0 %v2008
      %2174 = vmatprep.subr.mxu0 0.0
      %2175 = vmatpush1.msra.mxu0 %v2009
      %2176 = vmatprep.subr.mxu0 0.0
      %2177 = vmatpush1.msra.mxu0 %v2010
      %2178 = vmatprep.subr.mxu0 0.0
      %2179 = vmatpush1.msra.mxu0 %v2011
      %2180 = vmatprep.subr.mxu0 0.0
      %2181 = vmatpush1.msra.mxu0 %v2040
      %2182 = vmatprep.subr.mxu0 0.0
      %2183 = vmatpush1.msra.mxu0 %v2041
      %2184 = vmatprep.subr.mxu0 0.0
      %2185 = vmatpush1.msra.mxu0 %v2042
      %2186 = vmatprep.subr.mxu0 0.0
      %2187 = vmatpush1.msra.mxu0 %v2043
      %2188 = vmatprep.subr.mxu0 0.0
      %2189 = vmatpush1.msra.mxu0 %v2044
      %2190 = vmatprep.subr.mxu0 0.0
      %2191 = vmatpush1.msra.mxu0 %v2045
      %2192 = vmatprep.subr.mxu0 0.0
      %2193 = vmatpush1.msra.mxu0 0.0
      %2194 = vmatprep.subr.mxu0 0.0
      %2195 = vmatpush1.msra.mxu0 0.0
      %2196 = vmatprep.subr.mxu0 0.0
      %2197 = vmatpush1.msra.mxu0 0.0
      %2198 = vmatprep.subr.mxu0 0.0
      %2199 = vmatpush1.msra.mxu0 0.0
      %2200 = vmatprep.subr.mxu0 0.0
      %2201 = vmatpush1.msra.mxu0 0.0
      %2202 = vmatprep.subr.mxu0 0.0
      %2203 = vmatpush1.msra.mxu0 0.0
      %2204 = vmatprep.subr.mxu0 0.0
      %2205 = vmatpush1.msra.mxu0 0.0
      %2206 = vmatprep.subr.mxu0 0.0
      %2207 = vmatpush1.msra.mxu0 0.0
      %2208 = vmatprep.subr.mxu0 0.0
      %2209 = vmatpush1.msra.mxu0 0.0
      %2210 = vmatprep.subr.mxu0 0.0
      %2211 = vmatpush1.msra.mxu0 0.0
      %2212 = vmatprep.mubr.f32.mxu0 %v2068
      %2213 = vmatmul.mubr.f32.gmra.mrb[0].mxu0 %v2048
      %v2214 = vpop.f32.mrb[0].mxu0
      %v2215 = vadd.f32 %v2140, %v2214
      %v2216 = vpop.f32.mrb[0].mxu0
      %2217 = vmatprep.mubr.f32.mxu0 %v2071
      %2218 = vmatmul.mubr.f32.gmra.mrb[0].mxu0 %v2052
      %v2219 = vpop.f32.mrb[0].mxu0
      %v2220 = vadd.f32 %v2145, %v2219
      %v2221 = vpop.f32.mrb[0].mxu0
      %2222 = vdwg.mxu0
      %v2223 = vmax.f32 %v2215, 0.0
      %v2224 = vmax.f32 %v2220, 0.0
      %v2225 = vld [vmem:[%s17] sm:$0xff]
      %v2226 = vld [vmem:[%s17 + $0x8] sm:$0xff]
      %v2227 = vld [vmem:[%s17 + $0x10] sm:$0xff]
      %v2228 = vld [vmem:[%s17 + $0x18] sm:$0xff]
      %v2229 = vld [vmem:[%s17 + $0x20] sm:$0xff]
      %v2230 = vld [vmem:[%s17 + $0x28] sm:$0xff]
      %v2231 = vld [vmem:[%s17 + $0x30] sm:$0xff]
      %v2232 = vld [vmem:[%s17 + $0x38] sm:$0xff]
      %v2233 = vld [vmem:[%s17 + $0x40] sm:$0xff]
      %v2234 = vld [vmem:[%s17 + $0x48] sm:$0xff]
      %v2235 = vld [vmem:[%s17 + $0x50] sm:$0xff]
      %v2236 = vld [vmem:[%s17 + $0x58] sm:$0xff]
      %v2237 = vld [vmem:[%s17 + $0x60] sm:$0xff]
      %v2238 = vld [vmem:[%s17 + $0x68] sm:$0xff]
      %v2239 = vld [vmem:[%s17 + $0x70] sm:$0xff]
      %v2240 = vld [vmem:[%s17 + $0x78] sm:$0xff]
      %v2242 = vsel %vm1232, %v2223, 0
      %v2245 = vsel %vm1232, %v2224, 0
      %2247 = vmatprep.subr.mxu0 %v2226
      %2248 = vmatpush1.msra.mxu0 %v2225
      %2249 = vmatprep.subr.mxu0 %v2228
      %2250 = vmatpush1.msra.mxu0 %v2227
      %2251 = vmatprep.subr.mxu0 %v2230
      %2252 = vmatpush1.msra.mxu0 %v2229
      %2253 = vmatprep.subr.mxu0 %v2232
      %2254 = vmatpush1.msra.mxu0 %v2231
      %2255 = vmatprep.subr.mxu0 %v2234
      %2256 = vmatpush1.msra.mxu0 %v2233
      %2257 = vmatprep.subr.mxu0 %v2236
      %2258 = vmatpush1.msra.mxu0 %v2235
      %2259 = vmatprep.subr.mxu0 %v2238
      %2260 = vmatpush1.msra.mxu0 %v2237
      %2261 = vmatprep.subr.mxu0 %v2240
      %2262 = vmatpush1.msra.mxu0 %v2239
      %2263 = vmatprep.subr.mxu0 0.0
      %2264 = vmatpush1.msra.mxu0 0.0
      %2265 = vmatprep.subr.mxu0 0.0
      %2266 = vmatpush1.msra.mxu0 0.0
      %2267 = vmatprep.subr.mxu0 0.0
      %2268 = vmatpush1.msra.mxu0 0.0
      %2269 = vmatprep.subr.mxu0 0.0
      %2270 = vmatpush1.msra.mxu0 0.0
      %2271 = vmatprep.subr.mxu0 0.0
      %2272 = vmatpush1.msra.mxu0 0.0
      %2273 = vmatprep.subr.mxu0 0.0
      %2274 = vmatpush1.msra.mxu0 0.0
      %2275 = vmatprep.subr.mxu0 0.0
      %2276 = vmatpush1.msra.mxu0 0.0
      %2277 = vmatprep.subr.mxu0 0.0
      %2278 = vmatpush1.msra.mxu0 0.0
      %2279 = vmatprep.subr.mxu0 0.0
      %2280 = vmatpush1.msra.mxu0 0.0
      %2281 = vmatprep.subr.mxu0 0.0
      %2282 = vmatpush1.msra.mxu0 0.0
      %2283 = vmatprep.subr.mxu0 0.0
      %2284 = vmatpush1.msra.mxu0 0.0
      %2285 = vmatprep.subr.mxu0 0.0
      %2286 = vmatpush1.msra.mxu0 0.0
      %2287 = vmatprep.subr.mxu0 0.0
      %2288 = vmatpush1.msra.mxu0 0.0
      %2289 = vmatprep.subr.mxu0 0.0
      %2290 = vmatpush1.msra.mxu0 0.0
      %2291 = vmatprep.subr.mxu0 0.0
      %2292 = vmatpush1.msra.mxu0 0.0
      %2293 = vmatprep.subr.mxu0 0.0
      %2294 = vmatpush1.msra.mxu0 0.0
      %2295 = vmatprep.subr.mxu0 0.0
      %2296 = vmatpush1.msra.mxu0 0.0
      %2297 = vmatprep.subr.mxu0 0.0
      %2298 = vmatpush1.msra.mxu0 0.0
      %2299 = vmatprep.subr.mxu0 0.0
      %2300 = vmatpush1.msra.mxu0 0.0
      %2301 = vmatprep.subr.mxu0 0.0
      %2302 = vmatpush1.msra.mxu0 0.0
      %2303 = vmatprep.subr.mxu0 0.0
      %2304 = vmatpush1.msra.mxu0 0.0
      %2305 = vmatprep.subr.mxu0 0.0
      %2306 = vmatpush1.msra.mxu0 0.0
      %2307 = vmatprep.subr.mxu0 0.0
      %2308 = vmatpush1.msra.mxu0 0.0
      %2309 = vmatprep.subr.mxu0 0.0
      %2310 = vmatpush1.msra.mxu0 0.0
      %2311 = vmatprep.mubr.f32.mxu0 0.0
      %2312 = vmatmul.mubr.f32.gmra.mrb[0].mxu0 %v2242
      %v2313 = vpop.f32.mrb[0].mxu0
      %v2314 = vadd.f32 0.0, %v2313
      %v2315 = vpop.f32.mrb[0].mxu0
      %v2316 = vadd.f32 0.0, %v2315
      %2317 = vmatprep.mubr.f32.mxu0 0.0
      %2318 = vmatmul.mubr.f32.gmra.mrb[0].mxu0 %v2245
      %v2319 = vpop.f32.mrb[0].mxu0
      %v2320 = vadd.f32 0.0, %v2319
      %v2321 = vpop.f32.mrb[0].mxu0
      %v2322 = vadd.f32 0.0, %v2321
      %2323 = vdwg.mxu0
      %2324 = vrot.lane.b32.xlu0 %v2314, 17
      %v2325 = vpop.permute.xlu0 %2324
      %2326 = vrot.lane.b32.xlu0 %v2320, 17
      %v2327 = vpop.permute.xlu0 %2326
      %2328 = vrot.lane.b32.xlu0 %v860, 17
      %v2329 = vpop.permute.xlu0 %2328
      %2330 = vrot.lane.b32.xlu0 %v2316, 17
      %v2331 = vpop.permute.xlu0 %2330
      %2332 = vrot.lane.b32.xlu0 %v2322, 17
      %v2333 = vpop.permute.xlu0 %2332
      %2334 = vrot.lane.b32.xlu0 %v861, 17
      %v2335 = vpop.permute.xlu0 %2334
      %v2336 = vsel %vm678, %v2325, %v2331
      %v2337 = vsel %vm678, %v2327, %v2333
      %v2338 = vsel %vm678, %v2329, %v2335
      %v2339 = vsel %vm678, %v2331, %v2325
      %v2340 = vsel %vm678, %v2333, %v2327
      %v2341 = vsel %vm678, %v2335, %v2329
      %v2342 = vsel %vm683, %v2339, 0.0
      %v2343 = vsel %vm684, %v2336, 0.0
      %v2344 = vsel %vm683, %v2340, 0.0
      %v2345 = vsel %vm684, %v2337, 0.0
      %v2346 = vsel %vm683, %v2341, 0.0
      %v2347 = vsel %vm684, %v2338, 0.0
      %2348 = vrot.lane.b32.xlu0 %v2314, 16
      %v2349 = vpop.permute.xlu0 %2348
      %2350 = vrot.lane.b32.xlu0 %v2320, 16
      %v2351 = vpop.permute.xlu0 %2350
      %2352 = vrot.lane.b32.xlu0 %v860, 16
      %v2353 = vpop.permute.xlu0 %2352
      %2354 = vrot.lane.b32.xlu0 %v2316, 16
      %v2355 = vpop.permute.xlu0 %2354
      %2356 = vrot.lane.b32.xlu0 %v2322, 16
      %v2357 = vpop.permute.xlu0 %2356
      %2358 = vrot.lane.b32.xlu0 %v861, 16
      %v2359 = vpop.permute.xlu0 %2358
      %v2360 = vsel %vm691, %v2349, %v2355
      %v2361 = vsel %vm691, %v2351, %v2357
      %v2362 = vsel %vm691, %v2353, %v2359
      %v2363 = vsel %vm691, %v2355, %v2349
      %v2364 = vsel %vm691, %v2357, %v2351
      %v2365 = vsel %vm691, %v2359, %v2353
      %v2366 = vsel %vm696, %v2363, 0.0
      %v2367 = vsel %vm697, %v2360, 0.0
      %v2368 = vsel %vm696, %v2364, 0.0
      %v2369 = vsel %vm697, %v2361, 0.0
      %v2370 = vsel %vm696, %v2365, 0.0
      %v2371 = vsel %vm697, %v2362, 0.0
      %2372 = vrot.lane.b32.xlu0 %v2314, 15
      %v2373 = vpop.permute.xlu0 %2372
      %2374 = vrot.lane.b32.xlu0 %v2320, 15
      %v2375 = vpop.permute.xlu0 %2374
      %2376 = vrot.lane.b32.xlu0 %v860, 15
      %v2377 = vpop.permute.xlu0 %2376
      %2378 = vrot.lane.b32.xlu0 %v2316, 15
      %v2379 = vpop.permute.xlu0 %2378
      %2380 = vrot.lane.b32.xlu0 %v2322, 15
      %v2381 = vpop.permute.xlu0 %2380
      %2382 = vrot.lane.b32.xlu0 %v861, 15
      %v2383 = vpop.permute.xlu0 %2382
      %v2384 = vsel %vm704, %v2373, %v2379
      %v2385 = vsel %vm704, %v2375, %v2381
      %v2386 = vsel %vm704, %v2377, %v2383
      %v2387 = vsel %vm704, %v2379, %v2373
      %v2388 = vsel %vm704, %v2381, %v2375
      %v2389 = vsel %vm704, %v2383, %v2377
      %v2390 = vsel %vm709, %v2387, 0.0
      %v2391 = vsel %vm710, %v2384, 0.0
      %v2392 = vsel %vm709, %v2388, 0.0
      %v2393 = vsel %vm710, %v2385, 0.0
      %v2394 = vsel %vm709, %v2389, 0.0
      %v2395 = vsel %vm710, %v2386, 0.0
      %2396 = vrot.lane.b32.xlu0 %v2314, 1
      %v2397 = vpop.permute.xlu0 %2396
      %2398 = vrot.lane.b32.xlu0 %v2320, 1
      %v2399 = vpop.permute.xlu0 %2398
      %2400 = vrot.lane.b32.xlu0 %v860, 1
      %v2401 = vpop.permute.xlu0 %2400
      %2402 = vrot.lane.b32.xlu0 %v2316, 1
      %v2403 = vpop.permute.xlu0 %2402
      %2404 = vrot.lane.b32.xlu0 %v2322, 1
      %v2405 = vpop.permute.xlu0 %2404
      %2406 = vrot.lane.b32.xlu0 %v861, 1
      %v2407 = vpop.permute.xlu0 %2406
      %v2408 = vsel %vm717, %v2397, %v2403
      %v2409 = vsel %vm717, %v2399, %v2405
      %v2410 = vsel %vm717, %v2401, %v2407
      %v2411 = vsel %vm717, %v2403, %v2397
      %v2412 = vsel %vm717, %v2405, %v2399
      %v2413 = vsel %vm717, %v2407, %v2401
      %v2414 = vsel %vm722, %v2411, 0.0
      %v2415 = vsel %vm723, %v2408, 0.0
      %v2416 = vsel %vm722, %v2412, 0.0
      %v2417 = vsel %vm723, %v2409, 0.0
      %v2418 = vsel %vm722, %v2413, 0.0
      %v2419 = vsel %vm723, %v2410, 0.0
      %2420 = vrot.lane.b32.xlu0 %v2314, 127
      %v2421 = vpop.permute.xlu0 %2420
      %2422 = vrot.lane.b32.xlu0 %v2320, 127
      %v2423 = vpop.permute.xlu0 %2422
      %2424 = vrot.lane.b32.xlu0 %v2316, 127
      %v2425 = vpop.permute.xlu0 %2424
      %2426 = vrot.lane.b32.xlu0 %v2322, 127
      %v2427 = vpop.permute.xlu0 %2426
      %v2428 = vsel %vm730, %v2421, %v2425
      %v2429 = vsel %vm730, %v2423, %v2427
      %v2430 = vsel %vm730, %v2425, %v2421
      %v2431 = vsel %vm730, %v2427, %v2423
      %v2432 = vsel %vm735, %v2428, 0.0
      %v2433 = vsel %vm736, %v2430, 0.0
      %v2434 = vsel %vm735, %v2429, 0.0
      %v2435 = vsel %vm736, %v2431, 0.0
      %v2436 = vsel %vm735, %v866, 0.0
      %v2437 = vsel %vm736, %v867, 0.0
      %2438 = vrot.lane.b32.xlu0 %v2314, 113
      %v2439 = vpop.permute.xlu0 %2438
      %2440 = vrot.lane.b32.xlu0 %v2320, 113
      %v2441 = vpop.permute.xlu0 %2440
      %2442 = vrot.lane.b32.xlu0 %v860, 113
      %v2443 = vpop.permute.xlu0 %2442
      %2444 = vrot.lane.b32.xlu0 %v2316, 113
      %v2445 = vpop.permute.xlu0 %2444
      %2446 = vrot.lane.b32.xlu0 %v2322, 113
      %v2447 = vpop.permute.xlu0 %2446
      %2448 = vrot.lane.b32.xlu0 %v861, 113
      %v2449 = vpop.permute.xlu0 %2448
      %v2450 = vsel %vm743, %v2439, %v2445
      %v2451 = vsel %vm743, %v2441, %v2447
      %v2452 = vsel %vm743, %v2443, %v2449
      %v2453 = vsel %vm743, %v2445, %v2439
      %v2454 = vsel %vm743, %v2447, %v2441
      %v2455 = vsel %vm743, %v2449, %v2443
      %v2456 = vsel %vm748, %v2450, 0.0
      %v2457 = vsel %vm749, %v2453, 0.0
      %v2458 = vsel %vm748, %v2451, 0.0
      %v2459 = vsel %vm749, %v2454, 0.0
      %v2460 = vsel %vm748, %v2452, 0.0
      %v2461 = vsel %vm749, %v2455, 0.0
      %2462 = vrot.lane.b32.xlu0 %v2314, 112
      %v2463 = vpop.permute.xlu0 %2462
      %2464 = vrot.lane.b32.xlu0 %v2320, 112
      %v2465 = vpop.permute.xlu0 %2464
      %2466 = vrot.lane.b32.xlu0 %v2316, 112
      %v2467 = vpop.permute.xlu0 %2466
      %2468 = vrot.lane.b32.xlu0 %v2322, 112
      %v2469 = vpop.permute.xlu0 %2468
      %v2470 = vsel %vm756, %v2463, %v2467
      %v2471 = vsel %vm756, %v2465, %v2469
      %v2472 = vsel %vm756, %v2467, %v2463
      %v2473 = vsel %vm756, %v2469, %v2465
      %v2474 = vsel %vm761, %v2470, 0.0
      %v2475 = vsel %vm762, %v2472, 0.0
      %v2476 = vsel %vm761, %v2471, 0.0
      %v2477 = vsel %vm762, %v2473, 0.0
      %v2478 = vsel %vm761, %v874, 0.0
      %v2479 = vsel %vm762, %v875, 0.0
      %2480 = vrot.lane.b32.xlu0 %v2314, 111
      %v2481 = vpop.permute.xlu0 %2480
      %2482 = vrot.lane.b32.xlu0 %v2320, 111
      %v2483 = vpop.permute.xlu0 %2482
      %2484 = vrot.lane.b32.xlu0 %v2316, 111
      %v2485 = vpop.permute.xlu0 %2484
      %2486 = vrot.lane.b32.xlu0 %v2322, 111
      %v2487 = vpop.permute.xlu0 %2486
      %v2488 = vsel %vm769, %v2481, %v2485
      %v2489 = vsel %vm769, %v2483, %v2487
      %v2490 = vsel %vm769, %v2485, %v2481
      %v2491 = vsel %vm769, %v2487, %v2483
      %v2492 = vsel %vm774, %v2488, 0.0
      %v2493 = vsel %vm775, %v2490, 0.0
      %v2494 = vsel %vm774, %v2489, 0.0
      %v2495 = vsel %vm775, %v2491, 0.0
      %v2496 = vsel %vm774, %v880, 0.0
      %v2497 = vsel %vm775, %v881, 0.0
      %v2498 = vld [vmem:[%s10] sm:$0xff]
      %v2499 = vld [vmem:[%s10 + $0x8] sm:$0xff]
      %v2500 = vld [vmem:[%s11] sm:$0xff]
      %2502 = vset.pattern.permute.xlu0 0
      %2503 = vperm.xlu0 %2502, %v2500
      %v2504 = vpop.permute.xlu0 %2503
      %vm2506 = vcmask 719872
      %v2508 = vsel %vm2506, %v2499, 0
      %2510 = vmatprep.subr.mxu0 %v2343
      %2511 = vmatpush1.msra.mxu0 %v2342
      %2512 = vmatprep.subr.mxu0 %v2345
      %2513 = vmatpush1.msra.mxu0 %v2344
      %2514 = vmatprep.subr.mxu0 %v2347
      %2515 = vmatpush1.msra.mxu0 %v2346
      %2516 = vmatprep.subr.mxu0 %v2367
      %2517 = vmatpush1.msra.mxu0 %v2366
      %2518 = vmatprep.subr.mxu0 %v2369
      %2519 = vmatpush1.msra.mxu0 %v2368
      %2520 = vmatprep.subr.mxu0 %v2371
      %2521 = vmatpush1.msra.mxu0 %v2370
      %2522 = vmatprep.subr.mxu0 %v2391
      %2523 = vmatpush1.msra.mxu0 %v2390
      %2524 = vmatprep.subr.mxu0 %v2393
      %2525 = vmatpush1.msra.mxu0 %v2392
      %2526 = vmatprep.subr.mxu0 %v2395
      %2527 = vmatpush1.msra.mxu0 %v2394
      %2528 = vmatprep.subr.mxu0 %v2415
      %2529 = vmatpush1.msra.mxu0 %v2414
      %2530 = vmatprep.subr.mxu0 %v2417
      %2531 = vmatpush1.msra.mxu0 %v2416
      %2532 = vmatprep.subr.mxu0 %v2419
      %2533 = vmatpush1.msra.mxu0 %v2418
      %2534 = vmatprep.subr.mxu0 %v2316
      %2535 = vmatpush1.msra.mxu0 %v2314
      %2536 = vmatprep.subr.mxu0 %v2322
      %2537 = vmatpush1.msra.mxu0 %v2320
      %2538 = vmatprep.subr.mxu0 %v861
      %2539 = vmatpush1.msra.mxu0 %v860
      %2540 = vmatprep.subr.mxu0 %v2433
      %2541 = vmatpush1.msra.mxu0 %v2432
      %2542 = vmatprep.subr.mxu0 %v2435
      %2543 = vmatpush1.msra.mxu0 %v2434
      %2544 = vmatprep.subr.mxu0 %v2437
      %2545 = vmatpush1.msra.mxu0 %v2436
      %2546 = vmatprep.subr.mxu0 %v2457
      %2547 = vmatpush1.msra.mxu0 %v2456
      %2548 = vmatprep.subr.mxu0 %v2459
      %2549 = vmatpush1.msra.mxu0 %v2458
      %2550 = vmatprep.subr.mxu0 %v2461
      %2551 = vmatpush1.msra.mxu0 %v2460
      %2552 = vmatprep.subr.mxu0 %v2475
      %2553 = vmatpush1.msra.mxu0 %v2474
      %2554 = vmatprep.subr.mxu0 %v2477
      %2555 = vmatpush1.msra.mxu0 %v2476
      %2556 = vmatprep.subr.mxu0 %v2479
      %2557 = vmatpush1.msra.mxu0 %v2478
      %2558 = vmatprep.subr.mxu0 %v2493
      %2559 = vmatpush1.msra.mxu0 %v2492
      %2560 = vmatprep.subr.mxu0 %v2495
      %2561 = vmatpush1.msra.mxu0 %v2494
      %2562 = vmatprep.subr.mxu0 %v2497
      %2563 = vmatpush1.msra.mxu0 %v2496
      %2564 = vmatprep.subr.mxu0 0.0
      %2565 = vmatpush1.msra.mxu0 0.0
      %2566 = vmatprep.subr.mxu0 0.0
      %2567 = vmatpush1.msra.mxu0 0.0
      %2568 = vmatprep.subr.mxu0 0.0
      %2569 = vmatpush1.msra.mxu0 0.0
      %2570 = vmatprep.subr.mxu0 0.0
      %2571 = vmatpush1.msra.mxu0 0.0
      %2572 = vmatprep.subr.mxu0 0.0
      %2573 = vmatpush1.msra.mxu0 0.0
      %2574 = vmatprep.mubr.f32.mxu0 %v2508
      %2575 = vmatmul.mubr.f32.gmra.mrb[0].mxu0 %v2498
      %v2576 = vpop.f32.mrb[0].mxu0
      %v2577 = vadd.f32 %v2504, %v2576
      %v2578 = vpop.f32.mrb[0].mxu0
      %v2579 = vadd.f32 %v2504, %v2578
      %2580 = vdwg.mxu0
      %v2581 = vmax.f32 %v2577, 0.0
      %v2582 = vmax.f32 %v2579, 0.0
      %v2583 = vld [vmem:[%s12] sm:$0x7]
      %v2584 = vld [vmem:[%s13] sm:$0x7]
      %2586 = vset.pattern.permute.xlu0 0
      %2587 = vperm.xlu0 %2586, %v2584
      %v2588 = vpop.permute.xlu0 %2587
      %v2591 = vsel %vm1006, %v2583, 0
      %2593 = vmatprep.subr.mxu0 %v2582
      %2594 = vmatpush1.msra.mxu0 %v2581
      %2595 = vmatprep.subr.mxu0 0.0
      %2596 = vmatpush1.msra.mxu0 0.0
      %2597 = vmatprep.subr.mxu0 0.0
      %2598 = vmatpush1.msra.mxu0 0.0
      %2599 = vmatprep.subr.mxu0 0.0
      %2600 = vmatpush1.msra.mxu0 0.0
      %2601 = vmatprep.subr.mxu0 0.0
      %2602 = vmatpush1.msra.mxu0 0.0
      %2603 = vmatprep.subr.mxu0 0.0
      %2604 = vmatpush1.msra.mxu0 0.0
      %2605 = vmatprep.subr.mxu0 0.0
      %2606 = vmatpush1.msra.mxu0 0.0
      %2607 = vmatprep.subr.mxu0 0.0
      %2608 = vmatpush1.msra.mxu0 0.0
      %2609 = vmatprep.subr.mxu0 0.0
      %2610 = vmatpush1.msra.mxu0 0.0
      %2611 = vmatprep.subr.mxu0 0.0
      %2612 = vmatpush1.msra.mxu0 0.0
      %2613 = vmatprep.subr.mxu0 0.0
      %2614 = vmatpush1.msra.mxu0 0.0
      %2615 = vmatprep.subr.mxu0 0.0
      %2616 = vmatpush1.msra.mxu0 0.0
      %2617 = vmatprep.subr.mxu0 0.0
      %2618 = vmatpush1.msra.mxu0 0.0
      %2619 = vmatprep.subr.mxu0 0.0
      %2620 = vmatpush1.msra.mxu0 0.0
      %2621 = vmatprep.subr.mxu0 0.0
      %2622 = vmatpush1.msra.mxu0 0.0
      %2623 = vmatprep.subr.mxu0 0.0
      %2624 = vmatpush1.msra.mxu0 0.0
      %2625 = vmatprep.subr.mxu0 0.0
      %2626 = vmatpush1.msra.mxu0 0.0
      %2627 = vmatprep.subr.mxu0 0.0
      %2628 = vmatpush1.msra.mxu0 0.0
      %2629 = vmatprep.subr.mxu0 0.0
      %2630 = vmatpush1.msra.mxu0 0.0
      %2631 = vmatprep.subr.mxu0 0.0
      %2632 = vmatpush1.msra.mxu0 0.0
      %2633 = vmatprep.subr.mxu0 0.0
      %2634 = vmatpush1.msra.mxu0 0.0
      %2635 = vmatprep.subr.mxu0 0.0
      %2636 = vmatpush1.msra.mxu0 0.0
      %2637 = vmatprep.subr.mxu0 0.0
      %2638 = vmatpush1.msra.mxu0 0.0
      %2639 = vmatprep.subr.mxu0 0.0
      %2640 = vmatpush1.msra.mxu0 0.0
      %2641 = vmatprep.subr.mxu0 0.0
      %2642 = vmatpush1.msra.mxu0 0.0
      %2643 = vmatprep.subr.mxu0 0.0
      %2644 = vmatpush1.msra.mxu0 0.0
      %2645 = vmatprep.subr.mxu0 0.0
      %2646 = vmatpush1.msra.mxu0 0.0
      %2647 = vmatprep.subr.mxu0 0.0
      %2648 = vmatpush1.msra.mxu0 0.0
      %2649 = vmatprep.subr.mxu0 0.0
      %2650 = vmatpush1.msra.mxu0 0.0
      %2651 = vmatprep.subr.mxu0 0.0
      %2652 = vmatpush1.msra.mxu0 0.0
      %2653 = vmatprep.subr.mxu0 0.0
      %2654 = vmatpush1.msra.mxu0 0.0
      %2655 = vmatprep.subr.mxu0 0.0
      %2656 = vmatpush1.msra.mxu0 0.0
      %2657 = vmatprep.mubr.f32.mxu0 0.0
      %2658 = vmatmul.mubr.f32.gmra.mrb[0].mxu0 %v2591
      %v2659 = vpop.f32.mrb[0].mxu0
      %v2660 = vadd.f32 %v2588, %v2659
      %v2661 = vpop.f32.mrb[0].mxu0
      %v2662 = vadd.f32 %v2588, %v2661
      %2663 = vdwg.mxu0
      %v2666 = vcombine.low %v2660, %v2662
      %2668 = vst [vmem:[%s625] sm:$0x77] %v2666
      %v2669 = vld [vmem:[%s620] sm:$0x3]
      %vm2670 = vcmask 1042432
      %v2671 = vsel %vm2670, %v2660, -inf
      %v2672 = vrot.slane %v2671, 4
      %v2673 = vmax.f32 %v2671, %v2672
      %v2674 = vrot.slane %v2673, 2
      %v2675 = vmax.f32 %v2673, %v2674
      %v2676 = vrot.slane %v2675, 1
      %v2677 = vmax.f32 %v2675, %v2676
      %v2678 = vsel %vm2670, %v2662, -inf
      %v2679 = vrot.slane %v2678, 4
      %v2680 = vmax.f32 %v2678, %v2679
      %v2681 = vrot.slane %v2680, 2
      %v2682 = vmax.f32 %v2680, %v2681
      %v2683 = vrot.slane %v2682, 1
      %v2684 = vmax.f32 %v2682, %v2683
      %v2685 = vsub.f32 %v2660, %v2677
      %v2686 = vsub.f32 %v2662, %v2684
      %v2687 = vmul.f32 %v2685, 1.442695
      %v2688 = vpow.pop %v2687
      %v2689 = vmul.f32 %v2686, 1.442695
      %v2690 = vpow.pop %v2689
      %v2691 = vsel %vm2670, %v2688, 0.0
      %v2692 = vrot.slane %v2691, 4
      %v2693 = vadd.f32 %v2691, %v2692
      %v2694 = vrot.slane %v2693, 2
      %v2695 = vadd.f32 %v2693, %v2694
      %v2696 = vrot.slane %v2695, 1
      %v2697 = vadd.f32 %v2695, %v2696
      %v2698 = vsel %vm2670, %v2690, 0.0
      %v2699 = vrot.slane %v2698, 4
      %v2700 = vadd.f32 %v2698, %v2699
      %v2701 = vrot.slane %v2700, 2
      %v2702 = vadd.f32 %v2700, %v2701
      %v2703 = vrot.slane %v2702, 1
      %v2704 = vadd.f32 %v2702, %v2703
      %v2705 = vlog2.pop %v2697
      %v2706 = vmul.f32 %v2705, 0.6931472
      %v2707 = vlog2.pop %v2704
      %v2708 = vmul.f32 %v2707, 0.6931472
      %v2709 = vadd.f32 %v2677, %v2706
      %v2710 = vadd.f32 %v2684, %v2708
      %v2711 = vlaneseq
      %v2712 = vshrl.u32 %v2711, 7
      %v2713 = vlaneseq
      %v2714 = vshrl.u32 %v2713, 7
      %v2715 = vsub.s32 0, %v2714
      %v2716 = vrot.slane %v2669, %v2715
      %v2717 = vlaneseq
      %v2718 = vshrl.u32 %v2717, 7
      %v2719 = vsub.s32 1, %v2718
      %v2720 = vrot.slane %v2669, %v2719
      %vm2721 = vcmp.eq.s32.totalorder %v2712, %v2716
      %vm2722 = vcmp.eq.s32.totalorder %v2712, %v2720
      %v2723 = vsel %vm2721, %v2660, 0.0
      %v2724 = vsel %vm2722, %v2662, 0.0
      %v2725 = vsel %vm2670, %v2723, 0.0
      %v2726 = vrot.slane %v2725, 4
      %v2727 = vadd.f32 %v2725, %v2726
      %v2728 = vrot.slane %v2727, 2
      %v2729 = vadd.f32 %v2727, %v2728
      %v2730 = vrot.slane %v2729, 1
      %v2731 = vadd.f32 %v2729, %v2730
      %v2732 = vsel %vm2670, %v2724, 0.0
      %v2733 = vrot.slane %v2732, 4
      %v2734 = vadd.f32 %v2732, %v2733
      %v2735 = vrot.slane %v2734, 2
      %v2736 = vadd.f32 %v2734, %v2735
      %v2737 = vrot.slane %v2736, 1
      %v2738 = vadd.f32 %v2736, %v2737
      %v2739 = vsub.f32 %v2709, %v2731
      %v2740 = vsub.f32 %v2710, %v2738
      %v2741 = vadd.f32 %v2739, %v2740
      %2742 = vadd.xlane.f32.xlu0 %v2741
      %v2743 = vpop.xlane.xlu0 %2742
      %v2744 = vmul.f32 %v2743, 0.001953125
      %vm2745 = vcmask 0
      %2746 = vst.msk [vmem:[%s628] sm:$0x1] %vm2745, %v2744
      %p2747 = scmp.lt.s32.totalorder %s31, 1
      %s2748 = scalar_select %p2747, %s31, 1
      %s2749 = smul.addr %s2748, 2
      %s2750 = smul.addr %s2749, 4
      %s2751 = scalar_lea.vmem %s18, %s2750
      %p2752 = scmp.lt.s32.totalorder %s31, 1
      %s2753 = scalar_select %p2752, %s31, 1
      %s2754 = scalar_lea.vmem %s19, %s2753
      // Predicated region
      $region93: #{segmentation_network_forward.1} parent=91 // pred_check
        %p2755 = pneg %p437
      $region94: #{segmentation_network_forward.1} parent=91 // pred_check_branch
        %2757 = sbr.rel (%p2755) target = $region96
      $region95: #{segmentation_network_forward.1} parent=91 // pred_region
        _
      $region96: #{segmentation_network_forward.1} parent=91 // pred_fallthru
        _
      // Predicated region
      $region97: #{segmentation_network_forward.1} parent=91 // pred_check
        %p2758 = pneg %p463
      $region98: #{segmentation_network_forward.1} parent=91 // pred_check_branch
        %2760 = sbr.rel (%p2758) target = $region100
      $region99: #{segmentation_network_forward.1} parent=91 // pred_region
        _
      $region100: #{segmentation_network_forward.1} parent=91 // pred_fallthru
        _
    $region92: #{segmentation_network_forward.1} parent=5 // pred_fallthru
      _
    %p2761 = scmp.le.s32.totalorder 2, %s26
    // Predicated region
    $region101: #{segmentation_network_forward.1} parent=5 // pred_check
      %p2762 = pneg %p2761
    $region102: #{segmentation_network_forward.1} parent=5 // pred_check_branch
      %2764 = sbr.rel (%p2762) target = $region104
    $region103: #{segmentation_network_forward.1} parent=5 // pred_region
      %s2765 = ssub.s32 %s26, 2
      // Predicated region
      $region105: #{segmentation_network_forward.1} parent=103 // pred_check
        %p2766 = pneg %p443
      $region106: #{segmentation_network_forward.1} parent=103 // pred_check_branch
        %2768 = sbr.rel (%p2766) target = $region108
      $region107: #{segmentation_network_forward.1} parent=103 // pred_region
        %p2769 = scmp.lt.s32.totalorder %s32, 1
        %s2770 = scalar_select %p2769, %s32, 1
        %s2771 = smul.addr %s2770, 2
        %s2772 = smul.addr %s2771, 4
        %s2773 = scalar_lea.vmem %s18, %s2772
      $region108: #{segmentation_network_forward.1} parent=103 // pred_fallthru
        _
      // Predicated region
      $region109: #{segmentation_network_forward.1} parent=103 // pred_check
        %p2774 = pneg %p469
      $region110: #{segmentation_network_forward.1} parent=103 // pred_check_branch
        %2776 = sbr.rel (%p2774) target = $region112
      $region111: #{segmentation_network_forward.1} parent=103 // pred_region
        %p2777 = scmp.lt.s32.totalorder %s32, 1
        %s2778 = scalar_select %p2777, %s32, 1
        %s2779 = scalar_lea.vmem %s19, %s2778
      $region112: #{segmentation_network_forward.1} parent=103 // pred_fallthru
        _
    $region104: #{segmentation_network_forward.1} parent=5 // pred_fallthru
      _
  $region6: #{segmentation_network_forward.1} parent=0 // loop_footer
    %s30 = sadd.s32 1, %s26
  $region7: #{segmentation_network_forward.1} parent=0 // loop_footer_branch
    %25 = sbr.rel target = $region3
  $region8: #{segmentation_network_forward.1} parent=0 // loop_exit
    _

</llo_original>
